<compile_context>
chip_gen: v7x
topology: tpu7x:2x2x1
jax: 0.10.0
libtpu: 0.0.40
codegen_flags: <defaults>
</compile_context>

<pallas_src>
import functools

import jax
import jax.numpy as jnp
from jax import lax
from jax.experimental import pallas as pl
from jax.experimental.pallas import tpu as pltpu


LANES = 128   # lane-padded channel width
_HALO = 8     # sublane-aligned time halo per side; >= max conv pad (6)


# ----------------------------- fused decoder kernel -------------------------------

def _fused_decoder_kernel(fi_ref, cb_ref, ci1w_ref, ci1b_ref, ci2w_ref, ci2b_ref,
                          dww_ref, vecs_ref, w1_ref, b1_ref, w2_ref,
                          outw_ref, coef_ref, o_ref, xpad_ref,
                          *, Tq, BB, n_layer, c_true, eps):
    """Whole DVAE decode path for BB batch elements; activations stay VMEM-resident."""
    f32, bf16 = jnp.float32, jnp.bfloat16
    M = BB * Tq                                              # stacked MXU rows
    R = fi_ref.shape[1] // Tq

    # Zero only the halo strips; the central Tq rows are fully overwritten by every
    # _taps() call before being read (saves a full activation-sized vst pass).
    xpad_ref[:, :_HALO, :] = jnp.zeros((BB, _HALO, LANES), f32)
    xpad_ref[:, _HALO + Tq:, :] = jnp.zeros((BB, _HALO, LANES), f32)

    def _taps(x2, K, dil, pad):
        # TODO(synk): tap offsets are not sublane(8)-aligned (dil=2 -> 2,4,...,14); if
        # bundle dumps show relayout copies dominating, regenerate taps via pltpu.roll.
        xpad_ref[:, _HALO:_HALO + Tq, :] = x2.reshape(BB, Tq, LANES)
        xp = xpad_ref[...]
        base = _HALO - pad
        return [xp[:, base + k * dil: base + k * dil + Tq, :].reshape(M, LANES)
                for k in range(K)]

    def conv_im2col(x2, w_flat, K, pad):
        # im2col: one MXU matmul with contraction K*128 instead of K small matmuls.
        cols = jnp.concatenate(_taps(x2, K, 1, pad), axis=-1).astype(bf16)
        return jnp.dot(cols, w_flat, preferred_element_type=f32)

    # ---- GFSQ embed (fused): one-hot rows x flattened codebook -> (M, 128)
    fi = fi_ref[...]                                         # (BB, R*Tq, 1) int32
    lane = lax.broadcasted_iota(jnp.int32, (BB, Tq, LANES), 2)
    oh = jnp.zeros((BB, Tq, LANES), f32)
    for r in range(R):
        oh = oh + (lane == fi[:, r * Tq:(r + 1) * Tq, :]).astype(f32)
    x = jnp.dot(oh.reshape(M, LANES).astype(bf16), cb_ref[...],
                preferred_element_type=f32)

    # ---- DVAEDecoder.conv_in: Conv1d(idim,bn,3,p=1) -> GELU -> Conv1d(bn,hidden,3,p=1)
    y = conv_im2col(x, ci1w_ref[...], K=3, pad=1) + ci1b_ref[0]
    # TODO(synk): torch nn.GELU() is exact-erf; tanh approximation used for guaranteed
    # Mosaic lowering (max abs deviation ~1e-3).
    y = jax.nn.gelu(y, approximate=True)
    y = conv_im2col(y, ci2w_ref[...], K=3, pad=1) + ci2b_ref[0]

    # Lane mask over the true channel count (padded lanes are exactly zero by
    # construction -- asserted in prepare_params); needed for the centered variance.
    lane_mask = (lax.broadcasted_iota(jnp.int32, (1, LANES), 1) < c_true).astype(f32)

    # ---- ConvNeXt block: depthwise(K=7, dil=2) + LayerNorm(C) + MLP + gamma + residual
    def block(l, y):
        v = vecs_ref[l]                  # (5,128): 0 dw_b, 1 ln_w, 2 ln_b, 3 b2, 4 gamma
        taps = _taps(y, 7, 2, 6)
        wdw = dww_ref[l]                 # (7,128) f32
        h = taps[0] * wdw[0] + v[0]      # depthwise conv on the VPU, init from tap 0
        for k in range(1, 7):
            h = h + taps[k] * wdw[k]
        # LayerNorm over the true c_true channels; centered variance for torch parity.
        mu = jnp.sum(h, axis=-1, keepdims=True) / c_true
        d = h - mu
        dm = d * lane_mask
        var = jnp.sum(dm * dm, axis=-1, keepdims=True) / c_true
        hn = d * lax.rsqrt(var + eps) * v[1] + v[2]
        g = jnp.dot(hn.astype(bf16), w1_ref[l], preferred_element_type=f32) + b1_ref[l]
        g = jax.nn.gelu(g, approximate=True)                 # TODO(synk): erf note above
        g = jnp.dot(g.astype(bf16), w2_ref[l], preferred_element_type=f32) + v[3]
        return y + g * v[4]

    if n_layer <= 4:
        for l in range(n_layer):         # shallow: static unroll, no spill risk
            y = block(l, y)
    else:
        y = lax.fori_loop(0, n_layer, block, y)   # deep: bound live ranges / code size

    # ---- conv_out (1x1) folded into out_conv (k=3) at prepare time; coef post-scale
    #      stays f32 to keep full weight mantissa.
    y = conv_im2col(y, outw_ref[...], K=3, pad=1) * coef_ref[0]
    o_ref[...] = y.reshape(BB, Tq, LANES).astype(o_ref.dtype)


_WEIGHT_ORDER = ("cb_flat", "ci1_w", "ci1_b", "ci2_w", "ci2_b",
                 "dw_w", "vecs", "w1", "b1", "w2", "out_w", "coef")


def _rep_spec(shape):
    nd = len(shape)
    return pl.BlockSpec(shape, lambda b, _nd=nd: (0,) * _nd)


def _pick_batch_block(B, Tq, target_m=128):
    """Largest divisor of B such that BB*Tq gives ~target_m stacked MXU rows."""
    bb = min(B, max(1, target_m // Tq))
    while B % bb:
        bb -= 1
    return bb


def _fused_decoder_call(flat_idx, p, *, Tq, c_true, eps):
    """flat_idx: (B, R*Tq, 1) int32 flattened-codebook row indices.
    Returns (B, Tq, 128) float32 (lane-padded mel channels)."""
    B, RTq, _ = flat_idx.shape
    n_layer = p["dw_w"].shape[0]
    BB = _pick_batch_block(B, Tq)
    kern = functools.partial(_fused_decoder_kernel, Tq=Tq, BB=BB,
                             n_layer=n_layer, c_true=c_true, eps=eps)
    in_specs = [pl.BlockSpec((BB, RTq, 1), lambda i: (i, 0, 0))]
    in_specs += [_rep_spec(tuple(p[k].shape)) for k in _WEIGHT_ORDER]
    return pl.pallas_call(
        kern,
        out_shape=jax.ShapeDtypeStruct((B, Tq, LANES), jnp.float32),
        grid=(B // BB,),
        in_specs=in_specs,
        out_specs=pl.BlockSpec((BB, Tq, LANES), lambda i: (i, 0, 0)),
        scratch_shapes=[pltpu.VMEM((BB, Tq + 2 * _HALO, LANES), jnp.float32)],
        # Constant-index weight BlockSpecs are revisited (no per-step re-DMA);
        # the batch-block axis is parallel for megacore sharding.
        compiler_params=pltpu.CompilerParams(dimension_semantics=("parallel",)),
    )(flat_idx, *(p[k] for k in _WEIGHT_ORDER))


# ----------------------------- parameters (synthetic, deterministic) --------------

def init_params(key, *, vq_dim=128, G=2, R=2, num_codes=16,
                idim=64, bn_dim=32, hidden=64, odim=64, n_layer=2,
                kernel=7, n_mels=100):
    keys = iter(jax.random.split(key, 64))
    nrm = lambda shape, s=0.1: s * jax.random.normal(next(keys), shape, jnp.float32)
    code_dim = vq_dim // G
    p = {}
    p["coef"] = jax.random.uniform(next(keys), (n_mels,), jnp.float32)      # torch.rand(100)
    # TODO(synk): real GFSQ decodes FSQ level indices; replaced by an explicit deterministic
    # codebook (residual sum per group, groups concatenated), matching the shapes/flow.
    p["codebook"] = nrm((G, R, num_codes, code_dim), 0.5)
    # DVAEDecoder.conv_in = Conv1d(idim, bn, 3, p=1) -> GELU -> Conv1d(bn, hidden, 3, p=1)
    p["ci1_w"] = nrm((3, idim, bn_dim));   p["ci1_b"] = nrm((bn_dim,))
    p["ci2_w"] = nrm((3, bn_dim, hidden)); p["ci2_b"] = nrm((hidden,))
    inter = hidden * 4
    blocks = []
    for _ in range(n_layer):
        blocks.append(dict(
            dw_w=nrm((kernel, hidden)), dw_b=nrm((hidden,)),
            ln_w=jnp.ones((hidden,), jnp.float32), ln_b=jnp.zeros((hidden,), jnp.float32),
            w1=nrm((hidden, inter)), b1=nrm((inter,)),
            w2=nrm((inter, hidden)), b2=nrm((hidden,)),
            gamma=jnp.full((hidden,), 1e-6, jnp.float32),
        ))
    p["blocks"] = blocks
    p["co_w"] = nrm((1, hidden, odim))     # DVAEDecoder.conv_out (1x1, bias=False)
    p["out_w"] = nrm((3, odim, n_mels))    # DVAE.out_conv (k=3, p=1, bias=False)
    return p


def _assert_pad_zero(a, c_true):
    """LayerNorm/residual math relies on padded lanes being exactly zero."""
    tail = jnp.asarray(a, jnp.float32)[..., c_true:]
    assert tail.size == 0 or float(jnp.max(jnp.abs(tail))) == 0.0, \
        "padded channel lanes must be exactly zero"


def prepare_params(p):
    """Pad channels to 128 lanes, fold conv_out into out_conv, flatten codebook and
    conv taps for im2col, consolidate per-layer vectors, cast matmul weights to bf16."""
    bf16 = jnp.bfloat16

    def pad_last(a, n=LANES):
        return jnp.pad(a, [(0, 0)] * (a.ndim - 1) + [(0, n - a.shape[-1])])

    def pad_conv_f32(w):                   # (K, Cin, Cout) -> (K, 128, 128) f32
        K, cin, cout = w.shape
        return jnp.pad(w, ((0, 0), (0, LANES - cin), (0, LANES - cout)))

    im2col = lambda w: w.reshape(-1, LANES)          # (K,128,128) -> (K*128,128)
    stack = lambda k: jnp.stack([b[k] for b in p["blocks"]])
    q = {}

    # GFSQ codebook flattened: row (g*R + r)*N + code  ->  lane-padded embedding.
    cb = pad_last(p["codebook"])                              # (G,R,N,128)
    G, R, N, _ = cb.shape
    assert G * R * N <= LANES, "one-hot embed path requires G*R*num_codes <= 128"
    # TODO(synk): for larger codebooks split the one-hot matmul over LANES-wide chunks.
    cb_flat = cb.reshape(G * R * N, LANES)
    q["cb_flat"] = jnp.pad(cb_flat, ((0, LANES - G * R * N), (0, 0))).astype(bf16)

    q["ci1_w"] = im2col(pad_conv_f32(p["ci1_w"])).astype(bf16)
    q["ci1_b"] = pad_last(p["ci1_b"]).reshape(1, LANES)
    q["ci2_w"] = im2col(pad_conv_f32(p["ci2_w"])).astype(bf16)
    q["ci2_b"] = pad_last(p["ci2_b"]).reshape(1, LANES)

    q["dw_w"] = pad_last(stack("dw_w"))                       # (L,7,128) f32 (VPU)
    # Per-layer (128,)-wide vectors consolidated into one (L,5,128) input:
    #   0: dw_b, 1: ln_w, 2: ln_b, 3: b2, 4: gamma
    q["vecs"] = jnp.stack([pad_last(stack("dw_b")), pad_last(stack("ln_w")),
                           pad_last(stack("ln_b")), pad_last(stack("b2")),
                           pad_last(stack("gamma"))], axis=1)

    w1 = stack("w1")
    q["w1"] = jnp.pad(w1, ((0, 0), (0, LANES - w1.shape[1]), (0, 0))).astype(bf16)
    q["b1"] = stack("b1")[:, None, :]                         # (L,1,inter) f32
    q["w2"] = pad_last(stack("w2")).astype(bf16)              # (L,inter,128)

    # Fold conv_out (1x1, bias-free) into out_conv (k=3, bias-free): compose in f32,
    # then cast once to bf16.  coef stays an f32 post-scale (no weight mantissa loss).
    co = pad_conv_f32(p["co_w"])[0]                           # (128,128) f32
    ow = pad_conv_f32(p["out_w"])                             # (3,128,128) f32
    q["out_w"] = im2col(jnp.einsum("hc,kcm->khm", co, ow)).astype(bf16)

    q["coef"] = pad_last(p["coef"]).reshape(1, LANES)

    hidden = p["blocks"][0]["ln_w"].shape[0]
    for name in ("cb_flat", "ci2_w", "ci2_b", "dw_w", "vecs", "w2"):
        _assert_pad_zero(q[name], hidden)
    return q


# ----------------------------- DVAE.forward (mode='decode') -----------------------

def dvae_decode(p, inp, *, G=2, R=2, num_codes=16, n_mels=100, hidden=64, eps=1e-6):
    """p: prepared params; inp: (B, G*R, T) int32 VQ indices.
    Returns (B, n_mels, 2*T) float32 (NCW, matching the torch output)."""
    B, GR, T = inp.shape
    assert GR == G * R
    Tq = G * T
    assert Tq % 8 == 0, "time length must be sublane-aligned"  # TODO(synk): else pad T
    # GFSQ._embed + view(B,2,D//2,T).permute(0,2,3,1).flatten(2) collapsed into
    # flattened-codebook row indices, pre-interleaved so decoder row m = G*t + g:
    #   decoder_in[b, m, :] = sum_r cb_flat[fi[b, r*Tq + m], :]
    offs = (jnp.arange(G)[:, None] * R + jnp.arange(R)[None, :]) * num_codes   # (G,R)
    fi = inp.reshape(B, G, R, T).astype(jnp.int32) + offs[None, :, :, None]
    fi = jnp.transpose(fi, (0, 2, 3, 1)).reshape(B, R * Tq, 1)                 # (B,R*Tq,1)

    y = _fused_decoder_call(fi, p, Tq=Tq, c_true=hidden, eps=eps)              # (B,Tq,128)
    return jnp.transpose(y[:, :, :n_mels], (0, 2, 1))                          # (B,n_mels,Tq)


# ----------------------------- main ------------------------------------------------

if __name__ == "__main__":
    key = jax.random.PRNGKey(0)
    pkey, ikey = jax.random.split(key)
    params = prepare_params(init_params(pkey))

    B, G, R, T = 2, 2, 2, 8
    inp = jax.random.randint(ikey, (B, G * R, T), 0, 16, dtype=jnp.int32)

    out = jax.jit(dvae_decode)(params, inp)
    jax.block_until_ready(out)
    assert out.shape == (B, 100, 2 * T), out.shape
    assert out.dtype == jnp.float32
    print("KERNEL_OK")
</pallas_src>

<mosaic_0001>
module attributes {stable_mosaic.version = 11 : i64} {
  func.func @_fused_decoder_kernel(%arg0: i32, %arg1: memref<2x32x1xi32, #tpu.memory_space<vmem>>, %arg2: memref<128x128xbf16, #tpu.memory_space<vmem>>, %arg3: memref<384x128xbf16, #tpu.memory_space<vmem>>, %arg4: memref<1x128xf32, #tpu.memory_space<vmem>>, %arg5: memref<384x128xbf16, #tpu.memory_space<vmem>>, %arg6: memref<1x128xf32, #tpu.memory_space<vmem>>, %arg7: memref<2x7x128xf32, #tpu.memory_space<vmem>>, %arg8: memref<2x5x128xf32, #tpu.memory_space<vmem>>, %arg9: memref<2x128x256xbf16, #tpu.memory_space<vmem>>, %arg10: memref<2x1x256xf32, #tpu.memory_space<vmem>>, %arg11: memref<2x256x128xbf16, #tpu.memory_space<vmem>>, %arg12: memref<384x128xbf16, #tpu.memory_space<vmem>>, %arg13: memref<1x128xf32, #tpu.memory_space<vmem>>, %arg14: memref<2x16x128xf32, #tpu.memory_space<vmem>>, %arg15: memref<2x32x128xf32, #tpu.memory_space<vmem>>) attributes {dimension_semantics = [#tpu.dimension_semantics<parallel>], iteration_bounds = array<i64: 1>, scalar_prefetch = 0 : i64, scratch_operands = 1 : i64, tpu.core_type = #tpu.core_type<tc>, window_params = [{transform_indices = @transform_0, window_bounds = array<i64: 2, 32, 1>}, {pipeline_mode = #tpu.pipeline_mode<synchronous>, transform_indices = @transform_1, window_bounds = array<i64: 128, 128>}, {pipeline_mode = #tpu.pipeline_mode<synchronous>, transform_indices = @transform_2, window_bounds = array<i64: 384, 128>}, {pipeline_mode = #tpu.pipeline_mode<synchronous>, transform_indices = @transform_3, window_bounds = array<i64: 1, 128>}, {pipeline_mode = #tpu.pipeline_mode<synchronous>, transform_indices = @transform_4, window_bounds = array<i64: 384, 128>}, {pipeline_mode = #tpu.pipeline_mode<synchronous>, transform_indices = @transform_5, window_bounds = array<i64: 1, 128>}, {pipeline_mode = #tpu.pipeline_mode<synchronous>, transform_indices = @transform_6, window_bounds = array<i64: 2, 7, 128>}, {pipeline_mode = #tpu.pipeline_mode<synchronous>, transform_indices = @transform_7, window_bounds = array<i64: 2, 5, 128>}, {pipeline_mode = #tpu.pipeline_mode<synchronous>, transform_indices = @transform_8, window_bounds = array<i64: 2, 128, 256>}, {pipeline_mode = #tpu.pipeline_mode<synchronous>, transform_indices = @transform_9, window_bounds = array<i64: 2, 1, 256>}, {pipeline_mode = #tpu.pipeline_mode<synchronous>, transform_indices = @transform_10, window_bounds = array<i64: 2, 256, 128>}, {pipeline_mode = #tpu.pipeline_mode<synchronous>, transform_indices = @transform_11, window_bounds = array<i64: 384, 128>}, {pipeline_mode = #tpu.pipeline_mode<synchronous>, transform_indices = @transform_12, window_bounds = array<i64: 1, 128>}, {transform_indices = @transform_13, window_bounds = array<i64: 2, 16, 128>}]} {
    %cst = arith.constant 0.000000e+00 : f32
    %0 = vector.broadcast %cst : f32 to vector<2x8x128xf32>
    %c0 = arith.constant 0 : index
    %c0_0 = arith.constant 0 : index
    %c0_1 = arith.constant 0 : index
    %1 = vector.load %arg15[%c0, %c0_0, %c0_1] : memref<2x32x128xf32, #tpu.memory_space<vmem>>, vector<2x8x128xf32>
    tpu.vector_store %arg15[%c0, %c0_0, %c0_1], %0 {strides = array<i32>} : memref<2x32x128xf32, #tpu.memory_space<vmem>>, vector<2x8x128xf32>,
    %cst_2 = arith.constant 0.000000e+00 : f32
    %2 = vector.broadcast %cst_2 : f32 to vector<2x8x128xf32>
    %c0_3 = arith.constant 0 : index
    %c24 = arith.constant 24 : index
    %c0_4 = arith.constant 0 : index
    %3 = vector.load %arg15[%c0_3, %c24, %c0_4] : memref<2x32x128xf32, #tpu.memory_space<vmem>>, vector<2x8x128xf32>
    tpu.vector_store %arg15[%c0_3, %c24, %c0_4], %2 {strides = array<i32>} : memref<2x32x128xf32, #tpu.memory_space<vmem>>, vector<2x8x128xf32>,
    %c0_5 = arith.constant 0 : index
    %c0_6 = arith.constant 0 : index
    %c0_7 = arith.constant 0 : index
    %4 = vector.load %arg1[%c0_5, %c0_6, %c0_7] : memref<2x32x1xi32, #tpu.memory_space<vmem>>, vector<2x32x1xi32>
    %5 = tpu.iota {dimensions = array<i32: 2>} : vector<2x16x128xi32>
    %cst_8 = arith.constant 0.000000e+00 : f32
    %6 = vector.broadcast %cst_8 : f32 to vector<2x16x128xf32>
    %7 = vector.extract_strided_slice %4 {offsets = [0, 0, 0], sizes = [2, 16, 1], strides = [1, 1, 1]} : vector<2x32x1xi32> to vector<2x16x1xi32>
    %8 = vector.broadcast %7 : vector<2x16x1xi32> to vector<2x16x128xi32>
    %9 = arith.cmpi eq, %5, %8 : vector<2x16x128xi32>
    %10 = arith.extui %9 : vector<2x16x128xi1> to vector<2x16x128xi32>
    %11 = arith.sitofp %10 : vector<2x16x128xi32> to vector<2x16x128xf32>
    %12 = arith.addf %6, %11 : vector<2x16x128xf32>
    %13 = vector.extract_strided_slice %4 {offsets = [0, 16, 0], sizes = [2, 16, 1], strides = [1, 1, 1]} : vector<2x32x1xi32> to vector<2x16x1xi32>
    %14 = vector.broadcast %13 : vector<2x16x1xi32> to vector<2x16x128xi32>
    %15 = arith.cmpi eq, %5, %14 : vector<2x16x128xi32>
    %16 = arith.extui %15 : vector<2x16x128xi1> to vector<2x16x128xi32>
    %17 = arith.sitofp %16 : vector<2x16x128xi32> to vector<2x16x128xf32>
    %18 = arith.addf %12, %17 : vector<2x16x128xf32>
    %19 = vector.shape_cast %18 : vector<2x16x128xf32> to vector<32x128xf32>
    %20 = arith.truncf %19 : vector<32x128xf32> to vector<32x128xbf16>
    %c0_9 = arith.constant 0 : index
    %c0_10 = arith.constant 0 : index
    %21 = vector.load %arg2[%c0_9, %c0_10] : memref<128x128xbf16, #tpu.memory_space<vmem>>, vector<128x128xbf16>
    %cst_11 = arith.constant dense<0.000000e+00> : vector<32x128xf32>
    %22 = tpu.matmul %20, %21, %cst_11 {dimension_numbers = #tpu.dot_dimension_numbers<[1], [0], [0], [1], [0, 0, 1, 1], [], []>} : vector<32x128xbf16>, vector<128x128xbf16>, vector<32x128xf32> -> vector<32x128xf32>
    %c0_12 = arith.constant 0 : index
    %c0_13 = arith.constant 0 : index
    %23 = vector.load %arg3[%c0_12, %c0_13] : memref<384x128xbf16, #tpu.memory_space<vmem>>, vector<384x128xbf16>
    %24 = vector.shape_cast %22 : vector<32x128xf32> to vector<2x16x128xf32>
    %c0_14 = arith.constant 0 : index
    %c8 = arith.constant 8 : index
    %c0_15 = arith.constant 0 : index
    %25 = vector.load %arg15[%c0_14, %c8, %c0_15] : memref<2x32x128xf32, #tpu.memory_space<vmem>>, vector<2x16x128xf32>
    tpu.vector_store %arg15[%c0_14, %c8, %c0_15], %24 {strides = array<i32>} : memref<2x32x128xf32, #tpu.memory_space<vmem>>, vector<2x16x128xf32>,
    %c0_16 = arith.constant 0 : index
    %c0_17 = arith.constant 0 : index
    %c0_18 = arith.constant 0 : index
    %26 = vector.load %arg15[%c0_16, %c0_17, %c0_18] : memref<2x32x128xf32, #tpu.memory_space<vmem>>, vector<2x32x128xf32>
    %27 = vector.extract_strided_slice %26 {offsets = [0, 7, 0], sizes = [2, 16, 128], strides = [1, 1, 1]} : vector<2x32x128xf32> to vector<2x16x128xf32>
    %28 = vector.shape_cast %27 : vector<2x16x128xf32> to vector<32x128xf32>
    %29 = vector.extract_strided_slice %26 {offsets = [0, 8, 0], sizes = [2, 16, 128], strides = [1, 1, 1]} : vector<2x32x128xf32> to vector<2x16x128xf32>
    %30 = vector.shape_cast %29 : vector<2x16x128xf32> to vector<32x128xf32>
    %31 = vector.extract_strided_slice %26 {offsets = [0, 9, 0], sizes = [2, 16, 128], strides = [1, 1, 1]} : vector<2x32x128xf32> to vector<2x16x128xf32>
    %32 = vector.shape_cast %31 : vector<2x16x128xf32> to vector<32x128xf32>
    %33 = tpu.concatenate %28, %30, %32 in 1 : vector<32x128xf32>, vector<32x128xf32>, vector<32x128xf32> -> vector<32x384xf32>
    %34 = arith.truncf %33 : vector<32x384xf32> to vector<32x384xbf16>
    %cst_19 = arith.constant dense<0.000000e+00> : vector<32x128xf32>
    %35 = tpu.matmul %34, %23, %cst_19 {dimension_numbers = #tpu.dot_dimension_numbers<[1], [0], [0], [1], [0, 0, 1, 1], [], []>} : vector<32x384xbf16>, vector<384x128xbf16>, vector<32x128xf32> -> vector<32x128xf32>
    %c0_20 = arith.constant 0 : index
    %c0_21 = arith.constant 0 : index
    %36 = vector.load %arg4[%c0_20, %c0_21] : memref<1x128xf32, #tpu.memory_space<vmem>>, vector<1x128xf32>
    %37 = vector.shape_cast %36 : vector<1x128xf32> to vector<128xf32>
    %38 = vector.shape_cast %37 : vector<128xf32> to vector<1x128xf32>
    %39 = vector.broadcast %38 : vector<1x128xf32> to vector<32x128xf32>
    %40 = arith.addf %35, %39 : vector<32x128xf32>
    %41 = arith.mulf %40, %40 : vector<32x128xf32>
    %42 = arith.mulf %40, %41 : vector<32x128xf32>
    %cst_22 = arith.constant 4.471500e-02 : f32
    %43 = vector.broadcast %cst_22 : f32 to vector<32x128xf32>
    %44 = arith.mulf %43, %42 : vector<32x128xf32>
    %45 = arith.addf %40, %44 : vector<32x128xf32>
    %cst_23 = arith.constant 0.797884583 : f32
    %46 = vector.broadcast %cst_23 : f32 to vector<32x128xf32>
    %47 = arith.mulf %46, %45 : vector<32x128xf32>
    %48 = math.tanh %47 : vector<32x128xf32>
    %cst_24 = arith.constant 1.000000e+00 : f32
    %49 = vector.broadcast %cst_24 : f32 to vector<32x128xf32>
    %50 = arith.addf %49, %48 : vector<32x128xf32>
    %cst_25 = arith.constant 5.000000e-01 : f32
    %51 = vector.broadcast %cst_25 : f32 to vector<32x128xf32>
    %52 = arith.mulf %51, %50 : vector<32x128xf32>
    %53 = arith.mulf %40, %52 : vector<32x128xf32>
    %c0_26 = arith.constant 0 : index
    %c0_27 = arith.constant 0 : index
    %54 = vector.load %arg5[%c0_26, %c0_27] : memref<384x128xbf16, #tpu.memory_space<vmem>>, vector<384x128xbf16>
    %55 = vector.shape_cast %53 : vector<32x128xf32> to vector<2x16x128xf32>
    %c0_28 = arith.constant 0 : index
    %c8_29 = arith.constant 8 : index
    %c0_30 = arith.constant 0 : index
    %56 = vector.load %arg15[%c0_28, %c8_29, %c0_30] : memref<2x32x128xf32, #tpu.memory_space<vmem>>, vector<2x16x128xf32>
    tpu.vector_store %arg15[%c0_28, %c8_29, %c0_30], %55 {strides = array<i32>} : memref<2x32x128xf32, #tpu.memory_space<vmem>>, vector<2x16x128xf32>,
    %c0_31 = arith.constant 0 : index
    %c0_32 = arith.constant 0 : index
    %c0_33 = arith.constant 0 : index
    %57 = vector.load %arg15[%c0_31, %c0_32, %c0_33] : memref<2x32x128xf32, #tpu.memory_space<vmem>>, vector<2x32x128xf32>
    %58 = vector.extract_strided_slice %57 {offsets = [0, 7, 0], sizes = [2, 16, 128], strides = [1, 1, 1]} : vector<2x32x128xf32> to vector<2x16x128xf32>
    %59 = vector.shape_cast %58 : vector<2x16x128xf32> to vector<32x128xf32>
    %60 = vector.extract_strided_slice %57 {offsets = [0, 8, 0], sizes = [2, 16, 128], strides = [1, 1, 1]} : vector<2x32x128xf32> to vector<2x16x128xf32>
    %61 = vector.shape_cast %60 : vector<2x16x128xf32> to vector<32x128xf32>
    %62 = vector.extract_strided_slice %57 {offsets = [0, 9, 0], sizes = [2, 16, 128], strides = [1, 1, 1]} : vector<2x32x128xf32> to vector<2x16x128xf32>
    %63 = vector.shape_cast %62 : vector<2x16x128xf32> to vector<32x128xf32>
    %64 = tpu.concatenate %59, %61, %63 in 1 : vector<32x128xf32>, vector<32x128xf32>, vector<32x128xf32> -> vector<32x384xf32>
    %65 = arith.truncf %64 : vector<32x384xf32> to vector<32x384xbf16>
    %cst_34 = arith.constant dense<0.000000e+00> : vector<32x128xf32>
    %66 = tpu.matmul %65, %54, %cst_34 {dimension_numbers = #tpu.dot_dimension_numbers<[1], [0], [0], [1], [0, 0, 1, 1], [], []>} : vector<32x384xbf16>, vector<384x128xbf16>, vector<32x128xf32> -> vector<32x128xf32>
    %c0_35 = arith.constant 0 : index
    %c0_36 = arith.constant 0 : index
    %67 = vector.load %arg6[%c0_35, %c0_36] : memref<1x128xf32, #tpu.memory_space<vmem>>, vector<1x128xf32>
    %68 = vector.shape_cast %67 : vector<1x128xf32> to vector<128xf32>
    %69 = vector.shape_cast %68 : vector<128xf32> to vector<1x128xf32>
    %70 = vector.broadcast %69 : vector<1x128xf32> to vector<32x128xf32>
    %71 = arith.addf %66, %70 : vector<32x128xf32>
    %72 = tpu.iota {dimensions = array<i32: 1>} : vector<1x128xi32>
    %c64_i32 = arith.constant 64 : i32
    %73 = vector.broadcast %c64_i32 : i32 to vector<1x128xi32>
    %74 = arith.cmpi slt, %72, %73 : vector<1x128xi32>
    %75 = arith.extui %74 : vector<1x128xi1> to vector<1x128xi32>
    %76 = arith.sitofp %75 : vector<1x128xi32> to vector<1x128xf32>
    %c0_37 = arith.constant 0 : index
    %c0_38 = arith.constant 0 : index
    %c0_39 = arith.constant 0 : index
    %77 = vector.load %arg8[%c0_37, %c0_38, %c0_39] : memref<2x5x128xf32, #tpu.memory_space<vmem>>, vector<1x5x128xf32>
    %78 = vector.shape_cast %77 : vector<1x5x128xf32> to vector<5x128xf32>
    %79 = vector.shape_cast %71 : vector<32x128xf32> to vector<2x16x128xf32>
    %c0_40 = arith.constant 0 : index
    %c8_41 = arith.constant 8 : index
    %c0_42 = arith.constant 0 : index
    %80 = vector.load %arg15[%c0_40, %c8_41, %c0_42] : memref<2x32x128xf32, #tpu.memory_space<vmem>>, vector<2x16x128xf32>
    tpu.vector_store %arg15[%c0_40, %c8_41, %c0_42], %79 {strides = array<i32>} : memref<2x32x128xf32, #tpu.memory_space<vmem>>, vector<2x16x128xf32>,
    %c0_43 = arith.constant 0 : index
    %c0_44 = arith.constant 0 : index
    %c0_45 = arith.constant 0 : index
    %81 = vector.load %arg15[%c0_43, %c0_44, %c0_45] : memref<2x32x128xf32, #tpu.memory_space<vmem>>, vector<2x32x128xf32>
    %82 = vector.extract_strided_slice %81 {offsets = [0, 2, 0], sizes = [2, 16, 128], strides = [1, 1, 1]} : vector<2x32x128xf32> to vector<2x16x128xf32>
    %83 = vector.shape_cast %82 : vector<2x16x128xf32> to vector<32x128xf32>
    %84 = vector.extract_strided_slice %81 {offsets = [0, 4, 0], sizes = [2, 16, 128], strides = [1, 1, 1]} : vector<2x32x128xf32> to vector<2x16x128xf32>
    %85 = vector.shape_cast %84 : vector<2x16x128xf32> to vector<32x128xf32>
    %86 = vector.extract_strided_slice %81 {offsets = [0, 6, 0], sizes = [2, 16, 128], strides = [1, 1, 1]} : vector<2x32x128xf32> to vector<2x16x128xf32>
    %87 = vector.shape_cast %86 : vector<2x16x128xf32> to vector<32x128xf32>
    %88 = vector.extract_strided_slice %81 {offsets = [0, 8, 0], sizes = [2, 16, 128], strides = [1, 1, 1]} : vector<2x32x128xf32> to vector<2x16x128xf32>
    %89 = vector.shape_cast %88 : vector<2x16x128xf32> to vector<32x128xf32>
    %90 = vector.extract_strided_slice %81 {offsets = [0, 10, 0], sizes = [2, 16, 128], strides = [1, 1, 1]} : vector<2x32x128xf32> to vector<2x16x128xf32>
    %91 = vector.shape_cast %90 : vector<2x16x128xf32> to vector<32x128xf32>
    %92 = vector.extract_strided_slice %81 {offsets = [0, 12, 0], sizes = [2, 16, 128], strides = [1, 1, 1]} : vector<2x32x128xf32> to vector<2x16x128xf32>
    %93 = vector.shape_cast %92 : vector<2x16x128xf32> to vector<32x128xf32>
    %94 = vector.extract_strided_slice %81 {offsets = [0, 14, 0], sizes = [2, 16, 128], strides = [1, 1, 1]} : vector<2x32x128xf32> to vector<2x16x128xf32>
    %95 = vector.shape_cast %94 : vector<2x16x128xf32> to vector<32x128xf32>
    %c0_46 = arith.constant 0 : index
    %c0_47 = arith.constant 0 : index
    %c0_48 = arith.constant 0 : index
    %96 = vector.load %arg7[%c0_46, %c0_47, %c0_48] : memref<2x7x128xf32, #tpu.memory_space<vmem>>, vector<1x7x128xf32>
    %97 = vector.shape_cast %96 : vector<1x7x128xf32> to vector<7x128xf32>
    %98 = vector.extract_strided_slice %97 {offsets = [0, 0], sizes = [1, 128], strides = [1, 1]} : vector<7x128xf32> to vector<1x128xf32>
    %99 = vector.shape_cast %98 : vector<1x128xf32> to vector<128xf32>
    %100 = vector.shape_cast %99 : vector<128xf32> to vector<1x128xf32>
    %101 = vector.broadcast %100 : vector<1x128xf32> to vector<32x128xf32>
    %102 = arith.mulf %83, %101 : vector<32x128xf32>
    %103 = vector.extract_strided_slice %78 {offsets = [0, 0], sizes = [1, 128], strides = [1, 1]} : vector<5x128xf32> to vector<1x128xf32>
    %104 = vector.shape_cast %103 : vector<1x128xf32> to vector<128xf32>
    %105 = vector.shape_cast %104 : vector<128xf32> to vector<1x128xf32>
    %106 = vector.broadcast %105 : vector<1x128xf32> to vector<32x128xf32>
    %107 = arith.addf %102, %106 : vector<32x128xf32>
    %108 = vector.extract_strided_slice %97 {offsets = [1, 0], sizes = [1, 128], strides = [1, 1]} : vector<7x128xf32> to vector<1x128xf32>
    %109 = vector.shape_cast %108 : vector<1x128xf32> to vector<128xf32>
    %110 = vector.shape_cast %109 : vector<128xf32> to vector<1x128xf32>
    %111 = vector.broadcast %110 : vector<1x128xf32> to vector<32x128xf32>
    %112 = arith.mulf %85, %111 : vector<32x128xf32>
    %113 = arith.addf %107, %112 : vector<32x128xf32>
    %114 = vector.extract_strided_slice %97 {offsets = [2, 0], sizes = [1, 128], strides = [1, 1]} : vector<7x128xf32> to vector<1x128xf32>
    %115 = vector.shape_cast %114 : vector<1x128xf32> to vector<128xf32>
    %116 = vector.shape_cast %115 : vector<128xf32> to vector<1x128xf32>
    %117 = vector.broadcast %116 : vector<1x128xf32> to vector<32x128xf32>
    %118 = arith.mulf %87, %117 : vector<32x128xf32>
    %119 = arith.addf %113, %118 : vector<32x128xf32>
    %120 = vector.extract_strided_slice %97 {offsets = [3, 0], sizes = [1, 128], strides = [1, 1]} : vector<7x128xf32> to vector<1x128xf32>
    %121 = vector.shape_cast %120 : vector<1x128xf32> to vector<128xf32>
    %122 = vector.shape_cast %121 : vector<128xf32> to vector<1x128xf32>
    %123 = vector.broadcast %122 : vector<1x128xf32> to vector<32x128xf32>
    %124 = arith.mulf %89, %123 : vector<32x128xf32>
    %125 = arith.addf %119, %124 : vector<32x128xf32>
    %126 = vector.extract_strided_slice %97 {offsets = [4, 0], sizes = [1, 128], strides = [1, 1]} : vector<7x128xf32> to vector<1x128xf32>
    %127 = vector.shape_cast %126 : vector<1x128xf32> to vector<128xf32>
    %128 = vector.shape_cast %127 : vector<128xf32> to vector<1x128xf32>
    %129 = vector.broadcast %128 : vector<1x128xf32> to vector<32x128xf32>
    %130 = arith.mulf %91, %129 : vector<32x128xf32>
    %131 = arith.addf %125, %130 : vector<32x128xf32>
    %132 = vector.extract_strided_slice %97 {offsets = [5, 0], sizes = [1, 128], strides = [1, 1]} : vector<7x128xf32> to vector<1x128xf32>
    %133 = vector.shape_cast %132 : vector<1x128xf32> to vector<128xf32>
    %134 = vector.shape_cast %133 : vector<128xf32> to vector<1x128xf32>
    %135 = vector.broadcast %134 : vector<1x128xf32> to vector<32x128xf32>
    %136 = arith.mulf %93, %135 : vector<32x128xf32>
    %137 = arith.addf %131, %136 : vector<32x128xf32>
    %138 = vector.extract_strided_slice %97 {offsets = [6, 0], sizes = [1, 128], strides = [1, 1]} : vector<7x128xf32> to vector<1x128xf32>
    %139 = vector.shape_cast %138 : vector<1x128xf32> to vector<128xf32>
    %140 = vector.shape_cast %139 : vector<128xf32> to vector<1x128xf32>
    %141 = vector.broadcast %140 : vector<1x128xf32> to vector<32x128xf32>
    %142 = arith.mulf %95, %141 : vector<32x128xf32>
    %143 = arith.addf %137, %142 : vector<32x128xf32>
    %cst_49 = arith.constant dense<0.000000e+00> : vector<32xf32>
    %144 = vector.multi_reduction <add>, %143, %cst_49 [1] : vector<32x128xf32> to vector<32xf32>
    %145 = vector.shape_cast %144 : vector<32xf32> to vector<32x1xf32>
    %cst_50 = arith.constant 6.400000e+01 : f32
    %146 = vector.broadcast %cst_50 : f32 to vector<32x1xf32>
    %147 = arith.divf %145, %146 : vector<32x1xf32>
    %148 = vector.broadcast %147 : vector<32x1xf32> to vector<32x128xf32>
    %149 = arith.subf %143, %148 : vector<32x128xf32>
    %150 = vector.broadcast %76 : vector<1x128xf32> to vector<32x128xf32>
    %151 = arith.mulf %149, %150 : vector<32x128xf32>
    %152 = arith.mulf %151, %151 : vector<32x128xf32>
    %cst_51 = arith.constant dense<0.000000e+00> : vector<32xf32>
    %153 = vector.multi_reduction <add>, %152, %cst_51 [1] : vector<32x128xf32> to vector<32xf32>
    %154 = vector.shape_cast %153 : vector<32xf32> to vector<32x1xf32>
    %cst_52 = arith.constant 6.400000e+01 : f32
    %155 = vector.broadcast %cst_52 : f32 to vector<32x1xf32>
    %156 = arith.divf %154, %155 : vector<32x1xf32>
    %cst_53 = arith.constant 9.99999997E-7 : f32
    %157 = vector.broadcast %cst_53 : f32 to vector<32x1xf32>
    %158 = arith.addf %156, %157 : vector<32x1xf32>
    %159 = math.rsqrt %158 : vector<32x1xf32>
    %160 = vector.broadcast %159 : vector<32x1xf32> to vector<32x128xf32>
    %161 = arith.mulf %149, %160 : vector<32x128xf32>
    %162 = vector.extract_strided_slice %78 {offsets = [1, 0], sizes = [1, 128], strides = [1, 1]} : vector<5x128xf32> to vector<1x128xf32>
    %163 = vector.shape_cast %162 : vector<1x128xf32> to vector<128xf32>
    %164 = vector.shape_cast %163 : vector<128xf32> to vector<1x128xf32>
    %165 = vector.broadcast %164 : vector<1x128xf32> to vector<32x128xf32>
    %166 = arith.mulf %161, %165 : vector<32x128xf32>
    %167 = vector.extract_strided_slice %78 {offsets = [2, 0], sizes = [1, 128], strides = [1, 1]} : vector<5x128xf32> to vector<1x128xf32>
    %168 = vector.shape_cast %167 : vector<1x128xf32> to vector<128xf32>
    %169 = vector.shape_cast %168 : vector<128xf32> to vector<1x128xf32>
    %170 = vector.broadcast %169 : vector<1x128xf32> to vector<32x128xf32>
    %171 = arith.addf %166, %170 : vector<32x128xf32>
    %172 = arith.truncf %171 : vector<32x128xf32> to vector<32x128xbf16>
    %c0_54 = arith.constant 0 : index
    %c0_55 = arith.constant 0 : index
    %c0_56 = arith.constant 0 : index
    %173 = vector.load %arg9[%c0_54, %c0_55, %c0_56] : memref<2x128x256xbf16, #tpu.memory_space<vmem>>, vector<1x128x256xbf16>
    %174 = vector.shape_cast %173 : vector<1x128x256xbf16> to vector<128x256xbf16>
    %cst_57 = arith.constant dense<0.000000e+00> : vector<32x256xf32>
    %175 = tpu.matmul %172, %174, %cst_57 {dimension_numbers = #tpu.dot_dimension_numbers<[1], [0], [0], [1], [0, 0, 1, 1], [], []>} : vector<32x128xbf16>, vector<128x256xbf16>, vector<32x256xf32> -> vector<32x256xf32>
    %c0_58 = arith.constant 0 : index
    %c0_59 = arith.constant 0 : index
    %c0_60 = arith.constant 0 : index
    %176 = vector.load %arg10[%c0_58, %c0_59, %c0_60] : memref<2x1x256xf32, #tpu.memory_space<vmem>>, vector<1x1x256xf32>
    %177 = vector.shape_cast %176 : vector<1x1x256xf32> to vector<1x256xf32>
    %178 = vector.broadcast %177 : vector<1x256xf32> to vector<32x256xf32>
    %179 = arith.addf %175, %178 : vector<32x256xf32>
    %180 = arith.mulf %179, %179 : vector<32x256xf32>
    %181 = arith.mulf %179, %180 : vector<32x256xf32>
    %cst_61 = arith.constant 4.471500e-02 : f32
    %182 = vector.broadcast %cst_61 : f32 to vector<32x256xf32>
    %183 = arith.mulf %182, %181 : vector<32x256xf32>
    %184 = arith.addf %179, %183 : vector<32x256xf32>
    %cst_62 = arith.constant 0.797884583 : f32
    %185 = vector.broadcast %cst_62 : f32 to vector<32x256xf32>
    %186 = arith.mulf %185, %184 : vector<32x256xf32>
    %187 = math.tanh %186 : vector<32x256xf32>
    %cst_63 = arith.constant 1.000000e+00 : f32
    %188 = vector.broadcast %cst_63 : f32 to vector<32x256xf32>
    %189 = arith.addf %188, %187 : vector<32x256xf32>
    %cst_64 = arith.constant 5.000000e-01 : f32
    %190 = vector.broadcast %cst_64 : f32 to vector<32x256xf32>
    %191 = arith.mulf %190, %189 : vector<32x256xf32>
    %192 = arith.mulf %179, %191 : vector<32x256xf32>
    %193 = arith.truncf %192 : vector<32x256xf32> to vector<32x256xbf16>
    %c0_65 = arith.constant 0 : index
    %c0_66 = arith.constant 0 : index
    %c0_67 = arith.constant 0 : index
    %194 = vector.load %arg11[%c0_65, %c0_66, %c0_67] : memref<2x256x128xbf16, #tpu.memory_space<vmem>>, vector<1x256x128xbf16>
    %195 = vector.shape_cast %194 : vector<1x256x128xbf16> to vector<256x128xbf16>
    %cst_68 = arith.constant dense<0.000000e+00> : vector<32x128xf32>
    %196 = tpu.matmul %193, %195, %cst_68 {dimension_numbers = #tpu.dot_dimension_numbers<[1], [0], [0], [1], [0, 0, 1, 1], [], []>} : vector<32x256xbf16>, vector<256x128xbf16>, vector<32x128xf32> -> vector<32x128xf32>
    %197 = vector.extract_strided_slice %78 {offsets = [3, 0], sizes = [1, 128], strides = [1, 1]} : vector<5x128xf32> to vector<1x128xf32>
    %198 = vector.shape_cast %197 : vector<1x128xf32> to vector<128xf32>
    %199 = vector.shape_cast %198 : vector<128xf32> to vector<1x128xf32>
    %200 = vector.broadcast %199 : vector<1x128xf32> to vector<32x128xf32>
    %201 = arith.addf %196, %200 : vector<32x128xf32>
    %202 = vector.extract_strided_slice %78 {offsets = [4, 0], sizes = [1, 128], strides = [1, 1]} : vector<5x128xf32> to vector<1x128xf32>
    %203 = vector.shape_cast %202 : vector<1x128xf32> to vector<128xf32>
    %204 = vector.shape_cast %203 : vector<128xf32> to vector<1x128xf32>
    %205 = vector.broadcast %204 : vector<1x128xf32> to vector<32x128xf32>
    %206 = arith.mulf %201, %205 : vector<32x128xf32>
    %207 = arith.addf %71, %206 : vector<32x128xf32>
    %c1 = arith.constant 1 : index
    %c0_69 = arith.constant 0 : index
    %c0_70 = arith.constant 0 : index
    %208 = vector.load %arg8[%c1, %c0_69, %c0_70] : memref<2x5x128xf32, #tpu.memory_space<vmem>>, vector<1x5x128xf32>
    %209 = vector.shape_cast %208 : vector<1x5x128xf32> to vector<5x128xf32>
    %210 = vector.shape_cast %207 : vector<32x128xf32> to vector<2x16x128xf32>
    %c0_71 = arith.constant 0 : index
    %c8_72 = arith.constant 8 : index
    %c0_73 = arith.constant 0 : index
    %211 = vector.load %arg15[%c0_71, %c8_72, %c0_73] : memref<2x32x128xf32, #tpu.memory_space<vmem>>, vector<2x16x128xf32>
    tpu.vector_store %arg15[%c0_71, %c8_72, %c0_73], %210 {strides = array<i32>} : memref<2x32x128xf32, #tpu.memory_space<vmem>>, vector<2x16x128xf32>,
    %c0_74 = arith.constant 0 : index
    %c0_75 = arith.constant 0 : index
    %c0_76 = arith.constant 0 : index
    %212 = vector.load %arg15[%c0_74, %c0_75, %c0_76] : memref<2x32x128xf32, #tpu.memory_space<vmem>>, vector<2x32x128xf32>
    %213 = vector.extract_strided_slice %212 {offsets = [0, 2, 0], sizes = [2, 16, 128], strides = [1, 1, 1]} : vector<2x32x128xf32> to vector<2x16x128xf32>
    %214 = vector.shape_cast %213 : vector<2x16x128xf32> to vector<32x128xf32>
    %215 = vector.extract_strided_slice %212 {offsets = [0, 4, 0], sizes = [2, 16, 128], strides = [1, 1, 1]} : vector<2x32x128xf32> to vector<2x16x128xf32>
    %216 = vector.shape_cast %215 : vector<2x16x128xf32> to vector<32x128xf32>
    %217 = vector.extract_strided_slice %212 {offsets = [0, 6, 0], sizes = [2, 16, 128], strides = [1, 1, 1]} : vector<2x32x128xf32> to vector<2x16x128xf32>
    %218 = vector.shape_cast %217 : vector<2x16x128xf32> to vector<32x128xf32>
    %219 = vector.extract_strided_slice %212 {offsets = [0, 8, 0], sizes = [2, 16, 128], strides = [1, 1, 1]} : vector<2x32x128xf32> to vector<2x16x128xf32>
    %220 = vector.shape_cast %219 : vector<2x16x128xf32> to vector<32x128xf32>
    %221 = vector.extract_strided_slice %212 {offsets = [0, 10, 0], sizes = [2, 16, 128], strides = [1, 1, 1]} : vector<2x32x128xf32> to vector<2x16x128xf32>
    %222 = vector.shape_cast %221 : vector<2x16x128xf32> to vector<32x128xf32>
    %223 = vector.extract_strided_slice %212 {offsets = [0, 12, 0], sizes = [2, 16, 128], strides = [1, 1, 1]} : vector<2x32x128xf32> to vector<2x16x128xf32>
    %224 = vector.shape_cast %223 : vector<2x16x128xf32> to vector<32x128xf32>
    %225 = vector.extract_strided_slice %212 {offsets = [0, 14, 0], sizes = [2, 16, 128], strides = [1, 1, 1]} : vector<2x32x128xf32> to vector<2x16x128xf32>
    %226 = vector.shape_cast %225 : vector<2x16x128xf32> to vector<32x128xf32>
    %c1_77 = arith.constant 1 : index
    %c0_78 = arith.constant 0 : index
    %c0_79 = arith.constant 0 : index
    %227 = vector.load %arg7[%c1_77, %c0_78, %c0_79] : memref<2x7x128xf32, #tpu.memory_space<vmem>>, vector<1x7x128xf32>
    %228 = vector.shape_cast %227 : vector<1x7x128xf32> to vector<7x128xf32>
    %229 = vector.extract_strided_slice %228 {offsets = [0, 0], sizes = [1, 128], strides = [1, 1]} : vector<7x128xf32> to vector<1x128xf32>
    %230 = vector.shape_cast %229 : vector<1x128xf32> to vector<128xf32>
    %231 = vector.shape_cast %230 : vector<128xf32> to vector<1x128xf32>
    %232 = vector.broadcast %231 : vector<1x128xf32> to vector<32x128xf32>
    %233 = arith.mulf %214, %232 : vector<32x128xf32>
    %234 = vector.extract_strided_slice %209 {offsets = [0, 0], sizes = [1, 128], strides = [1, 1]} : vector<5x128xf32> to vector<1x128xf32>
    %235 = vector.shape_cast %234 : vector<1x128xf32> to vector<128xf32>
    %236 = vector.shape_cast %235 : vector<128xf32> to vector<1x128xf32>
    %237 = vector.broadcast %236 : vector<1x128xf32> to vector<32x128xf32>
    %238 = arith.addf %233, %237 : vector<32x128xf32>
    %239 = vector.extract_strided_slice %228 {offsets = [1, 0], sizes = [1, 128], strides = [1, 1]} : vector<7x128xf32> to vector<1x128xf32>
    %240 = vector.shape_cast %239 : vector<1x128xf32> to vector<128xf32>
    %241 = vector.shape_cast %240 : vector<128xf32> to vector<1x128xf32>
    %242 = vector.broadcast %241 : vector<1x128xf32> to vector<32x128xf32>
    %243 = arith.mulf %216, %242 : vector<32x128xf32>
    %244 = arith.addf %238, %243 : vector<32x128xf32>
    %245 = vector.extract_strided_slice %228 {offsets = [2, 0], sizes = [1, 128], strides = [1, 1]} : vector<7x128xf32> to vector<1x128xf32>
    %246 = vector.shape_cast %245 : vector<1x128xf32> to vector<128xf32>
    %247 = vector.shape_cast %246 : vector<128xf32> to vector<1x128xf32>
    %248 = vector.broadcast %247 : vector<1x128xf32> to vector<32x128xf32>
    %249 = arith.mulf %218, %248 : vector<32x128xf32>
    %250 = arith.addf %244, %249 : vector<32x128xf32>
    %251 = vector.extract_strided_slice %228 {offsets = [3, 0], sizes = [1, 128], strides = [1, 1]} : vector<7x128xf32> to vector<1x128xf32>
    %252 = vector.shape_cast %251 : vector<1x128xf32> to vector<128xf32>
    %253 = vector.shape_cast %252 : vector<128xf32> to vector<1x128xf32>
    %254 = vector.broadcast %253 : vector<1x128xf32> to vector<32x128xf32>
    %255 = arith.mulf %220, %254 : vector<32x128xf32>
    %256 = arith.addf %250, %255 : vector<32x128xf32>
    %257 = vector.extract_strided_slice %228 {offsets = [4, 0], sizes = [1, 128], strides = [1, 1]} : vector<7x128xf32> to vector<1x128xf32>
    %258 = vector.shape_cast %257 : vector<1x128xf32> to vector<128xf32>
    %259 = vector.shape_cast %258 : vector<128xf32> to vector<1x128xf32>
    %260 = vector.broadcast %259 : vector<1x128xf32> to vector<32x128xf32>
    %261 = arith.mulf %222, %260 : vector<32x128xf32>
    %262 = arith.addf %256, %261 : vector<32x128xf32>
    %263 = vector.extract_strided_slice %228 {offsets = [5, 0], sizes = [1, 128], strides = [1, 1]} : vector<7x128xf32> to vector<1x128xf32>
    %264 = vector.shape_cast %263 : vector<1x128xf32> to vector<128xf32>
    %265 = vector.shape_cast %264 : vector<128xf32> to vector<1x128xf32>
    %266 = vector.broadcast %265 : vector<1x128xf32> to vector<32x128xf32>
    %267 = arith.mulf %224, %266 : vector<32x128xf32>
    %268 = arith.addf %262, %267 : vector<32x128xf32>
    %269 = vector.extract_strided_slice %228 {offsets = [6, 0], sizes = [1, 128], strides = [1, 1]} : vector<7x128xf32> to vector<1x128xf32>
    %270 = vector.shape_cast %269 : vector<1x128xf32> to vector<128xf32>
    %271 = vector.shape_cast %270 : vector<128xf32> to vector<1x128xf32>
    %272 = vector.broadcast %271 : vector<1x128xf32> to vector<32x128xf32>
    %273 = arith.mulf %226, %272 : vector<32x128xf32>
    %274 = arith.addf %268, %273 : vector<32x128xf32>
    %cst_80 = arith.constant dense<0.000000e+00> : vector<32xf32>
    %275 = vector.multi_reduction <add>, %274, %cst_80 [1] : vector<32x128xf32> to vector<32xf32>
    %276 = vector.shape_cast %275 : vector<32xf32> to vector<32x1xf32>
    %cst_81 = arith.constant 6.400000e+01 : f32
    %277 = vector.broadcast %cst_81 : f32 to vector<32x1xf32>
    %278 = arith.divf %276, %277 : vector<32x1xf32>
    %279 = vector.broadcast %278 : vector<32x1xf32> to vector<32x128xf32>
    %280 = arith.subf %274, %279 : vector<32x128xf32>
    %281 = vector.broadcast %76 : vector<1x128xf32> to vector<32x128xf32>
    %282 = arith.mulf %280, %281 : vector<32x128xf32>
    %283 = arith.mulf %282, %282 : vector<32x128xf32>
    %cst_82 = arith.constant dense<0.000000e+00> : vector<32xf32>
    %284 = vector.multi_reduction <add>, %283, %cst_82 [1] : vector<32x128xf32> to vector<32xf32>
    %285 = vector.shape_cast %284 : vector<32xf32> to vector<32x1xf32>
    %cst_83 = arith.constant 6.400000e+01 : f32
    %286 = vector.broadcast %cst_83 : f32 to vector<32x1xf32>
    %287 = arith.divf %285, %286 : vector<32x1xf32>
    %cst_84 = arith.constant 9.99999997E-7 : f32
    %288 = vector.broadcast %cst_84 : f32 to vector<32x1xf32>
    %289 = arith.addf %287, %288 : vector<32x1xf32>
    %290 = math.rsqrt %289 : vector<32x1xf32>
    %291 = vector.broadcast %290 : vector<32x1xf32> to vector<32x128xf32>
    %292 = arith.mulf %280, %291 : vector<32x128xf32>
    %293 = vector.extract_strided_slice %209 {offsets = [1, 0], sizes = [1, 128], strides = [1, 1]} : vector<5x128xf32> to vector<1x128xf32>
    %294 = vector.shape_cast %293 : vector<1x128xf32> to vector<128xf32>
    %295 = vector.shape_cast %294 : vector<128xf32> to vector<1x128xf32>
    %296 = vector.broadcast %295 : vector<1x128xf32> to vector<32x128xf32>
    %297 = arith.mulf %292, %296 : vector<32x128xf32>
    %298 = vector.extract_strided_slice %209 {offsets = [2, 0], sizes = [1, 128], strides = [1, 1]} : vector<5x128xf32> to vector<1x128xf32>
    %299 = vector.shape_cast %298 : vector<1x128xf32> to vector<128xf32>
    %300 = vector.shape_cast %299 : vector<128xf32> to vector<1x128xf32>
    %301 = vector.broadcast %300 : vector<1x128xf32> to vector<32x128xf32>
    %302 = arith.addf %297, %301 : vector<32x128xf32>
    %303 = arith.truncf %302 : vector<32x128xf32> to vector<32x128xbf16>
    %c1_85 = arith.constant 1 : index
    %c0_86 = arith.constant 0 : index
    %c0_87 = arith.constant 0 : index
    %304 = vector.load %arg9[%c1_85, %c0_86, %c0_87] : memref<2x128x256xbf16, #tpu.memory_space<vmem>>, vector<1x128x256xbf16>
    %305 = vector.shape_cast %304 : vector<1x128x256xbf16> to vector<128x256xbf16>
    %cst_88 = arith.constant dense<0.000000e+00> : vector<32x256xf32>
    %306 = tpu.matmul %303, %305, %cst_88 {dimension_numbers = #tpu.dot_dimension_numbers<[1], [0], [0], [1], [0, 0, 1, 1], [], []>} : vector<32x128xbf16>, vector<128x256xbf16>, vector<32x256xf32> -> vector<32x256xf32>
    %c1_89 = arith.constant 1 : index
    %c0_90 = arith.constant 0 : index
    %c0_91 = arith.constant 0 : index
    %307 = vector.load %arg10[%c1_89, %c0_90, %c0_91] : memref<2x1x256xf32, #tpu.memory_space<vmem>>, vector<1x1x256xf32>
    %308 = vector.shape_cast %307 : vector<1x1x256xf32> to vector<1x256xf32>
    %309 = vector.broadcast %308 : vector<1x256xf32> to vector<32x256xf32>
    %310 = arith.addf %306, %309 : vector<32x256xf32>
    %311 = arith.mulf %310, %310 : vector<32x256xf32>
    %312 = arith.mulf %310, %311 : vector<32x256xf32>
    %cst_92 = arith.constant 4.471500e-02 : f32
    %313 = vector.broadcast %cst_92 : f32 to vector<32x256xf32>
    %314 = arith.mulf %313, %312 : vector<32x256xf32>
    %315 = arith.addf %310, %314 : vector<32x256xf32>
    %cst_93 = arith.constant 0.797884583 : f32
    %316 = vector.broadcast %cst_93 : f32 to vector<32x256xf32>
    %317 = arith.mulf %316, %315 : vector<32x256xf32>
    %318 = math.tanh %317 : vector<32x256xf32>
    %cst_94 = arith.constant 1.000000e+00 : f32
    %319 = vector.broadcast %cst_94 : f32 to vector<32x256xf32>
    %320 = arith.addf %319, %318 : vector<32x256xf32>
    %cst_95 = arith.constant 5.000000e-01 : f32
    %321 = vector.broadcast %cst_95 : f32 to vector<32x256xf32>
    %322 = arith.mulf %321, %320 : vector<32x256xf32>
    %323 = arith.mulf %310, %322 : vector<32x256xf32>
    %324 = arith.truncf %323 : vector<32x256xf32> to vector<32x256xbf16>
    %c1_96 = arith.constant 1 : index
    %c0_97 = arith.constant 0 : index
    %c0_98 = arith.constant 0 : index
    %325 = vector.load %arg11[%c1_96, %c0_97, %c0_98] : memref<2x256x128xbf16, #tpu.memory_space<vmem>>, vector<1x256x128xbf16>
    %326 = vector.shape_cast %325 : vector<1x256x128xbf16> to vector<256x128xbf16>
    %cst_99 = arith.constant dense<0.000000e+00> : vector<32x128xf32>
    %327 = tpu.matmul %324, %326, %cst_99 {dimension_numbers = #tpu.dot_dimension_numbers<[1], [0], [0], [1], [0, 0, 1, 1], [], []>} : vector<32x256xbf16>, vector<256x128xbf16>, vector<32x128xf32> -> vector<32x128xf32>
    %328 = vector.extract_strided_slice %209 {offsets = [3, 0], sizes = [1, 128], strides = [1, 1]} : vector<5x128xf32> to vector<1x128xf32>
    %329 = vector.shape_cast %328 : vector<1x128xf32> to vector<128xf32>
    %330 = vector.shape_cast %329 : vector<128xf32> to vector<1x128xf32>
    %331 = vector.broadcast %330 : vector<1x128xf32> to vector<32x128xf32>
    %332 = arith.addf %327, %331 : vector<32x128xf32>
    %333 = vector.extract_strided_slice %209 {offsets = [4, 0], sizes = [1, 128], strides = [1, 1]} : vector<5x128xf32> to vector<1x128xf32>
    %334 = vector.shape_cast %333 : vector<1x128xf32> to vector<128xf32>
    %335 = vector.shape_cast %334 : vector<128xf32> to vector<1x128xf32>
    %336 = vector.broadcast %335 : vector<1x128xf32> to vector<32x128xf32>
    %337 = arith.mulf %332, %336 : vector<32x128xf32>
    %338 = arith.addf %207, %337 : vector<32x128xf32>
    %c0_100 = arith.constant 0 : index
    %c0_101 = arith.constant 0 : index
    %339 = vector.load %arg12[%c0_100, %c0_101] : memref<384x128xbf16, #tpu.memory_space<vmem>>, vector<384x128xbf16>
    %340 = vector.shape_cast %338 : vector<32x128xf32> to vector<2x16x128xf32>
    %c0_102 = arith.constant 0 : index
    %c8_103 = arith.constant 8 : index
    %c0_104 = arith.constant 0 : index
    %341 = vector.load %arg15[%c0_102, %c8_103, %c0_104] : memref<2x32x128xf32, #tpu.memory_space<vmem>>, vector<2x16x128xf32>
    tpu.vector_store %arg15[%c0_102, %c8_103, %c0_104], %340 {strides = array<i32>} : memref<2x32x128xf32, #tpu.memory_space<vmem>>, vector<2x16x128xf32>,
    %c0_105 = arith.constant 0 : index
    %c0_106 = arith.constant 0 : index
    %c0_107 = arith.constant 0 : index
    %342 = vector.load %arg15[%c0_105, %c0_106, %c0_107] : memref<2x32x128xf32, #tpu.memory_space<vmem>>, vector<2x32x128xf32>
    %343 = vector.extract_strided_slice %342 {offsets = [0, 7, 0], sizes = [2, 16, 128], strides = [1, 1, 1]} : vector<2x32x128xf32> to vector<2x16x128xf32>
    %344 = vector.shape_cast %343 : vector<2x16x128xf32> to vector<32x128xf32>
    %345 = vector.extract_strided_slice %342 {offsets = [0, 8, 0], sizes = [2, 16, 128], strides = [1, 1, 1]} : vector<2x32x128xf32> to vector<2x16x128xf32>
    %346 = vector.shape_cast %345 : vector<2x16x128xf32> to vector<32x128xf32>
    %347 = vector.extract_strided_slice %342 {offsets = [0, 9, 0], sizes = [2, 16, 128], strides = [1, 1, 1]} : vector<2x32x128xf32> to vector<2x16x128xf32>
    %348 = vector.shape_cast %347 : vector<2x16x128xf32> to vector<32x128xf32>
    %349 = tpu.concatenate %344, %346, %348 in 1 : vector<32x128xf32>, vector<32x128xf32>, vector<32x128xf32> -> vector<32x384xf32>
    %350 = arith.truncf %349 : vector<32x384xf32> to vector<32x384xbf16>
    %cst_108 = arith.constant dense<0.000000e+00> : vector<32x128xf32>
    %351 = tpu.matmul %350, %339, %cst_108 {dimension_numbers = #tpu.dot_dimension_numbers<[1], [0], [0], [1], [0, 0, 1, 1], [], []>} : vector<32x384xbf16>, vector<384x128xbf16>, vector<32x128xf32> -> vector<32x128xf32>
    %c0_109 = arith.constant 0 : index
    %c0_110 = arith.constant 0 : index
    %352 = vector.load %arg13[%c0_109, %c0_110] : memref<1x128xf32, #tpu.memory_space<vmem>>, vector<1x128xf32>
    %353 = vector.shape_cast %352 : vector<1x128xf32> to vector<128xf32>
    %354 = vector.shape_cast %353 : vector<128xf32> to vector<1x128xf32>
    %355 = vector.broadcast %354 : vector<1x128xf32> to vector<32x128xf32>
    %356 = arith.mulf %351, %355 : vector<32x128xf32>
    %357 = vector.shape_cast %356 : vector<32x128xf32> to vector<2x16x128xf32>
    %c0_111 = arith.constant 0 : index
    %c0_112 = arith.constant 0 : index
    %c0_113 = arith.constant 0 : index
    %358 = vector.load %arg14[%c0_111, %c0_112, %c0_113] : memref<2x16x128xf32, #tpu.memory_space<vmem>>, vector<2x16x128xf32>
    tpu.vector_store %arg14[%c0_111, %c0_112, %c0_113], %357 {strides = array<i32>} : memref<2x16x128xf32, #tpu.memory_space<vmem>>, vector<2x16x128xf32>,
    return
  }
  func.func @transform_0(%arg0: i32) -> (i32, i32, i32) {
    %c0_i32 = arith.constant 0 : i32
    %c0_i32_0 = arith.constant 0 : i32
    %c0_i32_1 = arith.constant 0 : i32
    return %arg0, %c0_i32, %c0_i32_0 : i32, i32, i32
  }
  func.func @transform_1(%arg0: i32) -> (i32, i32) {
    %c0_i32 = arith.constant 0 : i32
    %c0_i32_0 = arith.constant 0 : i32
    %c0_i32_1 = arith.constant 0 : i32
    return %c0_i32, %c0_i32_0 : i32, i32
  }
  func.func @transform_2(%arg0: i32) -> (i32, i32) {
    %c0_i32 = arith.constant 0 : i32
    %c0_i32_0 = arith.constant 0 : i32
    %c0_i32_1 = arith.constant 0 : i32
    return %c0_i32, %c0_i32_0 : i32, i32
  }
  func.func @transform_3(%arg0: i32) -> (i32, i32) {
    %c0_i32 = arith.constant 0 : i32
    %c0_i32_0 = arith.constant 0 : i32
    %c0_i32_1 = arith.constant 0 : i32
    return %c0_i32, %c0_i32_0 : i32, i32
  }
  func.func @transform_4(%arg0: i32) -> (i32, i32) {
    %c0_i32 = arith.constant 0 : i32
    %c0_i32_0 = arith.constant 0 : i32
    %c0_i32_1 = arith.constant 0 : i32
    return %c0_i32, %c0_i32_0 : i32, i32
  }
  func.func @transform_5(%arg0: i32) -> (i32, i32) {
    %c0_i32 = arith.constant 0 : i32
    %c0_i32_0 = arith.constant 0 : i32
    %c0_i32_1 = arith.constant 0 : i32
    return %c0_i32, %c0_i32_0 : i32, i32
  }
  func.func @transform_6(%arg0: i32) -> (i32, i32, i32) {
    %c0_i32 = arith.constant 0 : i32
    %c0_i32_0 = arith.constant 0 : i32
    %c0_i32_1 = arith.constant 0 : i32
    %c0_i32_2 = arith.constant 0 : i32
    return %c0_i32, %c0_i32_0, %c0_i32_1 : i32, i32, i32
  }
  func.func @transform_7(%arg0: i32) -> (i32, i32, i32) {
    %c0_i32 = arith.constant 0 : i32
    %c0_i32_0 = arith.constant 0 : i32
    %c0_i32_1 = arith.constant 0 : i32
    %c0_i32_2 = arith.constant 0 : i32
    return %c0_i32, %c0_i32_0, %c0_i32_1 : i32, i32, i32
  }
  func.func @transform_8(%arg0: i32) -> (i32, i32, i32) {
    %c0_i32 = arith.constant 0 : i32
    %c0_i32_0 = arith.constant 0 : i32
    %c0_i32_1 = arith.constant 0 : i32
    %c0_i32_2 = arith.constant 0 : i32
    return %c0_i32, %c0_i32_0, %c0_i32_1 : i32, i32, i32
  }
  func.func @transform_9(%arg0: i32) -> (i32, i32, i32) {
    %c0_i32 = arith.constant 0 : i32
    %c0_i32_0 = arith.constant 0 : i32
    %c0_i32_1 = arith.constant 0 : i32
    %c0_i32_2 = arith.constant 0 : i32
    return %c0_i32, %c0_i32_0, %c0_i32_1 : i32, i32, i32
  }
  func.func @transform_10(%arg0: i32) -> (i32, i32, i32) {
    %c0_i32 = arith.constant 0 : i32
    %c0_i32_0 = arith.constant 0 : i32
    %c0_i32_1 = arith.constant 0 : i32
    %c0_i32_2 = arith.constant 0 : i32
    return %c0_i32, %c0_i32_0, %c0_i32_1 : i32, i32, i32
  }
  func.func @transform_11(%arg0: i32) -> (i32, i32) {
    %c0_i32 = arith.constant 0 : i32
    %c0_i32_0 = arith.constant 0 : i32
    %c0_i32_1 = arith.constant 0 : i32
    return %c0_i32, %c0_i32_0 : i32, i32
  }
  func.func @transform_12(%arg0: i32) -> (i32, i32) {
    %c0_i32 = arith.constant 0 : i32
    %c0_i32_0 = arith.constant 0 : i32
    %c0_i32_1 = arith.constant 0 : i32
    return %c0_i32, %c0_i32_0 : i32, i32
  }
  func.func @transform_13(%arg0: i32) -> (i32, i32, i32) {
    %c0_i32 = arith.constant 0 : i32
    %c0_i32_0 = arith.constant 0 : i32
    %c0_i32_1 = arith.constant 0 : i32
    return %arg0, %c0_i32, %c0_i32_0 : i32, i32, i32
  }
}

</mosaic_0001>

<llo_original>
// kernel: dvae_decode.1
$region0: #{dvae_decode.1}
  #allocation0 [shape = 'u32[]', space=smem, size = 0x4, offset = 0x4, fixed_abs, tag = 'smem constant byte address 0x4 - core index']
  #allocation1 [shape = 'u32[144,128]{1,0:T(1,128)}', space=vmem, size = 0x12000, scoped, tag = 'internal scratch']
  #allocation2 [shape = 'f32[2,32,128]{2,1,0:T(8,128)}', space=vmem, size = 0x8000, scoped, tag = 'scratch operand']
  %s0 = inlined_call_operand.vmem [shape: s32[2,32,1], index: 0, kind: input, shape index: {}]
  %s1 = inlined_call_operand.hbm [shape: bf16[128,128], index: 1, kind: input, shape index: {}]
  %s2 = inlined_call_operand.hbm [shape: bf16[384,128], index: 2, kind: input, shape index: {}]
  %s3 = inlined_call_operand.vmem [shape: f32[1,128], index: 3, kind: input, shape index: {}]
  %s4 = inlined_call_operand.hbm [shape: bf16[384,128], index: 4, kind: input, shape index: {}]
  %s5 = inlined_call_operand.vmem [shape: f32[1,128], index: 5, kind: input, shape index: {}]
  %s6 = inlined_call_operand.vmem [shape: f32[2,7,128], index: 6, kind: input, shape index: {}]
  %s7 = inlined_call_operand.vmem [shape: f32[2,5,128], index: 7, kind: input, shape index: {}]
  %s8 = inlined_call_operand.vmem [shape: bf16[2,128,256], index: 8, kind: input, shape index: {}]
  %s9 = inlined_call_operand.hbm [shape: f32[2,1,256], index: 9, kind: input, shape index: {}]
  %s10 = inlined_call_operand.hbm [shape: bf16[2,256,128], index: 10, kind: input, shape index: {}]
  %s11 = inlined_call_operand.hbm [shape: bf16[384,128], index: 11, kind: input, shape index: {}]
  %s12 = inlined_call_operand.hbm [shape: f32[1,128], index: 12, kind: input, shape index: {}]
  %s13 = inlined_call_operand.vmem [shape: f32[2,16,128], index: 13, kind: output, shape index: {}]
  %s14 = sld [smem:[#allocation0]]
  $region90: #{dvae_decode.1} parent=0
    _
  %s16 = ssub.s32 1, %s14
  %s17 = scalar_select 0, %s16, %s14
  $region1: #{dvae_decode.1} parent=0
    #allocation3 [shape = 'u8[32768]{0}', space=vmem, size = 0x8000, scoped, tag = 'input window, operand 1, single buffered']
    #allocation4 [shape = 's32[1]{0}', space=sflag, size = 0x4, scoped, tag = 'scoped memory for dvae_decode.1']
    #allocation5 [shape = 'u8[98304]{0}', space=vmem, size = 0x18000, scoped, tag = 'input window, operand 2, single buffered']
    #allocation6 [shape = 's32[1]{0}', space=sflag, size = 0x4, scoped, tag = 'scoped memory for dvae_decode.1']
    #allocation7 [shape = 'u8[98304]{0}', space=vmem, size = 0x18000, scoped, tag = 'input window, operand 4, single buffered']
    #allocation8 [shape = 'u8[2048]{0}', space=vmem, size = 0x800, scoped, tag = 'input window, operand 9, single buffered']
    #allocation9 [shape = 's32[1]{0}', space=sflag, size = 0x4, scoped, tag = 'scoped memory for dvae_decode.1']
    #allocation10 [shape = 'u8[131072]{0}', space=vmem, size = 0x20000, scoped, tag = 'input window, operand 10, single buffered']
    #allocation11 [shape = 'u8[98304]{0}', space=vmem, size = 0x18000, scoped, tag = 'input window, operand 11, single buffered']
    #allocation12 [shape = 's32[1]{0}', space=sflag, size = 0x4, scoped, tag = 'scoped memory for dvae_decode.1']
    #allocation13 [shape = 'u8[512]{0}', space=vmem, size = 0x400, scoped, tag = 'input window, operand 12, single buffered']
    %18 = vsyncpa [#allocation4], 0
    %19 = vsyncpa [#allocation6], 0
    %20 = vsyncpa [#allocation9], 0
    %21 = vsyncpa [#allocation12], 0
    // Predicated region
    $region2: #{dvae_decode.1} parent=1 // pred_check
      _
    $region3: #{dvae_decode.1} parent=1 // pred_check_branch
      %23 = sbr.rel (0) target = $region5
    $region4: #{dvae_decode.1} parent=1 // pred_region
      _
    $region5: #{dvae_decode.1} parent=1 // pred_fallthru
      _
    // Predicated region
    $region6: #{dvae_decode.1} parent=1 // pred_check
      _
    $region7: #{dvae_decode.1} parent=1 // pred_check_branch
      %25 = sbr.rel (0) target = $region9
    $region8: #{dvae_decode.1} parent=1 // pred_region
      %s27 = ssub.s32 1024, 1024
      %28 = vsyncadd [#allocation4], %s27
      %s29 = sshll.u32 [#allocation3], 4
      %s30 = int_to_ptr.vmem [resolvable:$true] %s29
      %35 = dma.hbm_to_vmem [thread:$0]  %s1, 1024, %s30, [#allocation4], 64, 64, 4
    $region9: #{dvae_decode.1} parent=1 // pred_fallthru
      _
    // Predicated region
    $region10: #{dvae_decode.1} parent=1 // pred_check
      _
    $region11: #{dvae_decode.1} parent=1 // pred_check_branch
      %37 = sbr.rel (0) target = $region13
    $region12: #{dvae_decode.1} parent=1 // pred_region
      %s39 = ssub.s32 3072, 3072
      %40 = vsyncadd [#allocation6], %s39
      %s41 = sshll.u32 [#allocation5], 4
      %s42 = int_to_ptr.vmem [resolvable:$true] %s41
      %47 = dma.hbm_to_vmem [thread:$0]  %s2, 3072, %s42, [#allocation6], 64, 64, 4
    $region13: #{dvae_decode.1} parent=1 // pred_fallthru
      _
    // Predicated region
    $region14: #{dvae_decode.1} parent=1 // pred_check
      _
    $region15: #{dvae_decode.1} parent=1 // pred_check_branch
      %49 = sbr.rel (0) target = $region17
    $region16: #{dvae_decode.1} parent=1 // pred_region
      _
    $region17: #{dvae_decode.1} parent=1 // pred_fallthru
      _
    // Predicated region
    $region18: #{dvae_decode.1} parent=1 // pred_check
      _
    $region19: #{dvae_decode.1} parent=1 // pred_check_branch
      %51 = sbr.rel (0) target = $region21
    $region20: #{dvae_decode.1} parent=1 // pred_region
      %s53 = ssub.s32 3072, 3072
      %54 = vsyncadd [#allocation6], %s53
      %s55 = sshll.u32 [#allocation7], 4
      %s56 = int_to_ptr.vmem [resolvable:$true] %s55
      %61 = dma.hbm_to_vmem [thread:$0]  %s4, 3072, %s56, [#allocation6], 64, 64, 4
    $region21: #{dvae_decode.1} parent=1 // pred_fallthru
      _
    // Predicated region
    $region22: #{dvae_decode.1} parent=1 // pred_check
      _
    $region23: #{dvae_decode.1} parent=1 // pred_check_branch
      %63 = sbr.rel (0) target = $region25
    $region24: #{dvae_decode.1} parent=1 // pred_region
      _
    $region25: #{dvae_decode.1} parent=1 // pred_fallthru
      _
    // Predicated region
    $region26: #{dvae_decode.1} parent=1 // pred_check
      _
    $region27: #{dvae_decode.1} parent=1 // pred_check_branch
      %65 = sbr.rel (0) target = $region29
    $region28: #{dvae_decode.1} parent=1 // pred_region
      _
    $region29: #{dvae_decode.1} parent=1 // pred_fallthru
      _
    // Predicated region
    $region30: #{dvae_decode.1} parent=1 // pred_check
      _
    $region31: #{dvae_decode.1} parent=1 // pred_check_branch
      %67 = sbr.rel (0) target = $region33
    $region32: #{dvae_decode.1} parent=1 // pred_region
      _
    $region33: #{dvae_decode.1} parent=1 // pred_fallthru
      _
    // Predicated region
    $region34: #{dvae_decode.1} parent=1 // pred_check
      _
    $region35: #{dvae_decode.1} parent=1 // pred_check_branch
      %69 = sbr.rel (0) target = $region37
    $region36: #{dvae_decode.1} parent=1 // pred_region
      _
    $region37: #{dvae_decode.1} parent=1 // pred_fallthru
      _
    // Predicated region
    $region38: #{dvae_decode.1} parent=1 // pred_check
      _
    $region39: #{dvae_decode.1} parent=1 // pred_check_branch
      %71 = sbr.rel (0) target = $region41
    $region40: #{dvae_decode.1} parent=1 // pred_region
      %s73 = ssub.s32 64, 64
      %74 = vsyncadd [#allocation9], %s73
      %s75 = sshll.u32 [#allocation8], 4
      %s76 = int_to_ptr.vmem [resolvable:$true] %s75
      %81 = dma.hbm_to_vmem [thread:$0]  %s9, 64, %s76, [#allocation9], 32, 32, 2
    $region41: #{dvae_decode.1} parent=1 // pred_fallthru
      _
    // Predicated region
    $region42: #{dvae_decode.1} parent=1 // pred_check
      _
    $region43: #{dvae_decode.1} parent=1 // pred_check_branch
      %83 = sbr.rel (0) target = $region45
    $region44: #{dvae_decode.1} parent=1 // pred_region
      %s85 = ssub.s32 4096, 4096
      %86 = vsyncadd [#allocation9], %s85
      %s87 = sshll.u32 [#allocation10], 4
      %s88 = int_to_ptr.vmem [resolvable:$true] %s87
      %93 = dma.hbm_to_vmem [thread:$0]  %s10, 4096, %s88, [#allocation9], 64, 64, 4
    $region45: #{dvae_decode.1} parent=1 // pred_fallthru
      _
    // Predicated region
    $region46: #{dvae_decode.1} parent=1 // pred_check
      _
    $region47: #{dvae_decode.1} parent=1 // pred_check_branch
      %95 = sbr.rel (0) target = $region49
    $region48: #{dvae_decode.1} parent=1 // pred_region
      %s97 = ssub.s32 3072, 3072
      %98 = vsyncadd [#allocation12], %s97
      %s99 = sshll.u32 [#allocation11], 4
      %s100 = int_to_ptr.vmem [resolvable:$true] %s99
      %105 = dma.hbm_to_vmem [thread:$0]  %s11, 3072, %s100, [#allocation12], 64, 64, 4
    $region49: #{dvae_decode.1} parent=1 // pred_fallthru
      _
    // Predicated region
    $region50: #{dvae_decode.1} parent=1 // pred_check
      _
    $region51: #{dvae_decode.1} parent=1 // pred_check_branch
      %107 = sbr.rel (0) target = $region53
    $region52: #{dvae_decode.1} parent=1 // pred_region
      %s109 = ssub.s32 16, 16
      %110 = vsyncadd [#allocation12], %s109
      %s112 = sshll.u32 [#allocation13], 4
      %s113 = int_to_ptr.vmem [resolvable:$true] %s112
      %115 = dma.hbm_to_vmem [thread:$0]  %s12, 16, %s113, [#allocation12]
    $region53: #{dvae_decode.1} parent=1 // pred_fallthru
      _
    // Predicated region
    $region54: #{dvae_decode.1} parent=1 // pred_check
      _
    $region55: #{dvae_decode.1} parent=1 // pred_check_branch
      %117 = sbr.rel (0) target = $region57
    $region56: #{dvae_decode.1} parent=1 // pred_region
      %118 = dma.done [#allocation4], 1024
    $region57: #{dvae_decode.1} parent=1 // pred_fallthru
      _
    // Predicated region
    $region58: #{dvae_decode.1} parent=1 // pred_check
      _
    $region59: #{dvae_decode.1} parent=1 // pred_check_branch
      %120 = sbr.rel (0) target = $region61
    $region60: #{dvae_decode.1} parent=1 // pred_region
      %121 = dma.done [#allocation6], 3072
    $region61: #{dvae_decode.1} parent=1 // pred_fallthru
      _
    // Predicated region
    $region62: #{dvae_decode.1} parent=1 // pred_check
      _
    $region63: #{dvae_decode.1} parent=1 // pred_check_branch
      %123 = sbr.rel (0) target = $region65
    $region64: #{dvae_decode.1} parent=1 // pred_region
      %124 = dma.done [#allocation6], 3072
    $region65: #{dvae_decode.1} parent=1 // pred_fallthru
      _
    // Predicated region
    $region66: #{dvae_decode.1} parent=1 // pred_check
      _
    $region67: #{dvae_decode.1} parent=1 // pred_check_branch
      %126 = sbr.rel (0) target = $region69
    $region68: #{dvae_decode.1} parent=1 // pred_region
      %127 = dma.done [#allocation9], 64
    $region69: #{dvae_decode.1} parent=1 // pred_fallthru
      _
    // Predicated region
    $region70: #{dvae_decode.1} parent=1 // pred_check
      _
    $region71: #{dvae_decode.1} parent=1 // pred_check_branch
      %129 = sbr.rel (0) target = $region73
    $region72: #{dvae_decode.1} parent=1 // pred_region
      %130 = dma.done [#allocation9], 4096
    $region73: #{dvae_decode.1} parent=1 // pred_fallthru
      _
    // Predicated region
    $region74: #{dvae_decode.1} parent=1 // pred_check
      _
    $region75: #{dvae_decode.1} parent=1 // pred_check_branch
      %132 = sbr.rel (0) target = $region77
    $region76: #{dvae_decode.1} parent=1 // pred_region
      %133 = dma.done [#allocation12], 3072
    $region77: #{dvae_decode.1} parent=1 // pred_fallthru
      _
    // Predicated region
    $region78: #{dvae_decode.1} parent=1 // pred_check
      _
    $region79: #{dvae_decode.1} parent=1 // pred_check_branch
      %135 = sbr.rel (0) target = $region81
    $region80: #{dvae_decode.1} parent=1 // pred_region
      %136 = dma.done [#allocation12], 16
    $region81: #{dvae_decode.1} parent=1 // pred_fallthru
      _
    %138 = vst [vmem:[#allocation2] sm:$0xff] 0.0
    %139 = vst [vmem:[#allocation2 + $0x20] sm:$0xff] 0.0
    %140 = vst [vmem:[#allocation2 + $0x18] sm:$0xff] 0.0
    %141 = vst [vmem:[#allocation2 + $0x38] sm:$0xff] 0.0
    %v142 = vld [vmem:[%s0] sm:$0xff]
    %v143 = vld [vmem:[%s0 + $0x8] sm:$0xff]
    %v144 = vld [vmem:[%s0 + $0x10] sm:$0xff]
    %v145 = vld [vmem:[%s0 + $0x18] sm:$0xff]
    %v146 = vld [vmem:[%s0 + $0x20] sm:$0xff]
    %v147 = vld [vmem:[%s0 + $0x28] sm:$0xff]
    %v148 = vld [vmem:[%s0 + $0x30] sm:$0xff]
    %v149 = vld [vmem:[%s0 + $0x38] sm:$0xff]
    %v150 = vlaneseq
    %v151 = vand.u32 %v150, 127
    %152 = vset.pattern.permute.xlu0 0
    %153 = vperm.xlu0 %152, %v142
    %v154 = vpop.permute.xlu0 %153
    %155 = vset.pattern.permute.xlu0 0
    %156 = vperm.xlu0 %155, %v143
    %v157 = vpop.permute.xlu0 %156
    %158 = vset.pattern.permute.xlu0 0
    %159 = vperm.xlu0 %158, %v146
    %v160 = vpop.permute.xlu0 %159
    %161 = vset.pattern.permute.xlu0 0
    %162 = vperm.xlu0 %161, %v147
    %v163 = vpop.permute.xlu0 %162
    %vm164 = vcmp.eq.s32.totalorder %v151, %v154
    %vm165 = vcmp.eq.s32.totalorder %v151, %v157
    %vm166 = vcmp.eq.s32.totalorder %v151, %v160
    %vm167 = vcmp.eq.s32.totalorder %v151, %v163
    %v168 = vsel %vm164, 1, 0
    %v169 = vsel %vm165, 1, 0
    %v170 = vsel %vm166, 1, 0
    %v171 = vsel %vm167, 1, 0
    %v172 = vcvt.s32.f32 %v168
    %v173 = vcvt.s32.f32 %v169
    %v174 = vcvt.s32.f32 %v170
    %v175 = vcvt.s32.f32 %v171
    %v176 = vadd.f32 %v172, 0.0
    %v177 = vadd.f32 %v173, 0.0
    %v178 = vadd.f32 %v174, 0.0
    %v179 = vadd.f32 %v175, 0.0
    %180 = vset.pattern.permute.xlu0 0
    %181 = vperm.xlu0 %180, %v144
    %v182 = vpop.permute.xlu0 %181
    %183 = vset.pattern.permute.xlu0 0
    %184 = vperm.xlu0 %183, %v145
    %v185 = vpop.permute.xlu0 %184
    %186 = vset.pattern.permute.xlu0 0
    %187 = vperm.xlu0 %186, %v148
    %v188 = vpop.permute.xlu0 %187
    %189 = vset.pattern.permute.xlu0 0
    %190 = vperm.xlu0 %189, %v149
    %v191 = vpop.permute.xlu0 %190
    %vm192 = vcmp.eq.s32.totalorder %v151, %v182
    %vm193 = vcmp.eq.s32.totalorder %v151, %v185
    %vm194 = vcmp.eq.s32.totalorder %v151, %v188
    %vm195 = vcmp.eq.s32.totalorder %v151, %v191
    %v196 = vsel %vm192, 1, 0
    %v197 = vsel %vm193, 1, 0
    %v198 = vsel %vm194, 1, 0
    %v199 = vsel %vm195, 1, 0
    %v200 = vcvt.s32.f32 %v196
    %v201 = vcvt.s32.f32 %v197
    %v202 = vcvt.s32.f32 %v198
    %v203 = vcvt.s32.f32 %v199
    %v204 = vadd.f32 %v176, %v200
    %v205 = vadd.f32 %v177, %v201
    %v206 = vadd.f32 %v178, %v202
    %v207 = vadd.f32 %v179, %v203
    %v208 = vpack.c.bf16 %v205, %v204
    %v209 = vpack.c.bf16 %v207, %v206
    %v210 = vld [vmem:[#allocation3] sm:$0xf]
    %v211 = vld [vmem:[#allocation3 + $0x4] sm:$0xf]
    %v212 = vld [vmem:[#allocation3 + $0x8] sm:$0xf]
    %v213 = vld [vmem:[#allocation3 + $0xc] sm:$0xf]
    %v214 = vld [vmem:[#allocation3 + $0x10] sm:$0xf]
    %v215 = vld [vmem:[#allocation3 + $0x14] sm:$0xf]
    %v216 = vld [vmem:[#allocation3 + $0x18] sm:$0xf]
    %v217 = vld [vmem:[#allocation3 + $0x1c] sm:$0xf]
    %v218 = vld [vmem:[#allocation3 + $0x20] sm:$0xf]
    %v219 = vld [vmem:[#allocation3 + $0x24] sm:$0xf]
    %v220 = vld [vmem:[#allocation3 + $0x28] sm:$0xf]
    %v221 = vld [vmem:[#allocation3 + $0x2c] sm:$0xf]
    %v222 = vld [vmem:[#allocation3 + $0x30] sm:$0xf]
    %v223 = vld [vmem:[#allocation3 + $0x34] sm:$0xf]
    %v224 = vld [vmem:[#allocation3 + $0x38] sm:$0xf]
    %v225 = vld [vmem:[#allocation3 + $0x3c] sm:$0xf]
    %v242 = vunpack.c.l.b16 %v210
    %v243 = vunpack.c.l.b16 %v211
    %v244 = vunpack.c.l.b16 %v212
    %v245 = vunpack.c.l.b16 %v213
    %v246 = vunpack.c.l.b16 %v214
    %v247 = vunpack.c.l.b16 %v215
    %v248 = vunpack.c.l.b16 %v216
    %v249 = vunpack.c.l.b16 %v217
    %v250 = vunpack.c.l.b16 %v218
    %v251 = vunpack.c.l.b16 %v219
    %v252 = vunpack.c.l.b16 %v220
    %v253 = vunpack.c.l.b16 %v221
    %v254 = vunpack.c.l.b16 %v222
    %v255 = vunpack.c.l.b16 %v223
    %v256 = vunpack.c.l.b16 %v224
    %v257 = vunpack.c.l.b16 %v225
    %v258 = vpack.c.b16 %v243, %v242
    %v259 = vpack.c.b16 %v245, %v244
    %v260 = vpack.c.b16 %v247, %v246
    %v261 = vpack.c.b16 %v249, %v248
    %v262 = vpack.c.b16 %v251, %v250
    %v263 = vpack.c.b16 %v253, %v252
    %v264 = vpack.c.b16 %v255, %v254
    %v265 = vpack.c.b16 %v257, %v256
    %274 = vmatprep.subr.bf16.mxu0 0
    %275 = vmatpush1.bf16.msra.mxu0 %v258
    %276 = vmatprep.subr.bf16.mxu0 0
    %277 = vmatpush1.bf16.msra.mxu0 %v259
    %278 = vmatprep.subr.bf16.mxu0 0
    %279 = vmatpush1.bf16.msra.mxu0 %v260
    %280 = vmatprep.subr.bf16.mxu0 0
    %281 = vmatpush1.bf16.msra.mxu0 %v261
    %282 = vmatprep.subr.bf16.mxu0 0
    %283 = vmatpush1.bf16.msra.mxu0 %v262
    %284 = vmatprep.subr.bf16.mxu0 0
    %285 = vmatpush1.bf16.msra.mxu0 %v263
    %286 = vmatprep.subr.bf16.mxu0 0
    %287 = vmatpush1.bf16.msra.mxu0 %v264
    %288 = vmatprep.subr.bf16.mxu0 0
    %289 = vmatpush1.bf16.msra.mxu0 %v265
    %290 = vmatprep.subr.bf16.mxu0 0
    %291 = vmatpush1.bf16.msra.mxu0 0
    %292 = vmatprep.subr.bf16.mxu0 0
    %293 = vmatpush1.bf16.msra.mxu0 0
    %294 = vmatprep.subr.bf16.mxu0 0
    %295 = vmatpush1.bf16.msra.mxu0 0
    %296 = vmatprep.subr.bf16.mxu0 0
    %297 = vmatpush1.bf16.msra.mxu0 0
    %298 = vmatprep.subr.bf16.mxu0 0
    %299 = vmatpush1.bf16.msra.mxu0 0
    %300 = vmatprep.subr.bf16.mxu0 0
    %301 = vmatpush1.bf16.msra.mxu0 0
    %302 = vmatprep.subr.bf16.mxu0 0
    %303 = vmatpush1.bf16.msra.mxu0 0
    %304 = vmatprep.subr.bf16.mxu0 0
    %305 = vmatpush1.bf16.msra.mxu0 0
    %306 = vmatprep.mubr.bf16.mxu0 0
    %307 = vmatmul.mubr.bf16.gmra.mrb[0].mxu0 %v208
    %v308 = vpop.f32.mrb[0].mxu0
    %v309 = vadd.f32 0.0, %v308
    %v310 = vpop.f32.mrb[0].mxu0
    %v311 = vpop.f32.mrb[0].mxu0
    %v312 = vadd.f32 0.0, %v311
    %v313 = vpop.f32.mrb[0].mxu0
    %314 = vmatprep.mubr.bf16.mxu0 0
    %315 = vmatmul.mubr.bf16.gmra.mrb[0].mxu0 %v209
    %v316 = vpop.f32.mrb[0].mxu0
    %v317 = vadd.f32 0.0, %v316
    %v318 = vpop.f32.mrb[0].mxu0
    %v319 = vpop.f32.mrb[0].mxu0
    %v320 = vadd.f32 0.0, %v319
    %v321 = vpop.f32.mrb[0].mxu0
    %322 = vdwg.mxu0
    %v323 = vld [vmem:[#allocation5] sm:$0xf]
    %v324 = vld [vmem:[#allocation5 + $0x4] sm:$0xf]
    %v325 = vld [vmem:[#allocation5 + $0x8] sm:$0xf]
    %v326 = vld [vmem:[#allocation5 + $0xc] sm:$0xf]
    %v327 = vld [vmem:[#allocation5 + $0x10] sm:$0xf]
    %v328 = vld [vmem:[#allocation5 + $0x14] sm:$0xf]
    %v329 = vld [vmem:[#allocation5 + $0x18] sm:$0xf]
    %v330 = vld [vmem:[#allocation5 + $0x1c] sm:$0xf]
    %v331 = vld [vmem:[#allocation5 + $0x20] sm:$0xf]
    %v332 = vld [vmem:[#allocation5 + $0x24] sm:$0xf]
    %v333 = vld [vmem:[#allocation5 + $0x28] sm:$0xf]
    %v334 = vld [vmem:[#allocation5 + $0x2c] sm:$0xf]
    %v335 = vld [vmem:[#allocation5 + $0x30] sm:$0xf]
    %v336 = vld [vmem:[#allocation5 + $0x34] sm:$0xf]
    %v337 = vld [vmem:[#allocation5 + $0x38] sm:$0xf]
    %v338 = vld [vmem:[#allocation5 + $0x3c] sm:$0xf]
    %v339 = vld [vmem:[#allocation5 + $0x40] sm:$0xf]
    %v340 = vld [vmem:[#allocation5 + $0x44] sm:$0xf]
    %v341 = vld [vmem:[#allocation5 + $0x48] sm:$0xf]
    %v342 = vld [vmem:[#allocation5 + $0x4c] sm:$0xf]
    %v343 = vld [vmem:[#allocation5 + $0x50] sm:$0xf]
    %v344 = vld [vmem:[#allocation5 + $0x54] sm:$0xf]
    %v345 = vld [vmem:[#allocation5 + $0x58] sm:$0xf]
    %v346 = vld [vmem:[#allocation5 + $0x5c] sm:$0xf]
    %v347 = vld [vmem:[#allocation5 + $0x60] sm:$0xf]
    %v348 = vld [vmem:[#allocation5 + $0x64] sm:$0xf]
    %v349 = vld [vmem:[#allocation5 + $0x68] sm:$0xf]
    %v350 = vld [vmem:[#allocation5 + $0x6c] sm:$0xf]
    %v351 = vld [vmem:[#allocation5 + $0x70] sm:$0xf]
    %v352 = vld [vmem:[#allocation5 + $0x74] sm:$0xf]
    %v353 = vld [vmem:[#allocation5 + $0x78] sm:$0xf]
    %v354 = vld [vmem:[#allocation5 + $0x7c] sm:$0xf]
    %v355 = vld [vmem:[#allocation5 + $0x80] sm:$0xf]
    %v356 = vld [vmem:[#allocation5 + $0x84] sm:$0xf]
    %v357 = vld [vmem:[#allocation5 + $0x88] sm:$0xf]
    %v358 = vld [vmem:[#allocation5 + $0x8c] sm:$0xf]
    %v359 = vld [vmem:[#allocation5 + $0x90] sm:$0xf]
    %v360 = vld [vmem:[#allocation5 + $0x94] sm:$0xf]
    %v361 = vld [vmem:[#allocation5 + $0x98] sm:$0xf]
    %v362 = vld [vmem:[#allocation5 + $0x9c] sm:$0xf]
    %v363 = vld [vmem:[#allocation5 + $0xa0] sm:$0xf]
    %v364 = vld [vmem:[#allocation5 + $0xa4] sm:$0xf]
    %v365 = vld [vmem:[#allocation5 + $0xa8] sm:$0xf]
    %v366 = vld [vmem:[#allocation5 + $0xac] sm:$0xf]
    %v367 = vld [vmem:[#allocation5 + $0xb0] sm:$0xf]
    %v368 = vld [vmem:[#allocation5 + $0xb4] sm:$0xf]
    %v369 = vld [vmem:[#allocation5 + $0xb8] sm:$0xf]
    %v370 = vld [vmem:[#allocation5 + $0xbc] sm:$0xf]
    %371 = vst [vmem:[#allocation2 + $0x8] sm:$0xff] %v309
    %372 = vst [vmem:[#allocation2 + $0x10] sm:$0xff] %v312
    %373 = vst [vmem:[#allocation2 + $0x28] sm:$0xff] %v317
    %374 = vst [vmem:[#allocation2 + $0x30] sm:$0xff] %v320
    %v375 = vld [vmem:[#allocation2] sm:$0xff]
    %v376 = vld [vmem:[#allocation2 + $0x8] sm:$0xff]
    %v377 = vld [vmem:[#allocation2 + $0x10] sm:$0xff]
    %v378 = vld [vmem:[#allocation2 + $0x18] sm:$0xff]
    %v379 = vld [vmem:[#allocation2 + $0x20] sm:$0xff]
    %v380 = vld [vmem:[#allocation2 + $0x28] sm:$0xff]
    %v381 = vld [vmem:[#allocation2 + $0x30] sm:$0xff]
    %v382 = vld [vmem:[#allocation2 + $0x38] sm:$0xff]
    %vm389 = vcmask 1040384
    %v390 = vrot.slane %v375, 7
    %v391 = vrot.slane %v376, 7
    %v392 = vsel %vm389, %v390, %v391
    %v393 = vrot.slane %v377, 7
    %v394 = vsel %vm389, %v391, %v393
    %v395 = vrot.slane %v379, 7
    %v396 = vrot.slane %v380, 7
    %v397 = vsel %vm389, %v395, %v396
    %v398 = vrot.slane %v381, 7
    %v399 = vsel %vm389, %v396, %v398
    %vm406 = vcmask 1046528
    %v407 = vrot.slane %v376, 1
    %v408 = vrot.slane %v377, 1
    %v409 = vsel %vm406, %v407, %v408
    %v410 = vrot.slane %v378, 1
    %v411 = vsel %vm406, %v408, %v410
    %v412 = vrot.slane %v380, 1
    %v413 = vrot.slane %v381, 1
    %v414 = vsel %vm406, %v412, %v413
    %v415 = vrot.slane %v382, 1
    %v416 = vsel %vm406, %v413, %v415
    %v421 = vpack.c.bf16 %v394, %v392
    %v422 = vpack.c.bf16 %v377, %v376
    %v423 = vpack.c.bf16 %v411, %v409
    %v424 = vpack.c.bf16 %v399, %v397
    %v425 = vpack.c.bf16 %v381, %v380
    %v426 = vpack.c.bf16 %v416, %v414
    %v427 = vld [vmem:[%s3] sm:$0x1]
    %v429 = vlaneseq
    %v430 = vshrl.u32 %v429, 7
    %v431 = vsub.s32 0, %v430
    %v432 = vrot.slane %v427, %v431
    %v482 = vunpack.c.l.b16 %v323
    %v483 = vunpack.c.l.b16 %v324
    %v484 = vunpack.c.l.b16 %v325
    %v485 = vunpack.c.l.b16 %v326
    %v486 = vunpack.c.l.b16 %v327
    %v487 = vunpack.c.l.b16 %v328
    %v488 = vunpack.c.l.b16 %v329
    %v489 = vunpack.c.l.b16 %v330
    %v490 = vunpack.c.l.b16 %v331
    %v491 = vunpack.c.l.b16 %v332
    %v492 = vunpack.c.l.b16 %v333
    %v493 = vunpack.c.l.b16 %v334
    %v494 = vunpack.c.l.b16 %v335
    %v495 = vunpack.c.l.b16 %v336
    %v496 = vunpack.c.l.b16 %v337
    %v497 = vunpack.c.l.b16 %v338
    %v498 = vunpack.c.l.b16 %v339
    %v499 = vunpack.c.l.b16 %v340
    %v500 = vunpack.c.l.b16 %v341
    %v501 = vunpack.c.l.b16 %v342
    %v502 = vunpack.c.l.b16 %v343
    %v503 = vunpack.c.l.b16 %v344
    %v504 = vunpack.c.l.b16 %v345
    %v505 = vunpack.c.l.b16 %v346
    %v506 = vunpack.c.l.b16 %v347
    %v507 = vunpack.c.l.b16 %v348
    %v508 = vunpack.c.l.b16 %v349
    %v509 = vunpack.c.l.b16 %v350
    %v510 = vunpack.c.l.b16 %v351
    %v511 = vunpack.c.l.b16 %v352
    %v512 = vunpack.c.l.b16 %v353
    %v513 = vunpack.c.l.b16 %v354
    %v514 = vunpack.c.l.b16 %v355
    %v515 = vunpack.c.l.b16 %v356
    %v516 = vunpack.c.l.b16 %v357
    %v517 = vunpack.c.l.b16 %v358
    %v518 = vunpack.c.l.b16 %v359
    %v519 = vunpack.c.l.b16 %v360
    %v520 = vunpack.c.l.b16 %v361
    %v521 = vunpack.c.l.b16 %v362
    %v522 = vunpack.c.l.b16 %v363
    %v523 = vunpack.c.l.b16 %v364
    %v524 = vunpack.c.l.b16 %v365
    %v525 = vunpack.c.l.b16 %v366
    %v526 = vunpack.c.l.b16 %v367
    %v527 = vunpack.c.l.b16 %v368
    %v528 = vunpack.c.l.b16 %v369
    %v529 = vunpack.c.l.b16 %v370
    %v530 = vpack.c.b16 %v483, %v482
    %v531 = vpack.c.b16 %v485, %v484
    %v532 = vpack.c.b16 %v487, %v486
    %v533 = vpack.c.b16 %v489, %v488
    %v534 = vpack.c.b16 %v491, %v490
    %v535 = vpack.c.b16 %v493, %v492
    %v536 = vpack.c.b16 %v495, %v494
    %v537 = vpack.c.b16 %v497, %v496
    %v538 = vpack.c.b16 %v499, %v498
    %v539 = vpack.c.b16 %v501, %v500
    %v540 = vpack.c.b16 %v503, %v502
    %v541 = vpack.c.b16 %v505, %v504
    %v542 = vpack.c.b16 %v507, %v506
    %v543 = vpack.c.b16 %v509, %v508
    %v544 = vpack.c.b16 %v511, %v510
    %v545 = vpack.c.b16 %v513, %v512
    %v546 = vpack.c.b16 %v515, %v514
    %v547 = vpack.c.b16 %v517, %v516
    %v548 = vpack.c.b16 %v519, %v518
    %v549 = vpack.c.b16 %v521, %v520
    %v550 = vpack.c.b16 %v523, %v522
    %v551 = vpack.c.b16 %v525, %v524
    %v552 = vpack.c.b16 %v527, %v526
    %v553 = vpack.c.b16 %v529, %v528
    %578 = vmatprep.subr.bf16.mxu0 0
    %579 = vmatpush1.bf16.msra.mxu0 %v530
    %580 = vmatprep.subr.bf16.mxu0 0
    %581 = vmatpush1.bf16.msra.mxu0 %v531
    %582 = vmatprep.subr.bf16.mxu0 0
    %583 = vmatpush1.bf16.msra.mxu0 %v532
    %584 = vmatprep.subr.bf16.mxu0 0
    %585 = vmatpush1.bf16.msra.mxu0 %v533
    %586 = vmatprep.subr.bf16.mxu0 0
    %587 = vmatpush1.bf16.msra.mxu0 %v534
    %588 = vmatprep.subr.bf16.mxu0 0
    %589 = vmatpush1.bf16.msra.mxu0 %v535
    %590 = vmatprep.subr.bf16.mxu0 0
    %591 = vmatpush1.bf16.msra.mxu0 %v536
    %592 = vmatprep.subr.bf16.mxu0 0
    %593 = vmatpush1.bf16.msra.mxu0 %v537
    %594 = vmatprep.subr.bf16.mxu0 0
    %595 = vmatpush1.bf16.msra.mxu0 %v538
    %596 = vmatprep.subr.bf16.mxu0 0
    %597 = vmatpush1.bf16.msra.mxu0 %v539
    %598 = vmatprep.subr.bf16.mxu0 0
    %599 = vmatpush1.bf16.msra.mxu0 %v540
    %600 = vmatprep.subr.bf16.mxu0 0
    %601 = vmatpush1.bf16.msra.mxu0 %v541
    %602 = vmatprep.subr.bf16.mxu0 0
    %603 = vmatpush1.bf16.msra.mxu0 %v542
    %604 = vmatprep.subr.bf16.mxu0 0
    %605 = vmatpush1.bf16.msra.mxu0 %v543
    %606 = vmatprep.subr.bf16.mxu0 0
    %607 = vmatpush1.bf16.msra.mxu0 %v544
    %608 = vmatprep.subr.bf16.mxu0 0
    %609 = vmatpush1.bf16.msra.mxu0 %v545
    %610 = vmatprep.mubr.bf16.mxu0 %v422
    %611 = vmatmul.mubr.bf16.gmra.mrb[0].mxu0 %v421
    %v612 = vpop.f32.mrb[0].mxu0
    %v613 = vadd.f32 %v432, %v612
    %v614 = vpop.f32.mrb[0].mxu0
    %v615 = vpop.f32.mrb[0].mxu0
    %v616 = vadd.f32 %v432, %v615
    %v617 = vpop.f32.mrb[0].mxu0
    %618 = vmatprep.mubr.bf16.mxu0 %v425
    %619 = vmatmul.mubr.bf16.gmra.mrb[0].mxu0 %v424
    %v620 = vpop.f32.mrb[0].mxu0
    %v621 = vadd.f32 %v432, %v620
    %v622 = vpop.f32.mrb[0].mxu0
    %v623 = vpop.f32.mrb[0].mxu0
    %v624 = vadd.f32 %v432, %v623
    %v625 = vpop.f32.mrb[0].mxu0
    %626 = vdwg.mxu0
    %627 = vmatprep.subr.bf16.mxu0 0
    %628 = vmatpush1.bf16.msra.mxu0 %v546
    %629 = vmatprep.subr.bf16.mxu0 0
    %630 = vmatpush1.bf16.msra.mxu0 %v547
    %631 = vmatprep.subr.bf16.mxu0 0
    %632 = vmatpush1.bf16.msra.mxu0 %v548
    %633 = vmatprep.subr.bf16.mxu0 0
    %634 = vmatpush1.bf16.msra.mxu0 %v549
    %635 = vmatprep.subr.bf16.mxu0 0
    %636 = vmatpush1.bf16.msra.mxu0 %v550
    %637 = vmatprep.subr.bf16.mxu0 0
    %638 = vmatpush1.bf16.msra.mxu0 %v551
    %639 = vmatprep.subr.bf16.mxu0 0
    %640 = vmatpush1.bf16.msra.mxu0 %v552
    %641 = vmatprep.subr.bf16.mxu0 0
    %642 = vmatpush1.bf16.msra.mxu0 %v553
    %643 = vmatprep.subr.bf16.mxu0 0
    %644 = vmatpush1.bf16.msra.mxu0 0
    %645 = vmatprep.subr.bf16.mxu0 0
    %646 = vmatpush1.bf16.msra.mxu0 0
    %647 = vmatprep.subr.bf16.mxu0 0
    %648 = vmatpush1.bf16.msra.mxu0 0
    %649 = vmatprep.subr.bf16.mxu0 0
    %650 = vmatpush1.bf16.msra.mxu0 0
    %651 = vmatprep.subr.bf16.mxu0 0
    %652 = vmatpush1.bf16.msra.mxu0 0
    %653 = vmatprep.subr.bf16.mxu0 0
    %654 = vmatpush1.bf16.msra.mxu0 0
    %655 = vmatprep.subr.bf16.mxu0 0
    %656 = vmatpush1.bf16.msra.mxu0 0
    %657 = vmatprep.subr.bf16.mxu0 0
    %658 = vmatpush1.bf16.msra.mxu0 0
    %659 = vmatprep.mubr.bf16.mxu0 0
    %660 = vmatmul.mubr.bf16.gmra.mrb[0].mxu0 %v423
    %v661 = vpop.f32.mrb[0].mxu0
    %v662 = vadd.f32 %v613, %v661
    %v663 = vpop.f32.mrb[0].mxu0
    %v664 = vpop.f32.mrb[0].mxu0
    %v665 = vadd.f32 %v616, %v664
    %v666 = vpop.f32.mrb[0].mxu0
    %667 = vmatprep.mubr.bf16.mxu0 0
    %668 = vmatmul.mubr.bf16.gmra.mrb[0].mxu0 %v426
    %v669 = vpop.f32.mrb[0].mxu0
    %v670 = vadd.f32 %v621, %v669
    %v671 = vpop.f32.mrb[0].mxu0
    %v672 = vpop.f32.mrb[0].mxu0
    %v673 = vadd.f32 %v624, %v672
    %v674 = vpop.f32.mrb[0].mxu0
    %675 = vdwg.mxu0
    %v676 = vmul.f32 %v662, %v662
    %v677 = vmul.f32 %v665, %v665
    %v678 = vmul.f32 %v670, %v670
    %v679 = vmul.f32 %v673, %v673
    %v680 = vmul.f32 %v662, %v676
    %v681 = vmul.f32 %v665, %v677
    %v682 = vmul.f32 %v670, %v678
    %v683 = vmul.f32 %v673, %v679
    %v684 = vmul.f32 %v680, 0.044715
    %v685 = vmul.f32 %v681, 0.044715
    %v686 = vmul.f32 %v682, 0.044715
    %v687 = vmul.f32 %v683, 0.044715
    %v688 = vadd.f32 %v662, %v684
    %v689 = vadd.f32 %v665, %v685
    %v690 = vadd.f32 %v670, %v686
    %v691 = vadd.f32 %v673, %v687
    %v692 = vmul.f32 %v688, 0.7978846
    %v693 = vmul.f32 %v689, 0.7978846
    %v694 = vmul.f32 %v690, 0.7978846
    %v695 = vmul.f32 %v691, 0.7978846
    %v696 = vtanh.pop %v692
    %v697 = vtanh.pop %v693
    %v698 = vtanh.pop %v694
    %v699 = vtanh.pop %v695
    %v700 = vadd.f32 %v696, 1.0
    %v701 = vadd.f32 %v697, 1.0
    %v702 = vadd.f32 %v698, 1.0
    %v703 = vadd.f32 %v699, 1.0
    %v704 = vmul.f32 %v700, 0.5
    %v705 = vmul.f32 %v701, 0.5
    %v706 = vmul.f32 %v702, 0.5
    %v707 = vmul.f32 %v703, 0.5
    %v708 = vmul.f32 %v662, %v704
    %v709 = vmul.f32 %v665, %v705
    %v710 = vmul.f32 %v670, %v706
    %v711 = vmul.f32 %v673, %v707
    %v712 = vld [vmem:[#allocation7] sm:$0xf]
    %v713 = vld [vmem:[#allocation7 + $0x4] sm:$0xf]
    %v714 = vld [vmem:[#allocation7 + $0x8] sm:$0xf]
    %v715 = vld [vmem:[#allocation7 + $0xc] sm:$0xf]
    %v716 = vld [vmem:[#allocation7 + $0x10] sm:$0xf]
    %v717 = vld [vmem:[#allocation7 + $0x14] sm:$0xf]
    %v718 = vld [vmem:[#allocation7 + $0x18] sm:$0xf]
    %v719 = vld [vmem:[#allocation7 + $0x1c] sm:$0xf]
    %v720 = vld [vmem:[#allocation7 + $0x20] sm:$0xf]
    %v721 = vld [vmem:[#allocation7 + $0x24] sm:$0xf]
    %v722 = vld [vmem:[#allocation7 + $0x28] sm:$0xf]
    %v723 = vld [vmem:[#allocation7 + $0x2c] sm:$0xf]
    %v724 = vld [vmem:[#allocation7 + $0x30] sm:$0xf]
    %v725 = vld [vmem:[#allocation7 + $0x34] sm:$0xf]
    %v726 = vld [vmem:[#allocation7 + $0x38] sm:$0xf]
    %v727 = vld [vmem:[#allocation7 + $0x3c] sm:$0xf]
    %v728 = vld [vmem:[#allocation7 + $0x40] sm:$0xf]
    %v729 = vld [vmem:[#allocation7 + $0x44] sm:$0xf]
    %v730 = vld [vmem:[#allocation7 + $0x48] sm:$0xf]
    %v731 = vld [vmem:[#allocation7 + $0x4c] sm:$0xf]
    %v732 = vld [vmem:[#allocation7 + $0x50] sm:$0xf]
    %v733 = vld [vmem:[#allocation7 + $0x54] sm:$0xf]
    %v734 = vld [vmem:[#allocation7 + $0x58] sm:$0xf]
    %v735 = vld [vmem:[#allocation7 + $0x5c] sm:$0xf]
    %v736 = vld [vmem:[#allocation7 + $0x60] sm:$0xf]
    %v737 = vld [vmem:[#allocation7 + $0x64] sm:$0xf]
    %v738 = vld [vmem:[#allocation7 + $0x68] sm:$0xf]
    %v739 = vld [vmem:[#allocation7 + $0x6c] sm:$0xf]
    %v740 = vld [vmem:[#allocation7 + $0x70] sm:$0xf]
    %v741 = vld [vmem:[#allocation7 + $0x74] sm:$0xf]
    %v742 = vld [vmem:[#allocation7 + $0x78] sm:$0xf]
    %v743 = vld [vmem:[#allocation7 + $0x7c] sm:$0xf]
    %v744 = vld [vmem:[#allocation7 + $0x80] sm:$0xf]
    %v745 = vld [vmem:[#allocation7 + $0x84] sm:$0xf]
    %v746 = vld [vmem:[#allocation7 + $0x88] sm:$0xf]
    %v747 = vld [vmem:[#allocation7 + $0x8c] sm:$0xf]
    %v748 = vld [vmem:[#allocation7 + $0x90] sm:$0xf]
    %v749 = vld [vmem:[#allocation7 + $0x94] sm:$0xf]
    %v750 = vld [vmem:[#allocation7 + $0x98] sm:$0xf]
    %v751 = vld [vmem:[#allocation7 + $0x9c] sm:$0xf]
    %v752 = vld [vmem:[#allocation7 + $0xa0] sm:$0xf]
    %v753 = vld [vmem:[#allocation7 + $0xa4] sm:$0xf]
    %v754 = vld [vmem:[#allocation7 + $0xa8] sm:$0xf]
    %v755 = vld [vmem:[#allocation7 + $0xac] sm:$0xf]
    %v756 = vld [vmem:[#allocation7 + $0xb0] sm:$0xf]
    %v757 = vld [vmem:[#allocation7 + $0xb4] sm:$0xf]
    %v758 = vld [vmem:[#allocation7 + $0xb8] sm:$0xf]
    %v759 = vld [vmem:[#allocation7 + $0xbc] sm:$0xf]
    %760 = vst [vmem:[#allocation2 + $0x8] sm:$0xff] %v708
    %761 = vst [vmem:[#allocation2 + $0x10] sm:$0xff] %v709
    %762 = vst [vmem:[#allocation2 + $0x28] sm:$0xff] %v710
    %763 = vst [vmem:[#allocation2 + $0x30] sm:$0xff] %v711
    %v764 = vld [vmem:[#allocation2] sm:$0xff]
    %v765 = vld [vmem:[#allocation2 + $0x8] sm:$0xff]
    %v766 = vld [vmem:[#allocation2 + $0x10] sm:$0xff]
    %v767 = vld [vmem:[#allocation2 + $0x18] sm:$0xff]
    %v768 = vld [vmem:[#allocation2 + $0x20] sm:$0xff]
    %v769 = vld [vmem:[#allocation2 + $0x28] sm:$0xff]
    %v770 = vld [vmem:[#allocation2 + $0x30] sm:$0xff]
    %v771 = vld [vmem:[#allocation2 + $0x38] sm:$0xff]
    %v778 = vrot.slane %v764, 7
    %v779 = vrot.slane %v765, 7
    %v780 = vsel %vm389, %v778, %v779
    %v781 = vrot.slane %v766, 7
    %v782 = vsel %vm389, %v779, %v781
    %v783 = vrot.slane %v768, 7
    %v784 = vrot.slane %v769, 7
    %v785 = vsel %vm389, %v783, %v784
    %v786 = vrot.slane %v770, 7
    %v787 = vsel %vm389, %v784, %v786
    %v794 = vrot.slane %v765, 1
    %v795 = vrot.slane %v766, 1
    %v796 = vsel %vm406, %v794, %v795
    %v797 = vrot.slane %v767, 1
    %v798 = vsel %vm406, %v795, %v797
    %v799 = vrot.slane %v769, 1
    %v800 = vrot.slane %v770, 1
    %v801 = vsel %vm406, %v799, %v800
    %v802 = vrot.slane %v771, 1
    %v803 = vsel %vm406, %v800, %v802
    %v808 = vpack.c.bf16 %v782, %v780
    %v809 = vpack.c.bf16 %v766, %v765
    %v810 = vpack.c.bf16 %v798, %v796
    %v811 = vpack.c.bf16 %v787, %v785
    %v812 = vpack.c.bf16 %v770, %v769
    %v813 = vpack.c.bf16 %v803, %v801
    %v814 = vld [vmem:[%s5] sm:$0x1]
    %v816 = vlaneseq
    %v817 = vshrl.u32 %v816, 7
    %v818 = vsub.s32 0, %v817
    %v819 = vrot.slane %v814, %v818
    %v869 = vunpack.c.l.b16 %v712
    %v870 = vunpack.c.l.b16 %v713
    %v871 = vunpack.c.l.b16 %v714
    %v872 = vunpack.c.l.b16 %v715
    %v873 = vunpack.c.l.b16 %v716
    %v874 = vunpack.c.l.b16 %v717
    %v875 = vunpack.c.l.b16 %v718
    %v876 = vunpack.c.l.b16 %v719
    %v877 = vunpack.c.l.b16 %v720
    %v878 = vunpack.c.l.b16 %v721
    %v879 = vunpack.c.l.b16 %v722
    %v880 = vunpack.c.l.b16 %v723
    %v881 = vunpack.c.l.b16 %v724
    %v882 = vunpack.c.l.b16 %v725
    %v883 = vunpack.c.l.b16 %v726
    %v884 = vunpack.c.l.b16 %v727
    %v885 = vunpack.c.l.b16 %v728
    %v886 = vunpack.c.l.b16 %v729
    %v887 = vunpack.c.l.b16 %v730
    %v888 = vunpack.c.l.b16 %v731
    %v889 = vunpack.c.l.b16 %v732
    %v890 = vunpack.c.l.b16 %v733
    %v891 = vunpack.c.l.b16 %v734
    %v892 = vunpack.c.l.b16 %v735
    %v893 = vunpack.c.l.b16 %v736
    %v894 = vunpack.c.l.b16 %v737
    %v895 = vunpack.c.l.b16 %v738
    %v896 = vunpack.c.l.b16 %v739
    %v897 = vunpack.c.l.b16 %v740
    %v898 = vunpack.c.l.b16 %v741
    %v899 = vunpack.c.l.b16 %v742
    %v900 = vunpack.c.l.b16 %v743
    %v901 = vunpack.c.l.b16 %v744
    %v902 = vunpack.c.l.b16 %v745
    %v903 = vunpack.c.l.b16 %v746
    %v904 = vunpack.c.l.b16 %v747
    %v905 = vunpack.c.l.b16 %v748
    %v906 = vunpack.c.l.b16 %v749
    %v907 = vunpack.c.l.b16 %v750
    %v908 = vunpack.c.l.b16 %v751
    %v909 = vunpack.c.l.b16 %v752
    %v910 = vunpack.c.l.b16 %v753
    %v911 = vunpack.c.l.b16 %v754
    %v912 = vunpack.c.l.b16 %v755
    %v913 = vunpack.c.l.b16 %v756
    %v914 = vunpack.c.l.b16 %v757
    %v915 = vunpack.c.l.b16 %v758
    %v916 = vunpack.c.l.b16 %v759
    %v917 = vpack.c.b16 %v870, %v869
    %v918 = vpack.c.b16 %v872, %v871
    %v919 = vpack.c.b16 %v874, %v873
    %v920 = vpack.c.b16 %v876, %v875
    %v921 = vpack.c.b16 %v878, %v877
    %v922 = vpack.c.b16 %v880, %v879
    %v923 = vpack.c.b16 %v882, %v881
    %v924 = vpack.c.b16 %v884, %v883
    %v925 = vpack.c.b16 %v886, %v885
    %v926 = vpack.c.b16 %v888, %v887
    %v927 = vpack.c.b16 %v890, %v889
    %v928 = vpack.c.b16 %v892, %v891
    %v929 = vpack.c.b16 %v894, %v893
    %v930 = vpack.c.b16 %v896, %v895
    %v931 = vpack.c.b16 %v898, %v897
    %v932 = vpack.c.b16 %v900, %v899
    %v933 = vpack.c.b16 %v902, %v901
    %v934 = vpack.c.b16 %v904, %v903
    %v935 = vpack.c.b16 %v906, %v905
    %v936 = vpack.c.b16 %v908, %v907
    %v937 = vpack.c.b16 %v910, %v909
    %v938 = vpack.c.b16 %v912, %v911
    %v939 = vpack.c.b16 %v914, %v913
    %v940 = vpack.c.b16 %v916, %v915
    %965 = vmatprep.subr.bf16.mxu0 0
    %966 = vmatpush1.bf16.msra.mxu0 %v917
    %967 = vmatprep.subr.bf16.mxu0 0
    %968 = vmatpush1.bf16.msra.mxu0 %v918
    %969 = vmatprep.subr.bf16.mxu0 0
    %970 = vmatpush1.bf16.msra.mxu0 %v919
    %971 = vmatprep.subr.bf16.mxu0 0
    %972 = vmatpush1.bf16.msra.mxu0 %v920
    %973 = vmatprep.subr.bf16.mxu0 0
    %974 = vmatpush1.bf16.msra.mxu0 %v921
    %975 = vmatprep.subr.bf16.mxu0 0
    %976 = vmatpush1.bf16.msra.mxu0 %v922
    %977 = vmatprep.subr.bf16.mxu0 0
    %978 = vmatpush1.bf16.msra.mxu0 %v923
    %979 = vmatprep.subr.bf16.mxu0 0
    %980 = vmatpush1.bf16.msra.mxu0 %v924
    %981 = vmatprep.subr.bf16.mxu0 0
    %982 = vmatpush1.bf16.msra.mxu0 %v925
    %983 = vmatprep.subr.bf16.mxu0 0
    %984 = vmatpush1.bf16.msra.mxu0 %v926
    %985 = vmatprep.subr.bf16.mxu0 0
    %986 = vmatpush1.bf16.msra.mxu0 %v927
    %987 = vmatprep.subr.bf16.mxu0 0
    %988 = vmatpush1.bf16.msra.mxu0 %v928
    %989 = vmatprep.subr.bf16.mxu0 0
    %990 = vmatpush1.bf16.msra.mxu0 %v929
    %991 = vmatprep.subr.bf16.mxu0 0
    %992 = vmatpush1.bf16.msra.mxu0 %v930
    %993 = vmatprep.subr.bf16.mxu0 0
    %994 = vmatpush1.bf16.msra.mxu0 %v931
    %995 = vmatprep.subr.bf16.mxu0 0
    %996 = vmatpush1.bf16.msra.mxu0 %v932
    %997 = vmatprep.mubr.bf16.mxu0 %v809
    %998 = vmatmul.mubr.bf16.gmra.mrb[0].mxu0 %v808
    %v999 = vpop.f32.mrb[0].mxu0
    %v1000 = vadd.f32 %v819, %v999
    %v1001 = vpop.f32.mrb[0].mxu0
    %v1002 = vpop.f32.mrb[0].mxu0
    %v1003 = vadd.f32 %v819, %v1002
    %v1004 = vpop.f32.mrb[0].mxu0
    %1005 = vmatprep.mubr.bf16.mxu0 %v812
    %1006 = vmatmul.mubr.bf16.gmra.mrb[0].mxu0 %v811
    %v1007 = vpop.f32.mrb[0].mxu0
    %v1008 = vadd.f32 %v819, %v1007
    %v1009 = vpop.f32.mrb[0].mxu0
    %v1010 = vpop.f32.mrb[0].mxu0
    %v1011 = vadd.f32 %v819, %v1010
    %v1012 = vpop.f32.mrb[0].mxu0
    %1013 = vdwg.mxu0
    %1014 = vmatprep.subr.bf16.mxu0 0
    %1015 = vmatpush1.bf16.msra.mxu0 %v933
    %1016 = vmatprep.subr.bf16.mxu0 0
    %1017 = vmatpush1.bf16.msra.mxu0 %v934
    %1018 = vmatprep.subr.bf16.mxu0 0
    %1019 = vmatpush1.bf16.msra.mxu0 %v935
    %1020 = vmatprep.subr.bf16.mxu0 0
    %1021 = vmatpush1.bf16.msra.mxu0 %v936
    %1022 = vmatprep.subr.bf16.mxu0 0
    %1023 = vmatpush1.bf16.msra.mxu0 %v937
    %1024 = vmatprep.subr.bf16.mxu0 0
    %1025 = vmatpush1.bf16.msra.mxu0 %v938
    %1026 = vmatprep.subr.bf16.mxu0 0
    %1027 = vmatpush1.bf16.msra.mxu0 %v939
    %1028 = vmatprep.subr.bf16.mxu0 0
    %1029 = vmatpush1.bf16.msra.mxu0 %v940
    %1030 = vmatprep.subr.bf16.mxu0 0
    %1031 = vmatpush1.bf16.msra.mxu0 0
    %1032 = vmatprep.subr.bf16.mxu0 0
    %1033 = vmatpush1.bf16.msra.mxu0 0
    %1034 = vmatprep.subr.bf16.mxu0 0
    %1035 = vmatpush1.bf16.msra.mxu0 0
    %1036 = vmatprep.subr.bf16.mxu0 0
    %1037 = vmatpush1.bf16.msra.mxu0 0
    %1038 = vmatprep.subr.bf16.mxu0 0
    %1039 = vmatpush1.bf16.msra.mxu0 0
    %1040 = vmatprep.subr.bf16.mxu0 0
    %1041 = vmatpush1.bf16.msra.mxu0 0
    %1042 = vmatprep.subr.bf16.mxu0 0
    %1043 = vmatpush1.bf16.msra.mxu0 0
    %1044 = vmatprep.subr.bf16.mxu0 0
    %1045 = vmatpush1.bf16.msra.mxu0 0
    %1046 = vmatprep.mubr.bf16.mxu0 0
    %1047 = vmatmul.mubr.bf16.gmra.mrb[0].mxu0 %v810
    %v1048 = vpop.f32.mrb[0].mxu0
    %v1049 = vadd.f32 %v1000, %v1048
    %v1050 = vpop.f32.mrb[0].mxu0
    %v1051 = vpop.f32.mrb[0].mxu0
    %v1052 = vadd.f32 %v1003, %v1051
    %v1053 = vpop.f32.mrb[0].mxu0
    %1054 = vmatprep.mubr.bf16.mxu0 0
    %1055 = vmatmul.mubr.bf16.gmra.mrb[0].mxu0 %v813
    %v1056 = vpop.f32.mrb[0].mxu0
    %v1057 = vadd.f32 %v1008, %v1056
    %v1058 = vpop.f32.mrb[0].mxu0
    %v1059 = vpop.f32.mrb[0].mxu0
    %v1060 = vadd.f32 %v1011, %v1059
    %v1061 = vpop.f32.mrb[0].mxu0
    %1062 = vdwg.mxu0
    %vm1063 = vcmp.lt.s32.totalorder %v151, 64
    %v1064 = vsel %vm1063, 1, 0
    %v1065 = vcvt.s32.f32 %v1064
    %v1066 = vld [vmem:[%s7] sm:$0x1f]
    %1067 = vst [vmem:[#allocation2 + $0x8] sm:$0xff] %v1049
    %1068 = vst [vmem:[#allocation2 + $0x10] sm:$0xff] %v1052
    %1069 = vst [vmem:[#allocation2 + $0x28] sm:$0xff] %v1057
    %1070 = vst [vmem:[#allocation2 + $0x30] sm:$0xff] %v1060
    %v1071 = vld [vmem:[#allocation2] sm:$0xff]
    %v1072 = vld [vmem:[#allocation2 + $0x8] sm:$0xff]
    %v1073 = vld [vmem:[#allocation2 + $0x10] sm:$0xff]
    %v1074 = vld [vmem:[#allocation2 + $0x18] sm:$0xff]
    %v1075 = vld [vmem:[#allocation2 + $0x20] sm:$0xff]
    %v1076 = vld [vmem:[#allocation2 + $0x28] sm:$0xff]
    %v1077 = vld [vmem:[#allocation2 + $0x30] sm:$0xff]
    %v1078 = vld [vmem:[#allocation2 + $0x38] sm:$0xff]
    %vm1085 = vcmask 1045504
    %v1086 = vrot.slane %v1071, 2
    %v1087 = vrot.slane %v1072, 2
    %v1088 = vsel %vm1085, %v1086, %v1087
    %v1089 = vrot.slane %v1073, 2
    %v1090 = vsel %vm1085, %v1087, %v1089
    %v1091 = vrot.slane %v1075, 2
    %v1092 = vrot.slane %v1076, 2
    %v1093 = vsel %vm1085, %v1091, %v1092
    %v1094 = vrot.slane %v1077, 2
    %v1095 = vsel %vm1085, %v1092, %v1094
    %vm1100 = vcmask 1043456
    %v1101 = vrot.slane %v1071, 4
    %v1102 = vrot.slane %v1072, 4
    %v1103 = vsel %vm1100, %v1101, %v1102
    %v1104 = vrot.slane %v1073, 4
    %v1105 = vsel %vm1100, %v1102, %v1104
    %v1106 = vrot.slane %v1075, 4
    %v1107 = vrot.slane %v1076, 4
    %v1108 = vsel %vm1100, %v1106, %v1107
    %v1109 = vrot.slane %v1077, 4
    %v1110 = vsel %vm1100, %v1107, %v1109
    %vm1115 = vcmask 1041408
    %v1116 = vrot.slane %v1071, 6
    %v1117 = vrot.slane %v1072, 6
    %v1118 = vsel %vm1115, %v1116, %v1117
    %v1119 = vrot.slane %v1073, 6
    %v1120 = vsel %vm1115, %v1117, %v1119
    %v1121 = vrot.slane %v1075, 6
    %v1122 = vrot.slane %v1076, 6
    %v1123 = vsel %vm1115, %v1121, %v1122
    %v1124 = vrot.slane %v1077, 6
    %v1125 = vsel %vm1115, %v1122, %v1124
    %v1132 = vrot.slane %v1074, 2
    %v1133 = vsel %vm1085, %v1089, %v1132
    %v1134 = vrot.slane %v1078, 2
    %v1135 = vsel %vm1085, %v1094, %v1134
    %v1138 = vrot.slane %v1074, 4
    %v1139 = vsel %vm1100, %v1104, %v1138
    %v1140 = vrot.slane %v1078, 4
    %v1141 = vsel %vm1100, %v1109, %v1140
    %v1144 = vrot.slane %v1074, 6
    %v1145 = vsel %vm1115, %v1119, %v1144
    %v1146 = vrot.slane %v1078, 6
    %v1147 = vsel %vm1115, %v1124, %v1146
    %v1150 = vld [vmem:[%s6] sm:$0x7f]
    %v1151 = vlaneseq
    %v1152 = vshrl.u32 %v1151, 7
    %v1153 = vsub.s32 0, %v1152
    %v1154 = vrot.slane %v1150, %v1153
    %v1155 = vmul.f32 %v1088, %v1154
    %v1156 = vmul.f32 %v1090, %v1154
    %v1157 = vmul.f32 %v1093, %v1154
    %v1158 = vmul.f32 %v1095, %v1154
    %v1159 = vlaneseq
    %v1160 = vshrl.u32 %v1159, 7
    %v1161 = vsub.s32 0, %v1160
    %v1162 = vrot.slane %v1066, %v1161
    %v1163 = vadd.f32 %v1155, %v1162
    %v1164 = vadd.f32 %v1156, %v1162
    %v1165 = vadd.f32 %v1157, %v1162
    %v1166 = vadd.f32 %v1158, %v1162
    %v1167 = vlaneseq
    %v1168 = vshrl.u32 %v1167, 7
    %v1169 = vsub.s32 1, %v1168
    %v1170 = vrot.slane %v1150, %v1169
    %v1171 = vmul.f32 %v1103, %v1170
    %v1172 = vmul.f32 %v1105, %v1170
    %v1173 = vmul.f32 %v1108, %v1170
    %v1174 = vmul.f32 %v1110, %v1170
    %v1175 = vadd.f32 %v1163, %v1171
    %v1176 = vadd.f32 %v1164, %v1172
    %v1177 = vadd.f32 %v1165, %v1173
    %v1178 = vadd.f32 %v1166, %v1174
    %v1179 = vlaneseq
    %v1180 = vshrl.u32 %v1179, 7
    %v1181 = vsub.s32 2, %v1180
    %v1182 = vrot.slane %v1150, %v1181
    %v1183 = vmul.f32 %v1118, %v1182
    %v1184 = vmul.f32 %v1120, %v1182
    %v1185 = vmul.f32 %v1123, %v1182
    %v1186 = vmul.f32 %v1125, %v1182
    %v1187 = vadd.f32 %v1175, %v1183
    %v1188 = vadd.f32 %v1176, %v1184
    %v1189 = vadd.f32 %v1177, %v1185
    %v1190 = vadd.f32 %v1178, %v1186
    %v1191 = vlaneseq
    %v1192 = vshrl.u32 %v1191, 7
    %v1193 = vsub.s32 3, %v1192
    %v1194 = vrot.slane %v1150, %v1193
    %v1195 = vmul.f32 %v1072, %v1194
    %v1196 = vmul.f32 %v1073, %v1194
    %v1197 = vmul.f32 %v1076, %v1194
    %v1198 = vmul.f32 %v1077, %v1194
    %v1199 = vadd.f32 %v1187, %v1195
    %v1200 = vadd.f32 %v1188, %v1196
    %v1201 = vadd.f32 %v1189, %v1197
    %v1202 = vadd.f32 %v1190, %v1198
    %v1203 = vlaneseq
    %v1204 = vshrl.u32 %v1203, 7
    %v1205 = vsub.s32 4, %v1204
    %v1206 = vrot.slane %v1150, %v1205
    %v1207 = vmul.f32 %v1090, %v1206
    %v1208 = vmul.f32 %v1133, %v1206
    %v1209 = vmul.f32 %v1095, %v1206
    %v1210 = vmul.f32 %v1135, %v1206
    %v1211 = vadd.f32 %v1199, %v1207
    %v1212 = vadd.f32 %v1200, %v1208
    %v1213 = vadd.f32 %v1201, %v1209
    %v1214 = vadd.f32 %v1202, %v1210
    %v1215 = vlaneseq
    %v1216 = vshrl.u32 %v1215, 7
    %v1217 = vsub.s32 5, %v1216
    %v1218 = vrot.slane %v1150, %v1217
    %v1219 = vmul.f32 %v1105, %v1218
    %v1220 = vmul.f32 %v1139, %v1218
    %v1221 = vmul.f32 %v1110, %v1218
    %v1222 = vmul.f32 %v1141, %v1218
    %v1223 = vadd.f32 %v1211, %v1219
    %v1224 = vadd.f32 %v1212, %v1220
    %v1225 = vadd.f32 %v1213, %v1221
    %v1226 = vadd.f32 %v1214, %v1222
    %v1227 = vlaneseq
    %v1228 = vshrl.u32 %v1227, 7
    %v1229 = vsub.s32 6, %v1228
    %v1230 = vrot.slane %v1150, %v1229
    %v1231 = vmul.f32 %v1120, %v1230
    %v1232 = vmul.f32 %v1145, %v1230
    %v1233 = vmul.f32 %v1125, %v1230
    %v1234 = vmul.f32 %v1147, %v1230
    %v1235 = vadd.f32 %v1223, %v1231
    %v1236 = vadd.f32 %v1224, %v1232
    %v1237 = vadd.f32 %v1225, %v1233
    %v1238 = vadd.f32 %v1226, %v1234
    %1239 = vadd.xlane.f32.xlu0 %v1235
    %v1240 = vpop.xlane.xlu0 %1239
    %1241 = vadd.xlane.f32.xlu0 %v1236
    %v1242 = vpop.xlane.xlu0 %1241
    %1243 = vadd.xlane.f32.xlu0 %v1237
    %v1244 = vpop.xlane.xlu0 %1243
    %1245 = vadd.xlane.f32.xlu0 %v1238
    %v1246 = vpop.xlane.xlu0 %1245
    %v1247 = vrcp.pop 64.0
    %v1248 = vmul.f32 %v1240, %v1247
    %v1249 = vmul.f32 %v1242, %v1247
    %v1250 = vmul.f32 %v1244, %v1247
    %v1251 = vmul.f32 %v1246, %v1247
    %v1252 = vsub.f32 %v1235, %v1248
    %v1253 = vsub.f32 %v1236, %v1249
    %v1254 = vsub.f32 %v1237, %v1250
    %v1255 = vsub.f32 %v1238, %v1251
    %v1256 = vmul.f32 %v1252, %v1065
    %v1257 = vmul.f32 %v1253, %v1065
    %v1258 = vmul.f32 %v1254, %v1065
    %v1259 = vmul.f32 %v1255, %v1065
    %v1260 = vmul.f32 %v1256, %v1256
    %v1261 = vmul.f32 %v1257, %v1257
    %v1262 = vmul.f32 %v1258, %v1258
    %v1263 = vmul.f32 %v1259, %v1259
    %1264 = vadd.xlane.f32.xlu0 %v1260
    %v1265 = vpop.xlane.xlu0 %1264
    %1266 = vadd.xlane.f32.xlu0 %v1261
    %v1267 = vpop.xlane.xlu0 %1266
    %1268 = vadd.xlane.f32.xlu0 %v1262
    %v1269 = vpop.xlane.xlu0 %1268
    %1270 = vadd.xlane.f32.xlu0 %v1263
    %v1271 = vpop.xlane.xlu0 %1270
    %v1272 = vmul.f32 %v1265, %v1247
    %v1273 = vmul.f32 %v1267, %v1247
    %v1274 = vmul.f32 %v1269, %v1247
    %v1275 = vmul.f32 %v1271, %v1247
    %v1276 = vadd.f32 %v1272, 1e-06
    %v1277 = vadd.f32 %v1273, 1e-06
    %v1278 = vadd.f32 %v1274, 1e-06
    %v1279 = vadd.f32 %v1275, 1e-06
    %v1280 = vrsqrt.pop %v1276
    %v1281 = vrsqrt.pop %v1277
    %v1282 = vrsqrt.pop %v1278
    %v1283 = vrsqrt.pop %v1279
    %v1284 = vmul.f32 %v1252, %v1280
    %v1285 = vmul.f32 %v1253, %v1281
    %v1286 = vmul.f32 %v1254, %v1282
    %v1287 = vmul.f32 %v1255, %v1283
    %v1288 = vlaneseq
    %v1289 = vshrl.u32 %v1288, 7
    %v1290 = vsub.s32 1, %v1289
    %v1291 = vrot.slane %v1066, %v1290
    %v1292 = vmul.f32 %v1284, %v1291
    %v1293 = vmul.f32 %v1285, %v1291
    %v1294 = vmul.f32 %v1286, %v1291
    %v1295 = vmul.f32 %v1287, %v1291
    %v1296 = vlaneseq
    %v1297 = vshrl.u32 %v1296, 7
    %v1298 = vsub.s32 2, %v1297
    %v1299 = vrot.slane %v1066, %v1298
    %v1300 = vadd.f32 %v1292, %v1299
    %v1301 = vadd.f32 %v1293, %v1299
    %v1302 = vadd.f32 %v1294, %v1299
    %v1303 = vadd.f32 %v1295, %v1299
    %v1304 = vpack.c.bf16 %v1301, %v1300
    %v1305 = vpack.c.bf16 %v1303, %v1302
    %v1306 = vld [vmem:[%s8] sm:$0xff]
    %v1307 = vld [vmem:[%s8 + $0x8] sm:$0xff]
    %v1308 = vld [vmem:[%s8 + $0x10] sm:$0xff]
    %v1309 = vld [vmem:[%s8 + $0x18] sm:$0xff]
    %v1310 = vld [vmem:[%s8 + $0x20] sm:$0xff]
    %v1311 = vld [vmem:[%s8 + $0x28] sm:$0xff]
    %v1312 = vld [vmem:[%s8 + $0x30] sm:$0xff]
    %v1313 = vld [vmem:[%s8 + $0x38] sm:$0xff]
    %v1314 = vld [vmem:[%s8 + $0x40] sm:$0xff]
    %v1315 = vld [vmem:[%s8 + $0x48] sm:$0xff]
    %v1316 = vld [vmem:[%s8 + $0x50] sm:$0xff]
    %v1317 = vld [vmem:[%s8 + $0x58] sm:$0xff]
    %v1318 = vld [vmem:[%s8 + $0x60] sm:$0xff]
    %v1319 = vld [vmem:[%s8 + $0x68] sm:$0xff]
    %v1320 = vld [vmem:[%s8 + $0x70] sm:$0xff]
    %v1321 = vld [vmem:[%s8 + $0x78] sm:$0xff]
    %v1322 = vld [vmem:[#allocation8] sm:$0x3]
    %v1324 = vlaneseq
    %v1325 = vshrl.u32 %v1324, 7
    %v1326 = vsub.s32 0, %v1325
    %v1327 = vrot.slane %v1322, %v1326
    %v1328 = vlaneseq
    %v1329 = vshrl.u32 %v1328, 7
    %v1330 = vsub.s32 1, %v1329
    %v1331 = vrot.slane %v1322, %v1330
    %v1350 = vunpack.c.l.b16 %v1306
    %v1351 = vunpack.c.h.b16 %v1306
    %v1352 = vunpack.c.l.b16 %v1307
    %v1353 = vunpack.c.h.b16 %v1307
    %v1354 = vunpack.c.l.b16 %v1308
    %v1355 = vunpack.c.h.b16 %v1308
    %v1356 = vunpack.c.l.b16 %v1309
    %v1357 = vunpack.c.h.b16 %v1309
    %v1358 = vunpack.c.l.b16 %v1310
    %v1359 = vunpack.c.h.b16 %v1310
    %v1360 = vunpack.c.l.b16 %v1311
    %v1361 = vunpack.c.h.b16 %v1311
    %v1362 = vunpack.c.l.b16 %v1312
    %v1363 = vunpack.c.h.b16 %v1312
    %v1364 = vunpack.c.l.b16 %v1313
    %v1365 = vunpack.c.h.b16 %v1313
    %v1366 = vunpack.c.l.b16 %v1314
    %v1367 = vunpack.c.h.b16 %v1314
    %v1368 = vunpack.c.l.b16 %v1315
    %v1369 = vunpack.c.h.b16 %v1315
    %v1370 = vunpack.c.l.b16 %v1316
    %v1371 = vunpack.c.h.b16 %v1316
    %v1372 = vunpack.c.l.b16 %v1317
    %v1373 = vunpack.c.h.b16 %v1317
    %v1374 = vunpack.c.l.b16 %v1318
    %v1375 = vunpack.c.h.b16 %v1318
    %v1376 = vunpack.c.l.b16 %v1319
    %v1377 = vunpack.c.h.b16 %v1319
    %v1378 = vunpack.c.l.b16 %v1320
    %v1379 = vunpack.c.h.b16 %v1320
    %v1380 = vunpack.c.l.b16 %v1321
    %v1381 = vunpack.c.h.b16 %v1321
    %v1382 = vpack.c.b16 %v1352, %v1350
    %v1383 = vpack.c.b16 %v1353, %v1351
    %v1384 = vpack.c.b16 %v1356, %v1354
    %v1385 = vpack.c.b16 %v1357, %v1355
    %v1386 = vpack.c.b16 %v1360, %v1358
    %v1387 = vpack.c.b16 %v1361, %v1359
    %v1388 = vpack.c.b16 %v1364, %v1362
    %v1389 = vpack.c.b16 %v1365, %v1363
    %v1390 = vpack.c.b16 %v1368, %v1366
    %v1391 = vpack.c.b16 %v1369, %v1367
    %v1392 = vpack.c.b16 %v1372, %v1370
    %v1393 = vpack.c.b16 %v1373, %v1371
    %v1394 = vpack.c.b16 %v1376, %v1374
    %v1395 = vpack.c.b16 %v1377, %v1375
    %v1396 = vpack.c.b16 %v1380, %v1378
    %v1397 = vpack.c.b16 %v1381, %v1379
    %1414 = vmatprep.subr.bf16.mxu0 %v1383
    %1415 = vmatpush1.bf16.msra.mxu0 %v1382
    %1416 = vmatprep.subr.bf16.mxu0 %v1385
    %1417 = vmatpush1.bf16.msra.mxu0 %v1384
    %1418 = vmatprep.subr.bf16.mxu0 %v1387
    %1419 = vmatpush1.bf16.msra.mxu0 %v1386
    %1420 = vmatprep.subr.bf16.mxu0 %v1389
    %1421 = vmatpush1.bf16.msra.mxu0 %v1388
    %1422 = vmatprep.subr.bf16.mxu0 %v1391
    %1423 = vmatpush1.bf16.msra.mxu0 %v1390
    %1424 = vmatprep.subr.bf16.mxu0 %v1393
    %1425 = vmatpush1.bf16.msra.mxu0 %v1392
    %1426 = vmatprep.subr.bf16.mxu0 %v1395
    %1427 = vmatpush1.bf16.msra.mxu0 %v1394
    %1428 = vmatprep.subr.bf16.mxu0 %v1397
    %1429 = vmatpush1.bf16.msra.mxu0 %v1396
    %1430 = vmatprep.subr.bf16.mxu0 0
    %1431 = vmatpush1.bf16.msra.mxu0 0
    %1432 = vmatprep.subr.bf16.mxu0 0
    %1433 = vmatpush1.bf16.msra.mxu0 0
    %1434 = vmatprep.subr.bf16.mxu0 0
    %1435 = vmatpush1.bf16.msra.mxu0 0
    %1436 = vmatprep.subr.bf16.mxu0 0
    %1437 = vmatpush1.bf16.msra.mxu0 0
    %1438 = vmatprep.subr.bf16.mxu0 0
    %1439 = vmatpush1.bf16.msra.mxu0 0
    %1440 = vmatprep.subr.bf16.mxu0 0
    %1441 = vmatpush1.bf16.msra.mxu0 0
    %1442 = vmatprep.subr.bf16.mxu0 0
    %1443 = vmatpush1.bf16.msra.mxu0 0
    %1444 = vmatprep.subr.bf16.mxu0 0
    %1445 = vmatpush1.bf16.msra.mxu0 0
    %1446 = vmatprep.mubr.bf16.mxu0 0
    %1447 = vmatmul.mubr.bf16.gmra.mrb[0].mxu0 %v1304
    %v1448 = vpop.f32.mrb[0].mxu0
    %v1449 = vadd.f32 %v1327, %v1448
    %v1450 = vpop.f32.mrb[0].mxu0
    %v1451 = vadd.f32 %v1331, %v1450
    %v1452 = vpop.f32.mrb[0].mxu0
    %v1453 = vadd.f32 %v1327, %v1452
    %v1454 = vpop.f32.mrb[0].mxu0
    %v1455 = vadd.f32 %v1331, %v1454
    %1456 = vmatprep.mubr.bf16.mxu0 0
    %1457 = vmatmul.mubr.bf16.gmra.mrb[0].mxu0 %v1305
    %v1458 = vpop.f32.mrb[0].mxu0
    %v1459 = vadd.f32 %v1327, %v1458
    %v1460 = vpop.f32.mrb[0].mxu0
    %v1461 = vadd.f32 %v1331, %v1460
    %v1462 = vpop.f32.mrb[0].mxu0
    %v1463 = vadd.f32 %v1327, %v1462
    %v1464 = vpop.f32.mrb[0].mxu0
    %v1465 = vadd.f32 %v1331, %v1464
    %1466 = vdwg.mxu0
    %v1467 = vmul.f32 %v1449, %v1449
    %v1468 = vmul.f32 %v1451, %v1451
    %v1469 = vmul.f32 %v1453, %v1453
    %v1470 = vmul.f32 %v1455, %v1455
    %v1471 = vmul.f32 %v1459, %v1459
    %v1472 = vmul.f32 %v1461, %v1461
    %v1473 = vmul.f32 %v1463, %v1463
    %v1474 = vmul.f32 %v1465, %v1465
    %v1475 = vmul.f32 %v1449, %v1467
    %v1476 = vmul.f32 %v1451, %v1468
    %v1477 = vmul.f32 %v1453, %v1469
    %v1478 = vmul.f32 %v1455, %v1470
    %v1479 = vmul.f32 %v1459, %v1471
    %v1480 = vmul.f32 %v1461, %v1472
    %v1481 = vmul.f32 %v1463, %v1473
    %v1482 = vmul.f32 %v1465, %v1474
    %v1483 = vmul.f32 %v1475, 0.044715
    %v1484 = vmul.f32 %v1476, 0.044715
    %v1485 = vmul.f32 %v1477, 0.044715
    %v1486 = vmul.f32 %v1478, 0.044715
    %v1487 = vmul.f32 %v1479, 0.044715
    %v1488 = vmul.f32 %v1480, 0.044715
    %v1489 = vmul.f32 %v1481, 0.044715
    %v1490 = vmul.f32 %v1482, 0.044715
    %v1491 = vadd.f32 %v1449, %v1483
    %v1492 = vadd.f32 %v1451, %v1484
    %v1493 = vadd.f32 %v1453, %v1485
    %v1494 = vadd.f32 %v1455, %v1486
    %v1495 = vadd.f32 %v1459, %v1487
    %v1496 = vadd.f32 %v1461, %v1488
    %v1497 = vadd.f32 %v1463, %v1489
    %v1498 = vadd.f32 %v1465, %v1490
    %v1499 = vmul.f32 %v1491, 0.7978846
    %v1500 = vmul.f32 %v1492, 0.7978846
    %v1501 = vmul.f32 %v1493, 0.7978846
    %v1502 = vmul.f32 %v1494, 0.7978846
    %v1503 = vmul.f32 %v1495, 0.7978846
    %v1504 = vmul.f32 %v1496, 0.7978846
    %v1505 = vmul.f32 %v1497, 0.7978846
    %v1506 = vmul.f32 %v1498, 0.7978846
    %v1507 = vtanh.pop %v1499
    %v1508 = vtanh.pop %v1500
    %v1509 = vtanh.pop %v1501
    %v1510 = vtanh.pop %v1502
    %v1511 = vtanh.pop %v1503
    %v1512 = vtanh.pop %v1504
    %v1513 = vtanh.pop %v1505
    %v1514 = vtanh.pop %v1506
    %v1515 = vadd.f32 %v1507, 1.0
    %v1516 = vadd.f32 %v1508, 1.0
    %v1517 = vadd.f32 %v1509, 1.0
    %v1518 = vadd.f32 %v1510, 1.0
    %v1519 = vadd.f32 %v1511, 1.0
    %v1520 = vadd.f32 %v1512, 1.0
    %v1521 = vadd.f32 %v1513, 1.0
    %v1522 = vadd.f32 %v1514, 1.0
    %v1523 = vmul.f32 %v1515, 0.5
    %v1524 = vmul.f32 %v1516, 0.5
    %v1525 = vmul.f32 %v1517, 0.5
    %v1526 = vmul.f32 %v1518, 0.5
    %v1527 = vmul.f32 %v1519, 0.5
    %v1528 = vmul.f32 %v1520, 0.5
    %v1529 = vmul.f32 %v1521, 0.5
    %v1530 = vmul.f32 %v1522, 0.5
    %v1531 = vmul.f32 %v1449, %v1523
    %v1532 = vmul.f32 %v1451, %v1524
    %v1533 = vmul.f32 %v1453, %v1525
    %v1534 = vmul.f32 %v1455, %v1526
    %v1535 = vmul.f32 %v1459, %v1527
    %v1536 = vmul.f32 %v1461, %v1528
    %v1537 = vmul.f32 %v1463, %v1529
    %v1538 = vmul.f32 %v1465, %v1530
    %v1539 = vpack.c.bf16 %v1533, %v1531
    %v1540 = vpack.c.bf16 %v1534, %v1532
    %v1541 = vpack.c.bf16 %v1537, %v1535
    %v1542 = vpack.c.bf16 %v1538, %v1536
    %v1543 = vld [vmem:[#allocation10] sm:$0xf]
    %v1544 = vld [vmem:[#allocation10 + $0x4] sm:$0xf]
    %v1545 = vld [vmem:[#allocation10 + $0x8] sm:$0xf]
    %v1546 = vld [vmem:[#allocation10 + $0xc] sm:$0xf]
    %v1547 = vld [vmem:[#allocation10 + $0x10] sm:$0xf]
    %v1548 = vld [vmem:[#allocation10 + $0x14] sm:$0xf]
    %v1549 = vld [vmem:[#allocation10 + $0x18] sm:$0xf]
    %v1550 = vld [vmem:[#allocation10 + $0x1c] sm:$0xf]
    %v1551 = vld [vmem:[#allocation10 + $0x20] sm:$0xf]
    %v1552 = vld [vmem:[#allocation10 + $0x24] sm:$0xf]
    %v1553 = vld [vmem:[#allocation10 + $0x28] sm:$0xf]
    %v1554 = vld [vmem:[#allocation10 + $0x2c] sm:$0xf]
    %v1555 = vld [vmem:[#allocation10 + $0x30] sm:$0xf]
    %v1556 = vld [vmem:[#allocation10 + $0x34] sm:$0xf]
    %v1557 = vld [vmem:[#allocation10 + $0x38] sm:$0xf]
    %v1558 = vld [vmem:[#allocation10 + $0x3c] sm:$0xf]
    %v1559 = vld [vmem:[#allocation10 + $0x40] sm:$0xf]
    %v1560 = vld [vmem:[#allocation10 + $0x44] sm:$0xf]
    %v1561 = vld [vmem:[#allocation10 + $0x48] sm:$0xf]
    %v1562 = vld [vmem:[#allocation10 + $0x4c] sm:$0xf]
    %v1563 = vld [vmem:[#allocation10 + $0x50] sm:$0xf]
    %v1564 = vld [vmem:[#allocation10 + $0x54] sm:$0xf]
    %v1565 = vld [vmem:[#allocation10 + $0x58] sm:$0xf]
    %v1566 = vld [vmem:[#allocation10 + $0x5c] sm:$0xf]
    %v1567 = vld [vmem:[#allocation10 + $0x60] sm:$0xf]
    %v1568 = vld [vmem:[#allocation10 + $0x64] sm:$0xf]
    %v1569 = vld [vmem:[#allocation10 + $0x68] sm:$0xf]
    %v1570 = vld [vmem:[#allocation10 + $0x6c] sm:$0xf]
    %v1571 = vld [vmem:[#allocation10 + $0x70] sm:$0xf]
    %v1572 = vld [vmem:[#allocation10 + $0x74] sm:$0xf]
    %v1573 = vld [vmem:[#allocation10 + $0x78] sm:$0xf]
    %v1574 = vld [vmem:[#allocation10 + $0x7c] sm:$0xf]
    %v1575 = vlaneseq
    %v1576 = vshrl.u32 %v1575, 7
    %v1577 = vsub.s32 3, %v1576
    %v1578 = vrot.slane %v1066, %v1577
    %v1611 = vunpack.c.l.b16 %v1543
    %v1612 = vunpack.c.l.b16 %v1544
    %v1613 = vunpack.c.l.b16 %v1545
    %v1614 = vunpack.c.l.b16 %v1546
    %v1615 = vunpack.c.l.b16 %v1547
    %v1616 = vunpack.c.l.b16 %v1548
    %v1617 = vunpack.c.l.b16 %v1549
    %v1618 = vunpack.c.l.b16 %v1550
    %v1619 = vunpack.c.l.b16 %v1551
    %v1620 = vunpack.c.l.b16 %v1552
    %v1621 = vunpack.c.l.b16 %v1553
    %v1622 = vunpack.c.l.b16 %v1554
    %v1623 = vunpack.c.l.b16 %v1555
    %v1624 = vunpack.c.l.b16 %v1556
    %v1625 = vunpack.c.l.b16 %v1557
    %v1626 = vunpack.c.l.b16 %v1558
    %v1627 = vunpack.c.l.b16 %v1559
    %v1628 = vunpack.c.l.b16 %v1560
    %v1629 = vunpack.c.l.b16 %v1561
    %v1630 = vunpack.c.l.b16 %v1562
    %v1631 = vunpack.c.l.b16 %v1563
    %v1632 = vunpack.c.l.b16 %v1564
    %v1633 = vunpack.c.l.b16 %v1565
    %v1634 = vunpack.c.l.b16 %v1566
    %v1635 = vunpack.c.l.b16 %v1567
    %v1636 = vunpack.c.l.b16 %v1568
    %v1637 = vunpack.c.l.b16 %v1569
    %v1638 = vunpack.c.l.b16 %v1570
    %v1639 = vunpack.c.l.b16 %v1571
    %v1640 = vunpack.c.l.b16 %v1572
    %v1641 = vunpack.c.l.b16 %v1573
    %v1642 = vunpack.c.l.b16 %v1574
    %v1643 = vpack.c.b16 %v1612, %v1611
    %v1644 = vpack.c.b16 %v1614, %v1613
    %v1645 = vpack.c.b16 %v1616, %v1615
    %v1646 = vpack.c.b16 %v1618, %v1617
    %v1647 = vpack.c.b16 %v1620, %v1619
    %v1648 = vpack.c.b16 %v1622, %v1621
    %v1649 = vpack.c.b16 %v1624, %v1623
    %v1650 = vpack.c.b16 %v1626, %v1625
    %v1651 = vpack.c.b16 %v1628, %v1627
    %v1652 = vpack.c.b16 %v1630, %v1629
    %v1653 = vpack.c.b16 %v1632, %v1631
    %v1654 = vpack.c.b16 %v1634, %v1633
    %v1655 = vpack.c.b16 %v1636, %v1635
    %v1656 = vpack.c.b16 %v1638, %v1637
    %v1657 = vpack.c.b16 %v1640, %v1639
    %v1658 = vpack.c.b16 %v1642, %v1641
    %1675 = vmatprep.subr.bf16.mxu0 0
    %1676 = vmatpush1.bf16.msra.mxu0 %v1643
    %1677 = vmatprep.subr.bf16.mxu0 0
    %1678 = vmatpush1.bf16.msra.mxu0 %v1644
    %1679 = vmatprep.subr.bf16.mxu0 0
    %1680 = vmatpush1.bf16.msra.mxu0 %v1645
    %1681 = vmatprep.subr.bf16.mxu0 0
    %1682 = vmatpush1.bf16.msra.mxu0 %v1646
    %1683 = vmatprep.subr.bf16.mxu0 0
    %1684 = vmatpush1.bf16.msra.mxu0 %v1647
    %1685 = vmatprep.subr.bf16.mxu0 0
    %1686 = vmatpush1.bf16.msra.mxu0 %v1648
    %1687 = vmatprep.subr.bf16.mxu0 0
    %1688 = vmatpush1.bf16.msra.mxu0 %v1649
    %1689 = vmatprep.subr.bf16.mxu0 0
    %1690 = vmatpush1.bf16.msra.mxu0 %v1650
    %1691 = vmatprep.subr.bf16.mxu0 0
    %1692 = vmatpush1.bf16.msra.mxu0 %v1651
    %1693 = vmatprep.subr.bf16.mxu0 0
    %1694 = vmatpush1.bf16.msra.mxu0 %v1652
    %1695 = vmatprep.subr.bf16.mxu0 0
    %1696 = vmatpush1.bf16.msra.mxu0 %v1653
    %1697 = vmatprep.subr.bf16.mxu0 0
    %1698 = vmatpush1.bf16.msra.mxu0 %v1654
    %1699 = vmatprep.subr.bf16.mxu0 0
    %1700 = vmatpush1.bf16.msra.mxu0 %v1655
    %1701 = vmatprep.subr.bf16.mxu0 0
    %1702 = vmatpush1.bf16.msra.mxu0 %v1656
    %1703 = vmatprep.subr.bf16.mxu0 0
    %1704 = vmatpush1.bf16.msra.mxu0 %v1657
    %1705 = vmatprep.subr.bf16.mxu0 0
    %1706 = vmatpush1.bf16.msra.mxu0 %v1658
    %1707 = vmatprep.mubr.bf16.mxu0 %v1540
    %1708 = vmatmul.mubr.bf16.gmra.mrb[0].mxu0 %v1539
    %v1709 = vpop.f32.mrb[0].mxu0
    %v1710 = vadd.f32 %v1578, %v1709
    %v1711 = vpop.f32.mrb[0].mxu0
    %v1712 = vpop.f32.mrb[0].mxu0
    %v1713 = vadd.f32 %v1578, %v1712
    %v1714 = vpop.f32.mrb[0].mxu0
    %1715 = vmatprep.mubr.bf16.mxu0 %v1542
    %1716 = vmatmul.mubr.bf16.gmra.mrb[0].mxu0 %v1541
    %v1717 = vpop.f32.mrb[0].mxu0
    %v1718 = vadd.f32 %v1578, %v1717
    %v1719 = vpop.f32.mrb[0].mxu0
    %v1720 = vpop.f32.mrb[0].mxu0
    %v1721 = vadd.f32 %v1578, %v1720
    %v1722 = vpop.f32.mrb[0].mxu0
    %1723 = vdwg.mxu0
    %v1724 = vlaneseq
    %v1725 = vshrl.u32 %v1724, 7
    %v1726 = vsub.s32 4, %v1725
    %v1727 = vrot.slane %v1066, %v1726
    %v1728 = vmul.f32 %v1710, %v1727
    %v1729 = vmul.f32 %v1713, %v1727
    %v1730 = vmul.f32 %v1718, %v1727
    %v1731 = vmul.f32 %v1721, %v1727
    %v1732 = vadd.f32 %v1049, %v1728
    %v1733 = vadd.f32 %v1052, %v1729
    %v1734 = vadd.f32 %v1057, %v1730
    %v1735 = vadd.f32 %v1060, %v1731
    %s1736 = scalar_lea.vmem %s7, 8
    %v1737 = vld [vmem:[%s1736] sm:$0x1f]
    %1738 = vst [vmem:[#allocation2 + $0x8] sm:$0xff] %v1732
    %1739 = vst [vmem:[#allocation2 + $0x10] sm:$0xff] %v1733
    %1740 = vst [vmem:[#allocation2 + $0x28] sm:$0xff] %v1734
    %1741 = vst [vmem:[#allocation2 + $0x30] sm:$0xff] %v1735
    %v1742 = vld [vmem:[#allocation2] sm:$0xff]
    %v1743 = vld [vmem:[#allocation2 + $0x8] sm:$0xff]
    %v1744 = vld [vmem:[#allocation2 + $0x10] sm:$0xff]
    %v1745 = vld [vmem:[#allocation2 + $0x18] sm:$0xff]
    %v1746 = vld [vmem:[#allocation2 + $0x20] sm:$0xff]
    %v1747 = vld [vmem:[#allocation2 + $0x28] sm:$0xff]
    %v1748 = vld [vmem:[#allocation2 + $0x30] sm:$0xff]
    %v1749 = vld [vmem:[#allocation2 + $0x38] sm:$0xff]
    %v1756 = vrot.slane %v1742, 2
    %v1757 = vrot.slane %v1743, 2
    %v1758 = vsel %vm1085, %v1756, %v1757
    %v1759 = vrot.slane %v1744, 2
    %v1760 = vsel %vm1085, %v1757, %v1759
    %v1761 = vrot.slane %v1746, 2
    %v1762 = vrot.slane %v1747, 2
    %v1763 = vsel %vm1085, %v1761, %v1762
    %v1764 = vrot.slane %v1748, 2
    %v1765 = vsel %vm1085, %v1762, %v1764
    %v1770 = vrot.slane %v1742, 4
    %v1771 = vrot.slane %v1743, 4
    %v1772 = vsel %vm1100, %v1770, %v1771
    %v1773 = vrot.slane %v1744, 4
    %v1774 = vsel %vm1100, %v1771, %v1773
    %v1775 = vrot.slane %v1746, 4
    %v1776 = vrot.slane %v1747, 4
    %v1777 = vsel %vm1100, %v1775, %v1776
    %v1778 = vrot.slane %v1748, 4
    %v1779 = vsel %vm1100, %v1776, %v1778
    %v1784 = vrot.slane %v1742, 6
    %v1785 = vrot.slane %v1743, 6
    %v1786 = vsel %vm1115, %v1784, %v1785
    %v1787 = vrot.slane %v1744, 6
    %v1788 = vsel %vm1115, %v1785, %v1787
    %v1789 = vrot.slane %v1746, 6
    %v1790 = vrot.slane %v1747, 6
    %v1791 = vsel %vm1115, %v1789, %v1790
    %v1792 = vrot.slane %v1748, 6
    %v1793 = vsel %vm1115, %v1790, %v1792
    %v1800 = vrot.slane %v1745, 2
    %v1801 = vsel %vm1085, %v1759, %v1800
    %v1802 = vrot.slane %v1749, 2
    %v1803 = vsel %vm1085, %v1764, %v1802
    %v1806 = vrot.slane %v1745, 4
    %v1807 = vsel %vm1100, %v1773, %v1806
    %v1808 = vrot.slane %v1749, 4
    %v1809 = vsel %vm1100, %v1778, %v1808
    %v1812 = vrot.slane %v1745, 6
    %v1813 = vsel %vm1115, %v1787, %v1812
    %v1814 = vrot.slane %v1749, 6
    %v1815 = vsel %vm1115, %v1792, %v1814
    %s1818 = scalar_lea.vmem %s6, 8
    %v1819 = vld [vmem:[%s1818] sm:$0x7f]
    %v1820 = vlaneseq
    %v1821 = vshrl.u32 %v1820, 7
    %v1822 = vsub.s32 0, %v1821
    %v1823 = vrot.slane %v1819, %v1822
    %v1824 = vmul.f32 %v1758, %v1823
    %v1825 = vmul.f32 %v1760, %v1823
    %v1826 = vmul.f32 %v1763, %v1823
    %v1827 = vmul.f32 %v1765, %v1823
    %v1828 = vlaneseq
    %v1829 = vshrl.u32 %v1828, 7
    %v1830 = vsub.s32 0, %v1829
    %v1831 = vrot.slane %v1737, %v1830
    %v1832 = vadd.f32 %v1824, %v1831
    %v1833 = vadd.f32 %v1825, %v1831
    %v1834 = vadd.f32 %v1826, %v1831
    %v1835 = vadd.f32 %v1827, %v1831
    %v1836 = vlaneseq
    %v1837 = vshrl.u32 %v1836, 7
    %v1838 = vsub.s32 1, %v1837
    %v1839 = vrot.slane %v1819, %v1838
    %v1840 = vmul.f32 %v1772, %v1839
    %v1841 = vmul.f32 %v1774, %v1839
    %v1842 = vmul.f32 %v1777, %v1839
    %v1843 = vmul.f32 %v1779, %v1839
    %v1844 = vadd.f32 %v1832, %v1840
    %v1845 = vadd.f32 %v1833, %v1841
    %v1846 = vadd.f32 %v1834, %v1842
    %v1847 = vadd.f32 %v1835, %v1843
    %v1848 = vlaneseq
    %v1849 = vshrl.u32 %v1848, 7
    %v1850 = vsub.s32 2, %v1849
    %v1851 = vrot.slane %v1819, %v1850
    %v1852 = vmul.f32 %v1786, %v1851
    %v1853 = vmul.f32 %v1788, %v1851
    %v1854 = vmul.f32 %v1791, %v1851
    %v1855 = vmul.f32 %v1793, %v1851
    %v1856 = vadd.f32 %v1844, %v1852
    %v1857 = vadd.f32 %v1845, %v1853
    %v1858 = vadd.f32 %v1846, %v1854
    %v1859 = vadd.f32 %v1847, %v1855
    %v1860 = vlaneseq
    %v1861 = vshrl.u32 %v1860, 7
    %v1862 = vsub.s32 3, %v1861
    %v1863 = vrot.slane %v1819, %v1862
    %v1864 = vmul.f32 %v1743, %v1863
    %v1865 = vmul.f32 %v1744, %v1863
    %v1866 = vmul.f32 %v1747, %v1863
    %v1867 = vmul.f32 %v1748, %v1863
    %v1868 = vadd.f32 %v1856, %v1864
    %v1869 = vadd.f32 %v1857, %v1865
    %v1870 = vadd.f32 %v1858, %v1866
    %v1871 = vadd.f32 %v1859, %v1867
    %v1872 = vlaneseq
    %v1873 = vshrl.u32 %v1872, 7
    %v1874 = vsub.s32 4, %v1873
    %v1875 = vrot.slane %v1819, %v1874
    %v1876 = vmul.f32 %v1760, %v1875
    %v1877 = vmul.f32 %v1801, %v1875
    %v1878 = vmul.f32 %v1765, %v1875
    %v1879 = vmul.f32 %v1803, %v1875
    %v1880 = vadd.f32 %v1868, %v1876
    %v1881 = vadd.f32 %v1869, %v1877
    %v1882 = vadd.f32 %v1870, %v1878
    %v1883 = vadd.f32 %v1871, %v1879
    %v1884 = vlaneseq
    %v1885 = vshrl.u32 %v1884, 7
    %v1886 = vsub.s32 5, %v1885
    %v1887 = vrot.slane %v1819, %v1886
    %v1888 = vmul.f32 %v1774, %v1887
    %v1889 = vmul.f32 %v1807, %v1887
    %v1890 = vmul.f32 %v1779, %v1887
    %v1891 = vmul.f32 %v1809, %v1887
    %v1892 = vadd.f32 %v1880, %v1888
    %v1893 = vadd.f32 %v1881, %v1889
    %v1894 = vadd.f32 %v1882, %v1890
    %v1895 = vadd.f32 %v1883, %v1891
    %v1896 = vlaneseq
    %v1897 = vshrl.u32 %v1896, 7
    %v1898 = vsub.s32 6, %v1897
    %v1899 = vrot.slane %v1819, %v1898
    %v1900 = vmul.f32 %v1788, %v1899
    %v1901 = vmul.f32 %v1813, %v1899
    %v1902 = vmul.f32 %v1793, %v1899
    %v1903 = vmul.f32 %v1815, %v1899
    %v1904 = vadd.f32 %v1892, %v1900
    %v1905 = vadd.f32 %v1893, %v1901
    %v1906 = vadd.f32 %v1894, %v1902
    %v1907 = vadd.f32 %v1895, %v1903
    %1908 = vadd.xlane.f32.xlu0 %v1904
    %v1909 = vpop.xlane.xlu0 %1908
    %1910 = vadd.xlane.f32.xlu0 %v1905
    %v1911 = vpop.xlane.xlu0 %1910
    %1912 = vadd.xlane.f32.xlu0 %v1906
    %v1913 = vpop.xlane.xlu0 %1912
    %1914 = vadd.xlane.f32.xlu0 %v1907
    %v1915 = vpop.xlane.xlu0 %1914
    %v1916 = vmul.f32 %v1909, %v1247
    %v1917 = vmul.f32 %v1911, %v1247
    %v1918 = vmul.f32 %v1913, %v1247
    %v1919 = vmul.f32 %v1915, %v1247
    %v1920 = vsub.f32 %v1904, %v1916
    %v1921 = vsub.f32 %v1905, %v1917
    %v1922 = vsub.f32 %v1906, %v1918
    %v1923 = vsub.f32 %v1907, %v1919
    %v1924 = vmul.f32 %v1920, %v1065
    %v1925 = vmul.f32 %v1921, %v1065
    %v1926 = vmul.f32 %v1922, %v1065
    %v1927 = vmul.f32 %v1923, %v1065
    %v1928 = vmul.f32 %v1924, %v1924
    %v1929 = vmul.f32 %v1925, %v1925
    %v1930 = vmul.f32 %v1926, %v1926
    %v1931 = vmul.f32 %v1927, %v1927
    %1932 = vadd.xlane.f32.xlu0 %v1928
    %v1933 = vpop.xlane.xlu0 %1932
    %1934 = vadd.xlane.f32.xlu0 %v1929
    %v1935 = vpop.xlane.xlu0 %1934
    %1936 = vadd.xlane.f32.xlu0 %v1930
    %v1937 = vpop.xlane.xlu0 %1936
    %1938 = vadd.xlane.f32.xlu0 %v1931
    %v1939 = vpop.xlane.xlu0 %1938
    %v1940 = vmul.f32 %v1933, %v1247
    %v1941 = vmul.f32 %v1935, %v1247
    %v1942 = vmul.f32 %v1937, %v1247
    %v1943 = vmul.f32 %v1939, %v1247
    %v1944 = vadd.f32 %v1940, 1e-06
    %v1945 = vadd.f32 %v1941, 1e-06
    %v1946 = vadd.f32 %v1942, 1e-06
    %v1947 = vadd.f32 %v1943, 1e-06
    %v1948 = vrsqrt.pop %v1944
    %v1949 = vrsqrt.pop %v1945
    %v1950 = vrsqrt.pop %v1946
    %v1951 = vrsqrt.pop %v1947
    %v1952 = vmul.f32 %v1920, %v1948
    %v1953 = vmul.f32 %v1921, %v1949
    %v1954 = vmul.f32 %v1922, %v1950
    %v1955 = vmul.f32 %v1923, %v1951
    %v1956 = vlaneseq
    %v1957 = vshrl.u32 %v1956, 7
    %v1958 = vsub.s32 1, %v1957
    %v1959 = vrot.slane %v1737, %v1958
    %v1960 = vmul.f32 %v1952, %v1959
    %v1961 = vmul.f32 %v1953, %v1959
    %v1962 = vmul.f32 %v1954, %v1959
    %v1963 = vmul.f32 %v1955, %v1959
    %v1964 = vlaneseq
    %v1965 = vshrl.u32 %v1964, 7
    %v1966 = vsub.s32 2, %v1965
    %v1967 = vrot.slane %v1737, %v1966
    %v1968 = vadd.f32 %v1960, %v1967
    %v1969 = vadd.f32 %v1961, %v1967
    %v1970 = vadd.f32 %v1962, %v1967
    %v1971 = vadd.f32 %v1963, %v1967
    %v1972 = vpack.c.bf16 %v1969, %v1968
    %v1973 = vpack.c.bf16 %v1971, %v1970
    %s1974 = scalar_lea.vmem %s8, 128
    %v1975 = vld [vmem:[%s1974] sm:$0xff]
    %v1976 = vld [vmem:[%s1974 + $0x8] sm:$0xff]
    %v1977 = vld [vmem:[%s1974 + $0x10] sm:$0xff]
    %v1978 = vld [vmem:[%s1974 + $0x18] sm:$0xff]
    %v1979 = vld [vmem:[%s1974 + $0x20] sm:$0xff]
    %v1980 = vld [vmem:[%s1974 + $0x28] sm:$0xff]
    %v1981 = vld [vmem:[%s1974 + $0x30] sm:$0xff]
    %v1982 = vld [vmem:[%s1974 + $0x38] sm:$0xff]
    %v1983 = vld [vmem:[%s1974 + $0x40] sm:$0xff]
    %v1984 = vld [vmem:[%s1974 + $0x48] sm:$0xff]
    %v1985 = vld [vmem:[%s1974 + $0x50] sm:$0xff]
    %v1986 = vld [vmem:[%s1974 + $0x58] sm:$0xff]
    %v1987 = vld [vmem:[%s1974 + $0x60] sm:$0xff]
    %v1988 = vld [vmem:[%s1974 + $0x68] sm:$0xff]
    %v1989 = vld [vmem:[%s1974 + $0x70] sm:$0xff]
    %v1990 = vld [vmem:[%s1974 + $0x78] sm:$0xff]
    %s1991 = scalar_lea.vmem [#allocation8], 2
    %v1992 = vld [vmem:[%s1991] sm:$0x3]
    %v1994 = vlaneseq
    %v1995 = vshrl.u32 %v1994, 7
    %v1996 = vsub.s32 0, %v1995
    %v1997 = vrot.slane %v1992, %v1996
    %v1998 = vlaneseq
    %v1999 = vshrl.u32 %v1998, 7
    %v2000 = vsub.s32 1, %v1999
    %v2001 = vrot.slane %v1992, %v2000
    %v2020 = vunpack.c.l.b16 %v1975
    %v2021 = vunpack.c.h.b16 %v1975
    %v2022 = vunpack.c.l.b16 %v1976
    %v2023 = vunpack.c.h.b16 %v1976
    %v2024 = vunpack.c.l.b16 %v1977
    %v2025 = vunpack.c.h.b16 %v1977
    %v2026 = vunpack.c.l.b16 %v1978
    %v2027 = vunpack.c.h.b16 %v1978
    %v2028 = vunpack.c.l.b16 %v1979
    %v2029 = vunpack.c.h.b16 %v1979
    %v2030 = vunpack.c.l.b16 %v1980
    %v2031 = vunpack.c.h.b16 %v1980
    %v2032 = vunpack.c.l.b16 %v1981
    %v2033 = vunpack.c.h.b16 %v1981
    %v2034 = vunpack.c.l.b16 %v1982
    %v2035 = vunpack.c.h.b16 %v1982
    %v2036 = vunpack.c.l.b16 %v1983
    %v2037 = vunpack.c.h.b16 %v1983
    %v2038 = vunpack.c.l.b16 %v1984
    %v2039 = vunpack.c.h.b16 %v1984
    %v2040 = vunpack.c.l.b16 %v1985
    %v2041 = vunpack.c.h.b16 %v1985
    %v2042 = vunpack.c.l.b16 %v1986
    %v2043 = vunpack.c.h.b16 %v1986
    %v2044 = vunpack.c.l.b16 %v1987
    %v2045 = vunpack.c.h.b16 %v1987
    %v2046 = vunpack.c.l.b16 %v1988
    %v2047 = vunpack.c.h.b16 %v1988
    %v2048 = vunpack.c.l.b16 %v1989
    %v2049 = vunpack.c.h.b16 %v1989
    %v2050 = vunpack.c.l.b16 %v1990
    %v2051 = vunpack.c.h.b16 %v1990
    %v2052 = vpack.c.b16 %v2022, %v2020
    %v2053 = vpack.c.b16 %v2023, %v2021
    %v2054 = vpack.c.b16 %v2026, %v2024
    %v2055 = vpack.c.b16 %v2027, %v2025
    %v2056 = vpack.c.b16 %v2030, %v2028
    %v2057 = vpack.c.b16 %v2031, %v2029
    %v2058 = vpack.c.b16 %v2034, %v2032
    %v2059 = vpack.c.b16 %v2035, %v2033
    %v2060 = vpack.c.b16 %v2038, %v2036
    %v2061 = vpack.c.b16 %v2039, %v2037
    %v2062 = vpack.c.b16 %v2042, %v2040
    %v2063 = vpack.c.b16 %v2043, %v2041
    %v2064 = vpack.c.b16 %v2046, %v2044
    %v2065 = vpack.c.b16 %v2047, %v2045
    %v2066 = vpack.c.b16 %v2050, %v2048
    %v2067 = vpack.c.b16 %v2051, %v2049
    %2084 = vmatprep.subr.bf16.mxu0 %v2053
    %2085 = vmatpush1.bf16.msra.mxu0 %v2052
    %2086 = vmatprep.subr.bf16.mxu0 %v2055
    %2087 = vmatpush1.bf16.msra.mxu0 %v2054
    %2088 = vmatprep.subr.bf16.mxu0 %v2057
    %2089 = vmatpush1.bf16.msra.mxu0 %v2056
    %2090 = vmatprep.subr.bf16.mxu0 %v2059
    %2091 = vmatpush1.bf16.msra.mxu0 %v2058
    %2092 = vmatprep.subr.bf16.mxu0 %v2061
    %2093 = vmatpush1.bf16.msra.mxu0 %v2060
    %2094 = vmatprep.subr.bf16.mxu0 %v2063
    %2095 = vmatpush1.bf16.msra.mxu0 %v2062
    %2096 = vmatprep.subr.bf16.mxu0 %v2065
    %2097 = vmatpush1.bf16.msra.mxu0 %v2064
    %2098 = vmatprep.subr.bf16.mxu0 %v2067
    %2099 = vmatpush1.bf16.msra.mxu0 %v2066
    %2100 = vmatprep.subr.bf16.mxu0 0
    %2101 = vmatpush1.bf16.msra.mxu0 0
    %2102 = vmatprep.subr.bf16.mxu0 0
    %2103 = vmatpush1.bf16.msra.mxu0 0
    %2104 = vmatprep.subr.bf16.mxu0 0
    %2105 = vmatpush1.bf16.msra.mxu0 0
    %2106 = vmatprep.subr.bf16.mxu0 0
    %2107 = vmatpush1.bf16.msra.mxu0 0
    %2108 = vmatprep.subr.bf16.mxu0 0
    %2109 = vmatpush1.bf16.msra.mxu0 0
    %2110 = vmatprep.subr.bf16.mxu0 0
    %2111 = vmatpush1.bf16.msra.mxu0 0
    %2112 = vmatprep.subr.bf16.mxu0 0
    %2113 = vmatpush1.bf16.msra.mxu0 0
    %2114 = vmatprep.subr.bf16.mxu0 0
    %2115 = vmatpush1.bf16.msra.mxu0 0
    %2116 = vmatprep.mubr.bf16.mxu0 0
    %2117 = vmatmul.mubr.bf16.gmra.mrb[0].mxu0 %v1972
    %v2118 = vpop.f32.mrb[0].mxu0
    %v2119 = vadd.f32 %v1997, %v2118
    %v2120 = vpop.f32.mrb[0].mxu0
    %v2121 = vadd.f32 %v2001, %v2120
    %v2122 = vpop.f32.mrb[0].mxu0
    %v2123 = vadd.f32 %v1997, %v2122
    %v2124 = vpop.f32.mrb[0].mxu0
    %v2125 = vadd.f32 %v2001, %v2124
    %2126 = vmatprep.mubr.bf16.mxu0 0
    %2127 = vmatmul.mubr.bf16.gmra.mrb[0].mxu0 %v1973
    %v2128 = vpop.f32.mrb[0].mxu0
    %v2129 = vadd.f32 %v1997, %v2128
    %v2130 = vpop.f32.mrb[0].mxu0
    %v2131 = vadd.f32 %v2001, %v2130
    %v2132 = vpop.f32.mrb[0].mxu0
    %v2133 = vadd.f32 %v1997, %v2132
    %v2134 = vpop.f32.mrb[0].mxu0
    %v2135 = vadd.f32 %v2001, %v2134
    %2136 = vdwg.mxu0
    %v2137 = vmul.f32 %v2119, %v2119
    %v2138 = vmul.f32 %v2121, %v2121
    %v2139 = vmul.f32 %v2123, %v2123
    %v2140 = vmul.f32 %v2125, %v2125
    %v2141 = vmul.f32 %v2129, %v2129
    %v2142 = vmul.f32 %v2131, %v2131
    %v2143 = vmul.f32 %v2133, %v2133
    %v2144 = vmul.f32 %v2135, %v2135
    %v2145 = vmul.f32 %v2119, %v2137
    %v2146 = vmul.f32 %v2121, %v2138
    %v2147 = vmul.f32 %v2123, %v2139
    %v2148 = vmul.f32 %v2125, %v2140
    %v2149 = vmul.f32 %v2129, %v2141
    %v2150 = vmul.f32 %v2131, %v2142
    %v2151 = vmul.f32 %v2133, %v2143
    %v2152 = vmul.f32 %v2135, %v2144
    %v2153 = vmul.f32 %v2145, 0.044715
    %v2154 = vmul.f32 %v2146, 0.044715
    %v2155 = vmul.f32 %v2147, 0.044715
    %v2156 = vmul.f32 %v2148, 0.044715
    %v2157 = vmul.f32 %v2149, 0.044715
    %v2158 = vmul.f32 %v2150, 0.044715
    %v2159 = vmul.f32 %v2151, 0.044715
    %v2160 = vmul.f32 %v2152, 0.044715
    %v2161 = vadd.f32 %v2119, %v2153
    %v2162 = vadd.f32 %v2121, %v2154
    %v2163 = vadd.f32 %v2123, %v2155
    %v2164 = vadd.f32 %v2125, %v2156
    %v2165 = vadd.f32 %v2129, %v2157
    %v2166 = vadd.f32 %v2131, %v2158
    %v2167 = vadd.f32 %v2133, %v2159
    %v2168 = vadd.f32 %v2135, %v2160
    %v2169 = vmul.f32 %v2161, 0.7978846
    %v2170 = vmul.f32 %v2162, 0.7978846
    %v2171 = vmul.f32 %v2163, 0.7978846
    %v2172 = vmul.f32 %v2164, 0.7978846
    %v2173 = vmul.f32 %v2165, 0.7978846
    %v2174 = vmul.f32 %v2166, 0.7978846
    %v2175 = vmul.f32 %v2167, 0.7978846
    %v2176 = vmul.f32 %v2168, 0.7978846
    %v2177 = vtanh.pop %v2169
    %v2178 = vtanh.pop %v2170
    %v2179 = vtanh.pop %v2171
    %v2180 = vtanh.pop %v2172
    %v2181 = vtanh.pop %v2173
    %v2182 = vtanh.pop %v2174
    %v2183 = vtanh.pop %v2175
    %v2184 = vtanh.pop %v2176
    %v2185 = vadd.f32 %v2177, 1.0
    %v2186 = vadd.f32 %v2178, 1.0
    %v2187 = vadd.f32 %v2179, 1.0
    %v2188 = vadd.f32 %v2180, 1.0
    %v2189 = vadd.f32 %v2181, 1.0
    %v2190 = vadd.f32 %v2182, 1.0
    %v2191 = vadd.f32 %v2183, 1.0
    %v2192 = vadd.f32 %v2184, 1.0
    %v2193 = vmul.f32 %v2185, 0.5
    %v2194 = vmul.f32 %v2186, 0.5
    %v2195 = vmul.f32 %v2187, 0.5
    %v2196 = vmul.f32 %v2188, 0.5
    %v2197 = vmul.f32 %v2189, 0.5
    %v2198 = vmul.f32 %v2190, 0.5
    %v2199 = vmul.f32 %v2191, 0.5
    %v2200 = vmul.f32 %v2192, 0.5
    %v2201 = vmul.f32 %v2119, %v2193
    %v2202 = vmul.f32 %v2121, %v2194
    %v2203 = vmul.f32 %v2123, %v2195
    %v2204 = vmul.f32 %v2125, %v2196
    %v2205 = vmul.f32 %v2129, %v2197
    %v2206 = vmul.f32 %v2131, %v2198
    %v2207 = vmul.f32 %v2133, %v2199
    %v2208 = vmul.f32 %v2135, %v2200
    %v2209 = vpack.c.bf16 %v2203, %v2201
    %v2210 = vpack.c.bf16 %v2204, %v2202
    %v2211 = vpack.c.bf16 %v2207, %v2205
    %v2212 = vpack.c.bf16 %v2208, %v2206
    %s2213 = scalar_lea.vmem [#allocation10], 128
    %v2214 = vld [vmem:[%s2213] sm:$0xf]
    %v2215 = vld [vmem:[%s2213 + $0x4] sm:$0xf]
    %v2216 = vld [vmem:[%s2213 + $0x8] sm:$0xf]
    %v2217 = vld [vmem:[%s2213 + $0xc] sm:$0xf]
    %v2218 = vld [vmem:[%s2213 + $0x10] sm:$0xf]
    %v2219 = vld [vmem:[%s2213 + $0x14] sm:$0xf]
    %v2220 = vld [vmem:[%s2213 + $0x18] sm:$0xf]
    %v2221 = vld [vmem:[%s2213 + $0x1c] sm:$0xf]
    %v2222 = vld [vmem:[%s2213 + $0x20] sm:$0xf]
    %v2223 = vld [vmem:[%s2213 + $0x24] sm:$0xf]
    %v2224 = vld [vmem:[%s2213 + $0x28] sm:$0xf]
    %v2225 = vld [vmem:[%s2213 + $0x2c] sm:$0xf]
    %v2226 = vld [vmem:[%s2213 + $0x30] sm:$0xf]
    %v2227 = vld [vmem:[%s2213 + $0x34] sm:$0xf]
    %v2228 = vld [vmem:[%s2213 + $0x38] sm:$0xf]
    %v2229 = vld [vmem:[%s2213 + $0x3c] sm:$0xf]
    %v2230 = vld [vmem:[%s2213 + $0x40] sm:$0xf]
    %v2231 = vld [vmem:[%s2213 + $0x44] sm:$0xf]
    %v2232 = vld [vmem:[%s2213 + $0x48] sm:$0xf]
    %v2233 = vld [vmem:[%s2213 + $0x4c] sm:$0xf]
    %v2234 = vld [vmem:[%s2213 + $0x50] sm:$0xf]
    %v2235 = vld [vmem:[%s2213 + $0x54] sm:$0xf]
    %v2236 = vld [vmem:[%s2213 + $0x58] sm:$0xf]
    %v2237 = vld [vmem:[%s2213 + $0x5c] sm:$0xf]
    %v2238 = vld [vmem:[%s2213 + $0x60] sm:$0xf]
    %v2239 = vld [vmem:[%s2213 + $0x64] sm:$0xf]
    %v2240 = vld [vmem:[%s2213 + $0x68] sm:$0xf]
    %v2241 = vld [vmem:[%s2213 + $0x6c] sm:$0xf]
    %v2242 = vld [vmem:[%s2213 + $0x70] sm:$0xf]
    %v2243 = vld [vmem:[%s2213 + $0x74] sm:$0xf]
    %v2244 = vld [vmem:[%s2213 + $0x78] sm:$0xf]
    %v2245 = vld [vmem:[%s2213 + $0x7c] sm:$0xf]
    %v2246 = vlaneseq
    %v2247 = vshrl.u32 %v2246, 7
    %v2248 = vsub.s32 3, %v2247
    %v2249 = vrot.slane %v1737, %v2248
    %v2282 = vunpack.c.l.b16 %v2214
    %v2283 = vunpack.c.l.b16 %v2215
    %v2284 = vunpack.c.l.b16 %v2216
    %v2285 = vunpack.c.l.b16 %v2217
    %v2286 = vunpack.c.l.b16 %v2218
    %v2287 = vunpack.c.l.b16 %v2219
    %v2288 = vunpack.c.l.b16 %v2220
    %v2289 = vunpack.c.l.b16 %v2221
    %v2290 = vunpack.c.l.b16 %v2222
    %v2291 = vunpack.c.l.b16 %v2223
    %v2292 = vunpack.c.l.b16 %v2224
    %v2293 = vunpack.c.l.b16 %v2225
    %v2294 = vunpack.c.l.b16 %v2226
    %v2295 = vunpack.c.l.b16 %v2227
    %v2296 = vunpack.c.l.b16 %v2228
    %v2297 = vunpack.c.l.b16 %v2229
    %v2298 = vunpack.c.l.b16 %v2230
    %v2299 = vunpack.c.l.b16 %v2231
    %v2300 = vunpack.c.l.b16 %v2232
    %v2301 = vunpack.c.l.b16 %v2233
    %v2302 = vunpack.c.l.b16 %v2234
    %v2303 = vunpack.c.l.b16 %v2235
    %v2304 = vunpack.c.l.b16 %v2236
    %v2305 = vunpack.c.l.b16 %v2237
    %v2306 = vunpack.c.l.b16 %v2238
    %v2307 = vunpack.c.l.b16 %v2239
    %v2308 = vunpack.c.l.b16 %v2240
    %v2309 = vunpack.c.l.b16 %v2241
    %v2310 = vunpack.c.l.b16 %v2242
    %v2311 = vunpack.c.l.b16 %v2243
    %v2312 = vunpack.c.l.b16 %v2244
    %v2313 = vunpack.c.l.b16 %v2245
    %v2314 = vpack.c.b16 %v2283, %v2282
    %v2315 = vpack.c.b16 %v2285, %v2284
    %v2316 = vpack.c.b16 %v2287, %v2286
    %v2317 = vpack.c.b16 %v2289, %v2288
    %v2318 = vpack.c.b16 %v2291, %v2290
    %v2319 = vpack.c.b16 %v2293, %v2292
    %v2320 = vpack.c.b16 %v2295, %v2294
    %v2321 = vpack.c.b16 %v2297, %v2296
    %v2322 = vpack.c.b16 %v2299, %v2298
    %v2323 = vpack.c.b16 %v2301, %v2300
    %v2324 = vpack.c.b16 %v2303, %v2302
    %v2325 = vpack.c.b16 %v2305, %v2304
    %v2326 = vpack.c.b16 %v2307, %v2306
    %v2327 = vpack.c.b16 %v2309, %v2308
    %v2328 = vpack.c.b16 %v2311, %v2310
    %v2329 = vpack.c.b16 %v2313, %v2312
    %2346 = vmatprep.subr.bf16.mxu0 0
    %2347 = vmatpush1.bf16.msra.mxu0 %v2314
    %2348 = vmatprep.subr.bf16.mxu0 0
    %2349 = vmatpush1.bf16.msra.mxu0 %v2315
    %2350 = vmatprep.subr.bf16.mxu0 0
    %2351 = vmatpush1.bf16.msra.mxu0 %v2316
    %2352 = vmatprep.subr.bf16.mxu0 0
    %2353 = vmatpush1.bf16.msra.mxu0 %v2317
    %2354 = vmatprep.subr.bf16.mxu0 0
    %2355 = vmatpush1.bf16.msra.mxu0 %v2318
    %2356 = vmatprep.subr.bf16.mxu0 0
    %2357 = vmatpush1.bf16.msra.mxu0 %v2319
    %2358 = vmatprep.subr.bf16.mxu0 0
    %2359 = vmatpush1.bf16.msra.mxu0 %v2320
    %2360 = vmatprep.subr.bf16.mxu0 0
    %2361 = vmatpush1.bf16.msra.mxu0 %v2321
    %2362 = vmatprep.subr.bf16.mxu0 0
    %2363 = vmatpush1.bf16.msra.mxu0 %v2322
    %2364 = vmatprep.subr.bf16.mxu0 0
    %2365 = vmatpush1.bf16.msra.mxu0 %v2323
    %2366 = vmatprep.subr.bf16.mxu0 0
    %2367 = vmatpush1.bf16.msra.mxu0 %v2324
    %2368 = vmatprep.subr.bf16.mxu0 0
    %2369 = vmatpush1.bf16.msra.mxu0 %v2325
    %2370 = vmatprep.subr.bf16.mxu0 0
    %2371 = vmatpush1.bf16.msra.mxu0 %v2326
    %2372 = vmatprep.subr.bf16.mxu0 0
    %2373 = vmatpush1.bf16.msra.mxu0 %v2327
    %2374 = vmatprep.subr.bf16.mxu0 0
    %2375 = vmatpush1.bf16.msra.mxu0 %v2328
    %2376 = vmatprep.subr.bf16.mxu0 0
    %2377 = vmatpush1.bf16.msra.mxu0 %v2329
    %2378 = vmatprep.mubr.bf16.mxu0 %v2210
    %2379 = vmatmul.mubr.bf16.gmra.mrb[0].mxu0 %v2209
    %v2380 = vpop.f32.mrb[0].mxu0
    %v2381 = vadd.f32 %v2249, %v2380
    %v2382 = vpop.f32.mrb[0].mxu0
    %v2383 = vpop.f32.mrb[0].mxu0
    %v2384 = vadd.f32 %v2249, %v2383
    %v2385 = vpop.f32.mrb[0].mxu0
    %2386 = vmatprep.mubr.bf16.mxu0 %v2212
    %2387 = vmatmul.mubr.bf16.gmra.mrb[0].mxu0 %v2211
    %v2388 = vpop.f32.mrb[0].mxu0
    %v2389 = vadd.f32 %v2249, %v2388
    %v2390 = vpop.f32.mrb[0].mxu0
    %v2391 = vpop.f32.mrb[0].mxu0
    %v2392 = vadd.f32 %v2249, %v2391
    %v2393 = vpop.f32.mrb[0].mxu0
    %2394 = vdwg.mxu0
    %v2395 = vlaneseq
    %v2396 = vshrl.u32 %v2395, 7
    %v2397 = vsub.s32 4, %v2396
    %v2398 = vrot.slane %v1737, %v2397
    %v2399 = vmul.f32 %v2381, %v2398
    %v2400 = vmul.f32 %v2384, %v2398
    %v2401 = vmul.f32 %v2389, %v2398
    %v2402 = vmul.f32 %v2392, %v2398
    %v2403 = vadd.f32 %v1732, %v2399
    %v2404 = vadd.f32 %v1733, %v2400
    %v2405 = vadd.f32 %v1734, %v2401
    %v2406 = vadd.f32 %v1735, %v2402
    %v2407 = vld [vmem:[#allocation11] sm:$0xf]
    %v2408 = vld [vmem:[#allocation11 + $0x4] sm:$0xf]
    %v2409 = vld [vmem:[#allocation11 + $0x8] sm:$0xf]
    %v2410 = vld [vmem:[#allocation11 + $0xc] sm:$0xf]
    %v2411 = vld [vmem:[#allocation11 + $0x10] sm:$0xf]
    %v2412 = vld [vmem:[#allocation11 + $0x14] sm:$0xf]
    %v2413 = vld [vmem:[#allocation11 + $0x18] sm:$0xf]
    %v2414 = vld [vmem:[#allocation11 + $0x1c] sm:$0xf]
    %v2415 = vld [vmem:[#allocation11 + $0x20] sm:$0xf]
    %v2416 = vld [vmem:[#allocation11 + $0x24] sm:$0xf]
    %v2417 = vld [vmem:[#allocation11 + $0x28] sm:$0xf]
    %v2418 = vld [vmem:[#allocation11 + $0x2c] sm:$0xf]
    %v2419 = vld [vmem:[#allocation11 + $0x30] sm:$0xf]
    %v2420 = vld [vmem:[#allocation11 + $0x34] sm:$0xf]
    %v2421 = vld [vmem:[#allocation11 + $0x38] sm:$0xf]
    %v2422 = vld [vmem:[#allocation11 + $0x3c] sm:$0xf]
    %v2423 = vld [vmem:[#allocation11 + $0x40] sm:$0xf]
    %v2424 = vld [vmem:[#allocation11 + $0x44] sm:$0xf]
    %v2425 = vld [vmem:[#allocation11 + $0x48] sm:$0xf]
    %v2426 = vld [vmem:[#allocation11 + $0x4c] sm:$0xf]
    %v2427 = vld [vmem:[#allocation11 + $0x50] sm:$0xf]
    %v2428 = vld [vmem:[#allocation11 + $0x54] sm:$0xf]
    %v2429 = vld [vmem:[#allocation11 + $0x58] sm:$0xf]
    %v2430 = vld [vmem:[#allocation11 + $0x5c] sm:$0xf]
    %v2431 = vld [vmem:[#allocation11 + $0x60] sm:$0xf]
    %v2432 = vld [vmem:[#allocation11 + $0x64] sm:$0xf]
    %v2433 = vld [vmem:[#allocation11 + $0x68] sm:$0xf]
    %v2434 = vld [vmem:[#allocation11 + $0x6c] sm:$0xf]
    %v2435 = vld [vmem:[#allocation11 + $0x70] sm:$0xf]
    %v2436 = vld [vmem:[#allocation11 + $0x74] sm:$0xf]
    %v2437 = vld [vmem:[#allocation11 + $0x78] sm:$0xf]
    %v2438 = vld [vmem:[#allocation11 + $0x7c] sm:$0xf]
    %v2439 = vld [vmem:[#allocation11 + $0x80] sm:$0xf]
    %v2440 = vld [vmem:[#allocation11 + $0x84] sm:$0xf]
    %v2441 = vld [vmem:[#allocation11 + $0x88] sm:$0xf]
    %v2442 = vld [vmem:[#allocation11 + $0x8c] sm:$0xf]
    %v2443 = vld [vmem:[#allocation11 + $0x90] sm:$0xf]
    %v2444 = vld [vmem:[#allocation11 + $0x94] sm:$0xf]
    %v2445 = vld [vmem:[#allocation11 + $0x98] sm:$0xf]
    %v2446 = vld [vmem:[#allocation11 + $0x9c] sm:$0xf]
    %v2447 = vld [vmem:[#allocation11 + $0xa0] sm:$0xf]
    %v2448 = vld [vmem:[#allocation11 + $0xa4] sm:$0xf]
    %v2449 = vld [vmem:[#allocation11 + $0xa8] sm:$0xf]
    %v2450 = vld [vmem:[#allocation11 + $0xac] sm:$0xf]
    %v2451 = vld [vmem:[#allocation11 + $0xb0] sm:$0xf]
    %v2452 = vld [vmem:[#allocation11 + $0xb4] sm:$0xf]
    %v2453 = vld [vmem:[#allocation11 + $0xb8] sm:$0xf]
    %v2454 = vld [vmem:[#allocation11 + $0xbc] sm:$0xf]
    %2455 = vst [vmem:[#allocation2 + $0x8] sm:$0xff] %v2403
    %2456 = vst [vmem:[#allocation2 + $0x10] sm:$0xff] %v2404
    %2457 = vst [vmem:[#allocation2 + $0x28] sm:$0xff] %v2405
    %2458 = vst [vmem:[#allocation2 + $0x30] sm:$0xff] %v2406
    %v2459 = vld [vmem:[#allocation2] sm:$0xff]
    %v2460 = vld [vmem:[#allocation2 + $0x8] sm:$0xff]
    %v2461 = vld [vmem:[#allocation2 + $0x10] sm:$0xff]
    %v2462 = vld [vmem:[#allocation2 + $0x18] sm:$0xff]
    %v2463 = vld [vmem:[#allocation2 + $0x20] sm:$0xff]
    %v2464 = vld [vmem:[#allocation2 + $0x28] sm:$0xff]
    %v2465 = vld [vmem:[#allocation2 + $0x30] sm:$0xff]
    %v2466 = vld [vmem:[#allocation2 + $0x38] sm:$0xff]
    %v2473 = vrot.slane %v2459, 7
    %v2474 = vrot.slane %v2460, 7
    %v2475 = vsel %vm389, %v2473, %v2474
    %v2476 = vrot.slane %v2461, 7
    %v2477 = vsel %vm389, %v2474, %v2476
    %v2478 = vrot.slane %v2463, 7
    %v2479 = vrot.slane %v2464, 7
    %v2480 = vsel %vm389, %v2478, %v2479
    %v2481 = vrot.slane %v2465, 7
    %v2482 = vsel %vm389, %v2479, %v2481
    %v2489 = vrot.slane %v2460, 1
    %v2490 = vrot.slane %v2461, 1
    %v2491 = vsel %vm406, %v2489, %v2490
    %v2492 = vrot.slane %v2462, 1
    %v2493 = vsel %vm406, %v2490, %v2492
    %v2494 = vrot.slane %v2464, 1
    %v2495 = vrot.slane %v2465, 1
    %v2496 = vsel %vm406, %v2494, %v2495
    %v2497 = vrot.slane %v2466, 1
    %v2498 = vsel %vm406, %v2495, %v2497
    %v2503 = vpack.c.bf16 %v2477, %v2475
    %v2504 = vpack.c.bf16 %v2461, %v2460
    %v2505 = vpack.c.bf16 %v2493, %v2491
    %v2506 = vpack.c.bf16 %v2482, %v2480
    %v2507 = vpack.c.bf16 %v2465, %v2464
    %v2508 = vpack.c.bf16 %v2498, %v2496
    %v2557 = vunpack.c.l.b16 %v2407
    %v2558 = vunpack.c.l.b16 %v2408
    %v2559 = vunpack.c.l.b16 %v2409
    %v2560 = vunpack.c.l.b16 %v2410
    %v2561 = vunpack.c.l.b16 %v2411
    %v2562 = vunpack.c.l.b16 %v2412
    %v2563 = vunpack.c.l.b16 %v2413
    %v2564 = vunpack.c.l.b16 %v2414
    %v2565 = vunpack.c.l.b16 %v2415
    %v2566 = vunpack.c.l.b16 %v2416
    %v2567 = vunpack.c.l.b16 %v2417
    %v2568 = vunpack.c.l.b16 %v2418
    %v2569 = vunpack.c.l.b16 %v2419
    %v2570 = vunpack.c.l.b16 %v2420
    %v2571 = vunpack.c.l.b16 %v2421
    %v2572 = vunpack.c.l.b16 %v2422
    %v2573 = vunpack.c.l.b16 %v2423
    %v2574 = vunpack.c.l.b16 %v2424
    %v2575 = vunpack.c.l.b16 %v2425
    %v2576 = vunpack.c.l.b16 %v2426
    %v2577 = vunpack.c.l.b16 %v2427
    %v2578 = vunpack.c.l.b16 %v2428
    %v2579 = vunpack.c.l.b16 %v2429
    %v2580 = vunpack.c.l.b16 %v2430
    %v2581 = vunpack.c.l.b16 %v2431
    %v2582 = vunpack.c.l.b16 %v2432
    %v2583 = vunpack.c.l.b16 %v2433
    %v2584 = vunpack.c.l.b16 %v2434
    %v2585 = vunpack.c.l.b16 %v2435
    %v2586 = vunpack.c.l.b16 %v2436
    %v2587 = vunpack.c.l.b16 %v2437
    %v2588 = vunpack.c.l.b16 %v2438
    %v2589 = vunpack.c.l.b16 %v2439
    %v2590 = vunpack.c.l.b16 %v2440
    %v2591 = vunpack.c.l.b16 %v2441
    %v2592 = vunpack.c.l.b16 %v2442
    %v2593 = vunpack.c.l.b16 %v2443
    %v2594 = vunpack.c.l.b16 %v2444
    %v2595 = vunpack.c.l.b16 %v2445
    %v2596 = vunpack.c.l.b16 %v2446
    %v2597 = vunpack.c.l.b16 %v2447
    %v2598 = vunpack.c.l.b16 %v2448
    %v2599 = vunpack.c.l.b16 %v2449
    %v2600 = vunpack.c.l.b16 %v2450
    %v2601 = vunpack.c.l.b16 %v2451
    %v2602 = vunpack.c.l.b16 %v2452
    %v2603 = vunpack.c.l.b16 %v2453
    %v2604 = vunpack.c.l.b16 %v2454
    %v2605 = vpack.c.b16 %v2558, %v2557
    %v2606 = vpack.c.b16 %v2560, %v2559
    %v2607 = vpack.c.b16 %v2562, %v2561
    %v2608 = vpack.c.b16 %v2564, %v2563
    %v2609 = vpack.c.b16 %v2566, %v2565
    %v2610 = vpack.c.b16 %v2568, %v2567
    %v2611 = vpack.c.b16 %v2570, %v2569
    %v2612 = vpack.c.b16 %v2572, %v2571
    %v2613 = vpack.c.b16 %v2574, %v2573
    %v2614 = vpack.c.b16 %v2576, %v2575
    %v2615 = vpack.c.b16 %v2578, %v2577
    %v2616 = vpack.c.b16 %v2580, %v2579
    %v2617 = vpack.c.b16 %v2582, %v2581
    %v2618 = vpack.c.b16 %v2584, %v2583
    %v2619 = vpack.c.b16 %v2586, %v2585
    %v2620 = vpack.c.b16 %v2588, %v2587
    %v2621 = vpack.c.b16 %v2590, %v2589
    %v2622 = vpack.c.b16 %v2592, %v2591
    %v2623 = vpack.c.b16 %v2594, %v2593
    %v2624 = vpack.c.b16 %v2596, %v2595
    %v2625 = vpack.c.b16 %v2598, %v2597
    %v2626 = vpack.c.b16 %v2600, %v2599
    %v2627 = vpack.c.b16 %v2602, %v2601
    %v2628 = vpack.c.b16 %v2604, %v2603
    %2653 = vmatprep.subr.bf16.mxu0 0
    %2654 = vmatpush1.bf16.msra.mxu0 %v2605
    %2655 = vmatprep.subr.bf16.mxu0 0
    %2656 = vmatpush1.bf16.msra.mxu0 %v2606
    %2657 = vmatprep.subr.bf16.mxu0 0
    %2658 = vmatpush1.bf16.msra.mxu0 %v2607
    %2659 = vmatprep.subr.bf16.mxu0 0
    %2660 = vmatpush1.bf16.msra.mxu0 %v2608
    %2661 = vmatprep.subr.bf16.mxu0 0
    %2662 = vmatpush1.bf16.msra.mxu0 %v2609
    %2663 = vmatprep.subr.bf16.mxu0 0
    %2664 = vmatpush1.bf16.msra.mxu0 %v2610
    %2665 = vmatprep.subr.bf16.mxu0 0
    %2666 = vmatpush1.bf16.msra.mxu0 %v2611
    %2667 = vmatprep.subr.bf16.mxu0 0
    %2668 = vmatpush1.bf16.msra.mxu0 %v2612
    %2669 = vmatprep.subr.bf16.mxu0 0
    %2670 = vmatpush1.bf16.msra.mxu0 %v2613
    %2671 = vmatprep.subr.bf16.mxu0 0
    %2672 = vmatpush1.bf16.msra.mxu0 %v2614
    %2673 = vmatprep.subr.bf16.mxu0 0
    %2674 = vmatpush1.bf16.msra.mxu0 %v2615
    %2675 = vmatprep.subr.bf16.mxu0 0
    %2676 = vmatpush1.bf16.msra.mxu0 %v2616
    %2677 = vmatprep.subr.bf16.mxu0 0
    %2678 = vmatpush1.bf16.msra.mxu0 %v2617
    %2679 = vmatprep.subr.bf16.mxu0 0
    %2680 = vmatpush1.bf16.msra.mxu0 %v2618
    %2681 = vmatprep.subr.bf16.mxu0 0
    %2682 = vmatpush1.bf16.msra.mxu0 %v2619
    %2683 = vmatprep.subr.bf16.mxu0 0
    %2684 = vmatpush1.bf16.msra.mxu0 %v2620
    %2685 = vmatprep.mubr.bf16.mxu0 %v2504
    %2686 = vmatmul.mubr.bf16.gmra.mrb[0].mxu0 %v2503
    %v2687 = vpop.f32.mrb[0].mxu0
    %v2688 = vadd.f32 0.0, %v2687
    %v2689 = vpop.f32.mrb[0].mxu0
    %v2690 = vpop.f32.mrb[0].mxu0
    %v2691 = vadd.f32 0.0, %v2690
    %v2692 = vpop.f32.mrb[0].mxu0
    %2693 = vmatprep.mubr.bf16.mxu0 %v2507
    %2694 = vmatmul.mubr.bf16.gmra.mrb[0].mxu0 %v2506
    %v2695 = vpop.f32.mrb[0].mxu0
    %v2696 = vadd.f32 0.0, %v2695
    %v2697 = vpop.f32.mrb[0].mxu0
    %v2698 = vpop.f32.mrb[0].mxu0
    %v2699 = vadd.f32 0.0, %v2698
    %v2700 = vpop.f32.mrb[0].mxu0
    %2701 = vdwg.mxu0
    %2702 = vmatprep.subr.bf16.mxu0 0
    %2703 = vmatpush1.bf16.msra.mxu0 %v2621
    %2704 = vmatprep.subr.bf16.mxu0 0
    %2705 = vmatpush1.bf16.msra.mxu0 %v2622
    %2706 = vmatprep.subr.bf16.mxu0 0
    %2707 = vmatpush1.bf16.msra.mxu0 %v2623
    %2708 = vmatprep.subr.bf16.mxu0 0
    %2709 = vmatpush1.bf16.msra.mxu0 %v2624
    %2710 = vmatprep.subr.bf16.mxu0 0
    %2711 = vmatpush1.bf16.msra.mxu0 %v2625
    %2712 = vmatprep.subr.bf16.mxu0 0
    %2713 = vmatpush1.bf16.msra.mxu0 %v2626
    %2714 = vmatprep.subr.bf16.mxu0 0
    %2715 = vmatpush1.bf16.msra.mxu0 %v2627
    %2716 = vmatprep.subr.bf16.mxu0 0
    %2717 = vmatpush1.bf16.msra.mxu0 %v2628
    %2718 = vmatprep.subr.bf16.mxu0 0
    %2719 = vmatpush1.bf16.msra.mxu0 0
    %2720 = vmatprep.subr.bf16.mxu0 0
    %2721 = vmatpush1.bf16.msra.mxu0 0
    %2722 = vmatprep.subr.bf16.mxu0 0
    %2723 = vmatpush1.bf16.msra.mxu0 0
    %2724 = vmatprep.subr.bf16.mxu0 0
    %2725 = vmatpush1.bf16.msra.mxu0 0
    %2726 = vmatprep.subr.bf16.mxu0 0
    %2727 = vmatpush1.bf16.msra.mxu0 0
    %2728 = vmatprep.subr.bf16.mxu0 0
    %2729 = vmatpush1.bf16.msra.mxu0 0
    %2730 = vmatprep.subr.bf16.mxu0 0
    %2731 = vmatpush1.bf16.msra.mxu0 0
    %2732 = vmatprep.subr.bf16.mxu0 0
    %2733 = vmatpush1.bf16.msra.mxu0 0
    %2734 = vmatprep.mubr.bf16.mxu0 0
    %2735 = vmatmul.mubr.bf16.gmra.mrb[0].mxu0 %v2505
    %v2736 = vpop.f32.mrb[0].mxu0
    %v2737 = vadd.f32 %v2688, %v2736
    %v2738 = vpop.f32.mrb[0].mxu0
    %v2739 = vpop.f32.mrb[0].mxu0
    %v2740 = vadd.f32 %v2691, %v2739
    %v2741 = vpop.f32.mrb[0].mxu0
    %2742 = vmatprep.mubr.bf16.mxu0 0
    %2743 = vmatmul.mubr.bf16.gmra.mrb[0].mxu0 %v2508
    %v2744 = vpop.f32.mrb[0].mxu0
    %v2745 = vadd.f32 %v2696, %v2744
    %v2746 = vpop.f32.mrb[0].mxu0
    %v2747 = vpop.f32.mrb[0].mxu0
    %v2748 = vadd.f32 %v2699, %v2747
    %v2749 = vpop.f32.mrb[0].mxu0
    %2750 = vdwg.mxu0
    %v2751 = vld [vmem:[#allocation13] sm:$0x1]
    %v2753 = vlaneseq
    %v2754 = vshrl.u32 %v2753, 7
    %v2755 = vsub.s32 0, %v2754
    %v2756 = vrot.slane %v2751, %v2755
    %v2758 = vmul.f32 %v2737, %v2756
    %v2759 = vmul.f32 %v2740, %v2756
    %v2760 = vmul.f32 %v2745, %v2756
    %v2761 = vmul.f32 %v2748, %v2756
    %2762 = vst [vmem:[%s13] sm:$0xff] %v2758
    %2763 = vst [vmem:[%s13 + $0x8] sm:$0xff] %v2759
    %2764 = vst [vmem:[%s13 + $0x10] sm:$0xff] %v2760
    %2765 = vst [vmem:[%s13 + $0x18] sm:$0xff] %v2761
    // Predicated region
    $region82: #{dvae_decode.1} parent=1 // pred_check
      _
    $region83: #{dvae_decode.1} parent=1 // pred_check_branch
      %2767 = sbr.rel (0) target = $region85
    $region84: #{dvae_decode.1} parent=1 // pred_region
      _
    $region85: #{dvae_decode.1} parent=1 // pred_fallthru
      _
    // Predicated region
    $region86: #{dvae_decode.1} parent=1 // pred_check
      _
    $region87: #{dvae_decode.1} parent=1 // pred_check_branch
      %2769 = sbr.rel (0) target = $region89
    $region88: #{dvae_decode.1} parent=1 // pred_region
      _
    $region89: #{dvae_decode.1} parent=1 // pred_fallthru
      _
    %2770 = vsyncpa [#allocation4], 1
    %2771 = vsyncpa [#allocation6], 1
    %2772 = vsyncpa [#allocation9], 1
    %2773 = vsyncpa [#allocation12], 1

</llo_original>
